<compile_context>
chip_gen: v5e
topology: v5e:2x2
jax: 0.10.0
libtpu: 0.0.40
codegen_flags: <defaults>
</compile_context>

<pallas_src>
import math

import jax
import jax.numpy as jnp
from jax.experimental import pallas as pl
from jax.experimental.pallas import tpu as pltpu


_N_PER_BLOCK = 12  # packed weight arrays per transformer block


# ----------------------------------------------------------------------------
# Fused kernel: all transformer blocks, all batch rows of this chunk.
# ----------------------------------------------------------------------------
def _make_kernel(n_blocks, n_heads, attn_norm_flags, prenorm, compute_dtype):
    def kernel(*refs):
        x_ref, o_ref = refs[0], refs[-1]
        wrefs = refs[1:-1]

        xb = x_ref[...].astype(jnp.float32)            # (Nc, S, D)
        Nc, S, D = xb.shape
        NS = Nc * S
        dh = D // n_heads
        x2 = xb.reshape(NS, D)                         # flatten batch*seq rows

        def layer_norm(z, g, b):
            mu = jnp.mean(z, axis=-1, keepdims=True)
            var = jnp.mean((z - mu) ** 2, axis=-1, keepdims=True)
            return (z - mu) * jax.lax.rsqrt(var + 1e-5) * g + b

        def mm(a, w):                                  # MXU matmul, f32 accumulation
            return jnp.dot(a.astype(compute_dtype), w,
                           preferred_element_type=jnp.float32)

        for blk in range(n_blocks):                    # static loop over blocks
            (ag, ab, wqkv, bqkv, wo, bo, fg, fb, w1, b1, w2, b2) = [
                r[...] for r in wrefs[blk * _N_PER_BLOCK:(blk + 1) * _N_PER_BLOCK]]

            # ---------------- attention sub-block ----------------
            x_res = x2
            if prenorm and attn_norm_flags[blk]:
                x_res = layer_norm(x_res, ag, ab)

            # fused QKV projection; 1/sqrt(dh) is pre-folded into the Q columns
            qkv = mm(x_res, wqkv) + bqkv               # (NS, 3D)

            # head-major batched layout: (n_heads * Nc, S, dh)
            def heads(base, _qkv=qkv):
                return jnp.concatenate(
                    [_qkv[:, base + h * dh: base + (h + 1) * dh].reshape(Nc, S, dh)
                     for h in range(n_heads)], axis=0)
            qh, kh, vh = heads(0), heads(D), heads(2 * D)

            # single batched score/context einsum pair for ALL heads
            s = jnp.einsum('bqd,bkd->bqk',
                           qh.astype(compute_dtype), kh.astype(compute_dtype),
                           preferred_element_type=jnp.float32)
            m = jnp.max(s, axis=-1, keepdims=True)
            e = jnp.exp(s - m)
            p = e / jnp.sum(e, axis=-1, keepdims=True)          # exact softmax
            ctx = jnp.einsum('bqk,bkd->bqd',
                             p.astype(compute_dtype), vh.astype(compute_dtype),
                             preferred_element_type=jnp.float32)  # (H*Nc, S, dh)

            # re-assemble heads along lanes, one full-K output projection
            ctx = jnp.concatenate(
                [ctx[h * Nc:(h + 1) * Nc] for h in range(n_heads)], axis=-1)
            attn_out = mm(ctx.reshape(NS, D), wo) + bo

            x2 = x2 + attn_out                         # residual (dropout = id)
            if not prenorm:
                x2 = layer_norm(x2, ag, ab)

            # ---------------- FFN sub-block ----------------
            x_res = layer_norm(x2, fg, fb) if prenorm else x2
            hdn = jnp.maximum(mm(x_res, w1) + b1, 0.0)  # ReLU
            y = mm(hdn, w2) + b2
            x2 = x2 + y                                # residual (dropout = id)
            if not prenorm:
                x2 = layer_norm(x2, fg, fb)

        o_ref[...] = x2.reshape(Nc, S, D).astype(o_ref.dtype)

    return kernel


# ----------------------------------------------------------------------------
# Wrapper: weight packing + a single pallas_call for the whole forward.
# ----------------------------------------------------------------------------
def _pack_block_weights(p, n_heads, matmul_dtype):
    D = p["wq"].shape[0]
    dh = D // n_heads
    scale = 1.0 / math.sqrt(dh)
    # Fold the softmax scale into the Q projection (weights + bias).
    wqkv = jnp.concatenate([p["wq"] * scale, p["wk"], p["wv"]], axis=1)   # (D, 3D)
    bqkv = jnp.concatenate([p["bq"] * scale, p["bk"], p["bv"]]).reshape(1, 3 * D)
    md = matmul_dtype
    return [
        p["attn_ln_g"].reshape(1, D), p["attn_ln_b"].reshape(1, D),
        wqkv.astype(md), bqkv,
        p["wo"].astype(md), p["bo"].reshape(1, D),
        p["ffn_ln_g"].reshape(1, D), p["ffn_ln_b"].reshape(1, D),
        p["w1"].astype(md), p["b1"].reshape(1, -1),
        p["w2"].astype(md), p["b2"].reshape(1, D),
    ]


def ft_transformer_forward(x, block_params_list, *, n_heads,
                           prenormalization=True, first_prenormalization=False,
                           num_batch_chunks=1, matmul_dtype=jnp.float32,
                           single_buffer_weights=True, vmem_limit_mb=32):
    """Equivalent to FT_Transformer.forward(x) with x_context=None.

    num_batch_chunks=1 -> single grid step (fine on v5e/v6e, 1 TensorCore).
    num_batch_chunks>=2 -> leading "parallel" batch axis (use on v7x / to
    pipeline HBM traffic at realistic batch sizes).
    matmul_dtype=bfloat16 -> bf16 MXU operands, f32 accumulation (v6e/v7x).
    """
    N, S, D = x.shape
    n_blocks = len(block_params_list)
    assert D % n_heads == 0
    attn_norm_flags = [bool(i) or (not prenormalization) or first_prenormalization
                       for i in range(n_blocks)]

    weights = []
    for p in block_params_list:
        weights += _pack_block_weights(p, n_heads, matmul_dtype)

    kernel = _make_kernel(n_blocks, n_heads, attn_norm_flags, prenormalization,
                          matmul_dtype)

    G = num_batch_chunks
    assert N % G == 0, "batch must divide evenly into chunks"
    Nc = N // G

    def const_spec(w):
        # Weights are grid-invariant: a single VMEM buffer is enough.
        if single_buffer_weights:
            return pl.BlockSpec(w.shape, lambda g: (0, 0),
                                pipeline_mode=pl.Buffered(1))
        return pl.BlockSpec(w.shape, lambda g: (0, 0))

    in_specs = [pl.BlockSpec((Nc, S, D), lambda g: (g, 0, 0))]
    in_specs += [const_spec(w) for w in weights]
    out_specs = pl.BlockSpec((Nc, S, D), lambda g: (g, 0, 0))

    return pl.pallas_call(
        kernel,
        out_shape=jax.ShapeDtypeStruct((N, S, D), x.dtype),
        grid=(G,),
        in_specs=in_specs,
        out_specs=out_specs,
        compiler_params=pltpu.CompilerParams(
            dimension_semantics=("parallel",),
            vmem_limit_bytes=vmem_limit_mb << 20),
    )(x, *weights)
    # TODO(synk): cross-attention / bidirectional blocks (n_cross_blocks>0) are
    # not instantiated in this configuration; only the self-attention path is
    # kernelized.


# ----------------------------------------------------------------------------
# Deterministic parameter init (torch.nn.Linear-style uniform init).
# ----------------------------------------------------------------------------
def _init_linear(key, fan_in, fan_out):
    k_w, k_b = jax.random.split(key)
    bound = 1.0 / math.sqrt(fan_in)
    w = jax.random.uniform(k_w, (fan_in, fan_out), jnp.float32, -bound, bound)
    b = jax.random.uniform(k_b, (fan_out,), jnp.float32, -bound, bound)
    return w, b


def init_block_params(key, d_token, ffn_d_hidden):
    keys = jax.random.split(key, 6)
    wq, bq = _init_linear(keys[0], d_token, d_token)
    wk, bk = _init_linear(keys[1], d_token, d_token)
    wv, bv = _init_linear(keys[2], d_token, d_token)
    wo, bo = _init_linear(keys[3], d_token, d_token)
    w1, b1 = _init_linear(keys[4], d_token, ffn_d_hidden)
    w2, b2 = _init_linear(keys[5], ffn_d_hidden, d_token)
    return dict(
        attn_ln_g=jnp.ones((d_token,), jnp.float32),
        attn_ln_b=jnp.zeros((d_token,), jnp.float32),
        wq=wq, bq=bq, wk=wk, bk=bk, wv=wv, bv=bv, wo=wo, bo=bo,
        ffn_ln_g=jnp.ones((d_token,), jnp.float32),
        ffn_ln_b=jnp.zeros((d_token,), jnp.float32),
        w1=w1, b1=b1, w2=w2, b2=b2,
    )


# ----------------------------------------------------------------------------
# Pure-JAX reference (mirrors the PyTorch forward) for a correctness check.
# ----------------------------------------------------------------------------
def _ref_layer_norm(x, g, b, eps=1e-5):
    mu = jnp.mean(x, axis=-1, keepdims=True)
    var = jnp.mean((x - mu) ** 2, axis=-1, keepdims=True)
    return (x - mu) / jnp.sqrt(var + eps) * g + b


def _ref_block(x, p, n_heads, has_attn_norm, prenorm):
    N, S, D = x.shape
    dh = D // n_heads

    x_res = _ref_layer_norm(x, p["attn_ln_g"], p["attn_ln_b"]) if (prenorm and has_attn_norm) else x
    q = x_res @ p["wq"] + p["bq"]
    k = x_res @ p["wk"] + p["bk"]
    v = x_res @ p["wv"] + p["bv"]
    qh = q.reshape(N, S, n_heads, dh)
    kh = k.reshape(N, S, n_heads, dh)
    vh = v.reshape(N, S, n_heads, dh)
    scores = jnp.einsum("nqhd,nkhd->nhqk", qh, kh) / math.sqrt(dh)
    attn = jax.nn.softmax(scores, axis=-1)
    out = jnp.einsum("nhqk,nkhd->nqhd", attn, vh).reshape(N, S, D)
    out = out @ p["wo"] + p["bo"]
    x = x + out
    if not prenorm:
        x = _ref_layer_norm(x, p["attn_ln_g"], p["attn_ln_b"])

    x_res = _ref_layer_norm(x, p["ffn_ln_g"], p["ffn_ln_b"]) if prenorm else x
    h = jnp.maximum(x_res @ p["w1"] + p["b1"], 0.0)
    y = h @ p["w2"] + p["b2"]
    x = x + y
    if not prenorm:
        x = _ref_layer_norm(x, p["ffn_ln_g"], p["ffn_ln_b"])
    return x


def _ref_forward(x, blocks, n_heads, prenorm=True, first_prenorm=False):
    for i, p in enumerate(blocks):
        has_attn_norm = bool(i) or (not prenorm) or first_prenorm
        x = _ref_block(x, p, n_heads, has_attn_norm, prenorm)
    return x


# ----------------------------------------------------------------------------
if __name__ == "__main__":
    # Module hyper-parameters (small, consistent with the FT_Transformer API).
    d_token = 32
    n_self_blocks = 2
    attention_n_heads = 4
    ffn_d_hidden = 64
    prenormalization = True
    first_prenormalization = False

    # Input: (N, S, E)
    N, S = 2, 8
    key = jax.random.PRNGKey(0)
    k_x, *k_blocks = jax.random.split(key, 1 + n_self_blocks)
    x = jax.random.normal(k_x, (N, S, d_token), dtype=jnp.float32)

    block_params = [init_block_params(k_blocks[i], d_token, ffn_d_hidden)
                    for i in range(n_self_blocks)]

    # v7x has 2 TensorCores -> shard the batch across them; 1 chunk elsewhere.
    try:
        _kind = jax.devices()[0].device_kind.lower()
    except Exception:
        _kind = ""
    G = 2 if (N % 2 == 0 and any(t in _kind for t in ("v7", "7x"))) else 1

    def call(matmul_dtype):
        kw = dict(n_heads=attention_n_heads,
                  prenormalization=prenormalization,
                  first_prenormalization=first_prenormalization,
                  num_batch_chunks=G, matmul_dtype=matmul_dtype)
        try:
            return jax.block_until_ready(
                ft_transformer_forward(x, block_params,
                                       single_buffer_weights=True, **kw))
        except Exception:
            # pl.Buffered(1) not supported on this JAX/libtpu -> fall back to
            # default double-buffered weight specs.
            return jax.block_until_ready(
                ft_transformer_forward(x, block_params,
                                       single_buffer_weights=False, **kw))

    # f32 MXU path (default).
    out = call(jnp.float32)

    # High-precision reference (so matmul-precision flavor differences between
    # XLA's default dot and the in-kernel MXU path don't pollute the check).
    with jax.default_matmul_precision("float32"):
        ref = jax.block_until_ready(
            _ref_forward(x, block_params, attention_n_heads,
                         prenorm=prenormalization,
                         first_prenorm=first_prenormalization))

    assert out.shape == (N, S, d_token)
    assert jnp.allclose(out, ref, atol=2e-3, rtol=2e-3), \
        "f32 Pallas output mismatch vs reference"

    # bf16 MXU-operand path (recommended on v6e/v7x); looser tolerance covers
    # bf16 rounding of matmul operands (accumulation stays f32).
    out_bf16 = call(jnp.bfloat16)
    assert jnp.allclose(out_bf16, ref, atol=7e-2, rtol=7e-2), \
        "bf16 Pallas output mismatch vs reference"

    print("KERNEL_OK")
</pallas_src>

<mosaic_0001>
module attributes {stable_mosaic.version = 11 : i64} {
  func.func @kernel(%arg0: i32, %arg1: memref<2x8x32xf32, #tpu.memory_space<vmem>>, %arg2: memref<1x32xf32, #tpu.memory_space<vmem>>, %arg3: memref<1x32xf32, #tpu.memory_space<vmem>>, %arg4: memref<32x96xf32, #tpu.memory_space<vmem>>, %arg5: memref<1x96xf32, #tpu.memory_space<vmem>>, %arg6: memref<32x32xf32, #tpu.memory_space<vmem>>, %arg7: memref<1x32xf32, #tpu.memory_space<vmem>>, %arg8: memref<1x32xf32, #tpu.memory_space<vmem>>, %arg9: memref<1x32xf32, #tpu.memory_space<vmem>>, %arg10: memref<32x64xf32, #tpu.memory_space<vmem>>, %arg11: memref<1x64xf32, #tpu.memory_space<vmem>>, %arg12: memref<64x32xf32, #tpu.memory_space<vmem>>, %arg13: memref<1x32xf32, #tpu.memory_space<vmem>>, %arg14: memref<1x32xf32, #tpu.memory_space<vmem>>, %arg15: memref<1x32xf32, #tpu.memory_space<vmem>>, %arg16: memref<32x96xf32, #tpu.memory_space<vmem>>, %arg17: memref<1x96xf32, #tpu.memory_space<vmem>>, %arg18: memref<32x32xf32, #tpu.memory_space<vmem>>, %arg19: memref<1x32xf32, #tpu.memory_space<vmem>>, %arg20: memref<1x32xf32, #tpu.memory_space<vmem>>, %arg21: memref<1x32xf32, #tpu.memory_space<vmem>>, %arg22: memref<32x64xf32, #tpu.memory_space<vmem>>, %arg23: memref<1x64xf32, #tpu.memory_space<vmem>>, %arg24: memref<64x32xf32, #tpu.memory_space<vmem>>, %arg25: memref<1x32xf32, #tpu.memory_space<vmem>>, %arg26: memref<2x8x32xf32, #tpu.memory_space<vmem>>) attributes {dimension_semantics = [#tpu.dimension_semantics<parallel>], iteration_bounds = array<i64: 1>, scalar_prefetch = 0 : i64, scratch_operands = 0 : i64, tpu.core_type = #tpu.core_type<tc>, window_params = [{transform_indices = @transform_0, window_bounds = array<i64: 2, 8, 32>}, {pipeline_mode = #tpu.pipeline_mode<synchronous>, transform_indices = @transform_1, window_bounds = array<i64: 1, 32>}, {pipeline_mode = #tpu.pipeline_mode<synchronous>, transform_indices = @transform_2, window_bounds = array<i64: 1, 32>}, {pipeline_mode = #tpu.pipeline_mode<synchronous>, transform_indices = @transform_3, window_bounds = array<i64: 32, 96>}, {pipeline_mode = #tpu.pipeline_mode<synchronous>, transform_indices = @transform_4, window_bounds = array<i64: 1, 96>}, {pipeline_mode = #tpu.pipeline_mode<synchronous>, transform_indices = @transform_5, window_bounds = array<i64: 32, 32>}, {pipeline_mode = #tpu.pipeline_mode<synchronous>, transform_indices = @transform_6, window_bounds = array<i64: 1, 32>}, {pipeline_mode = #tpu.pipeline_mode<synchronous>, transform_indices = @transform_7, window_bounds = array<i64: 1, 32>}, {pipeline_mode = #tpu.pipeline_mode<synchronous>, transform_indices = @transform_8, window_bounds = array<i64: 1, 32>}, {pipeline_mode = #tpu.pipeline_mode<synchronous>, transform_indices = @transform_9, window_bounds = array<i64: 32, 64>}, {pipeline_mode = #tpu.pipeline_mode<synchronous>, transform_indices = @transform_10, window_bounds = array<i64: 1, 64>}, {pipeline_mode = #tpu.pipeline_mode<synchronous>, transform_indices = @transform_11, window_bounds = array<i64: 64, 32>}, {pipeline_mode = #tpu.pipeline_mode<synchronous>, transform_indices = @transform_12, window_bounds = array<i64: 1, 32>}, {pipeline_mode = #tpu.pipeline_mode<synchronous>, transform_indices = @transform_13, window_bounds = array<i64: 1, 32>}, {pipeline_mode = #tpu.pipeline_mode<synchronous>, transform_indices = @transform_14, window_bounds = array<i64: 1, 32>}, {pipeline_mode = #tpu.pipeline_mode<synchronous>, transform_indices = @transform_15, window_bounds = array<i64: 32, 96>}, {pipeline_mode = #tpu.pipeline_mode<synchronous>, transform_indices = @transform_16, window_bounds = array<i64: 1, 96>}, {pipeline_mode = #tpu.pipeline_mode<synchronous>, transform_indices = @transform_17, window_bounds = array<i64: 32, 32>}, {pipeline_mode = #tpu.pipeline_mode<synchronous>, transform_indices = @transform_18, window_bounds = array<i64: 1, 32>}, {pipeline_mode = #tpu.pipeline_mode<synchronous>, transform_indices = @transform_19, window_bounds = array<i64: 1, 32>}, {pipeline_mode = #tpu.pipeline_mode<synchronous>, transform_indices = @transform_20, window_bounds = array<i64: 1, 32>}, {pipeline_mode = #tpu.pipeline_mode<synchronous>, transform_indices = @transform_21, window_bounds = array<i64: 32, 64>}, {pipeline_mode = #tpu.pipeline_mode<synchronous>, transform_indices = @transform_22, window_bounds = array<i64: 1, 64>}, {pipeline_mode = #tpu.pipeline_mode<synchronous>, transform_indices = @transform_23, window_bounds = array<i64: 64, 32>}, {pipeline_mode = #tpu.pipeline_mode<synchronous>, transform_indices = @transform_24, window_bounds = array<i64: 1, 32>}, {transform_indices = @transform_25, window_bounds = array<i64: 2, 8, 32>}]} {
    %c0 = arith.constant 0 : index
    %c0_0 = arith.constant 0 : index
    %c0_1 = arith.constant 0 : index
    %0 = vector.load %arg1[%c0, %c0_0, %c0_1] : memref<2x8x32xf32, #tpu.memory_space<vmem>>, vector<2x8x32xf32>
    %1 = vector.shape_cast %0 : vector<2x8x32xf32> to vector<16x32xf32>
    %c0_2 = arith.constant 0 : index
    %c0_3 = arith.constant 0 : index
    %2 = vector.load %arg4[%c0_2, %c0_3] : memref<32x96xf32, #tpu.memory_space<vmem>>, vector<32x96xf32>
    %c0_4 = arith.constant 0 : index
    %c0_5 = arith.constant 0 : index
    %3 = vector.load %arg5[%c0_4, %c0_5] : memref<1x96xf32, #tpu.memory_space<vmem>>, vector<1x96xf32>
    %c0_6 = arith.constant 0 : index
    %c0_7 = arith.constant 0 : index
    %4 = vector.load %arg6[%c0_6, %c0_7] : memref<32x32xf32, #tpu.memory_space<vmem>>, vector<32x32xf32>
    %c0_8 = arith.constant 0 : index
    %c0_9 = arith.constant 0 : index
    %5 = vector.load %arg7[%c0_8, %c0_9] : memref<1x32xf32, #tpu.memory_space<vmem>>, vector<1x32xf32>
    %c0_10 = arith.constant 0 : index
    %c0_11 = arith.constant 0 : index
    %6 = vector.load %arg8[%c0_10, %c0_11] : memref<1x32xf32, #tpu.memory_space<vmem>>, vector<1x32xf32>
    %c0_12 = arith.constant 0 : index
    %c0_13 = arith.constant 0 : index
    %7 = vector.load %arg9[%c0_12, %c0_13] : memref<1x32xf32, #tpu.memory_space<vmem>>, vector<1x32xf32>
    %c0_14 = arith.constant 0 : index
    %c0_15 = arith.constant 0 : index
    %8 = vector.load %arg10[%c0_14, %c0_15] : memref<32x64xf32, #tpu.memory_space<vmem>>, vector<32x64xf32>
    %c0_16 = arith.constant 0 : index
    %c0_17 = arith.constant 0 : index
    %9 = vector.load %arg11[%c0_16, %c0_17] : memref<1x64xf32, #tpu.memory_space<vmem>>, vector<1x64xf32>
    %c0_18 = arith.constant 0 : index
    %c0_19 = arith.constant 0 : index
    %10 = vector.load %arg12[%c0_18, %c0_19] : memref<64x32xf32, #tpu.memory_space<vmem>>, vector<64x32xf32>
    %c0_20 = arith.constant 0 : index
    %c0_21 = arith.constant 0 : index
    %11 = vector.load %arg13[%c0_20, %c0_21] : memref<1x32xf32, #tpu.memory_space<vmem>>, vector<1x32xf32>
    %cst = arith.constant dense<0.000000e+00> : vector<16x96xf32>
    %12 = tpu.matmul %1, %2, %cst {dimension_numbers = #tpu.dot_dimension_numbers<[1], [0], [0], [1], [0, 0, 1, 1], [], []>} : vector<16x32xf32>, vector<32x96xf32>, vector<16x96xf32> -> vector<16x96xf32>
    %13 = vector.broadcast %3 : vector<1x96xf32> to vector<16x96xf32>
    %14 = arith.addf %12, %13 : vector<16x96xf32>
    %15 = vector.extract_strided_slice %14 {offsets = [0, 0], sizes = [16, 8], strides = [1, 1]} : vector<16x96xf32> to vector<16x8xf32>
    %16 = vector.shape_cast %15 : vector<16x8xf32> to vector<2x8x8xf32>
    %17 = vector.extract_strided_slice %14 {offsets = [0, 8], sizes = [16, 8], strides = [1, 1]} : vector<16x96xf32> to vector<16x8xf32>
    %18 = vector.shape_cast %17 : vector<16x8xf32> to vector<2x8x8xf32>
    %19 = vector.extract_strided_slice %14 {offsets = [0, 16], sizes = [16, 8], strides = [1, 1]} : vector<16x96xf32> to vector<16x8xf32>
    %20 = vector.shape_cast %19 : vector<16x8xf32> to vector<2x8x8xf32>
    %21 = vector.extract_strided_slice %14 {offsets = [0, 24], sizes = [16, 8], strides = [1, 1]} : vector<16x96xf32> to vector<16x8xf32>
    %22 = vector.shape_cast %21 : vector<16x8xf32> to vector<2x8x8xf32>
    %23 = tpu.concatenate %16, %18, %20, %22 in 0 : vector<2x8x8xf32>, vector<2x8x8xf32>, vector<2x8x8xf32>, vector<2x8x8xf32> -> vector<8x8x8xf32>
    %24 = vector.extract_strided_slice %14 {offsets = [0, 32], sizes = [16, 8], strides = [1, 1]} : vector<16x96xf32> to vector<16x8xf32>
    %25 = vector.shape_cast %24 : vector<16x8xf32> to vector<2x8x8xf32>
    %26 = vector.extract_strided_slice %14 {offsets = [0, 40], sizes = [16, 8], strides = [1, 1]} : vector<16x96xf32> to vector<16x8xf32>
    %27 = vector.shape_cast %26 : vector<16x8xf32> to vector<2x8x8xf32>
    %28 = vector.extract_strided_slice %14 {offsets = [0, 48], sizes = [16, 8], strides = [1, 1]} : vector<16x96xf32> to vector<16x8xf32>
    %29 = vector.shape_cast %28 : vector<16x8xf32> to vector<2x8x8xf32>
    %30 = vector.extract_strided_slice %14 {offsets = [0, 56], sizes = [16, 8], strides = [1, 1]} : vector<16x96xf32> to vector<16x8xf32>
    %31 = vector.shape_cast %30 : vector<16x8xf32> to vector<2x8x8xf32>
    %32 = tpu.concatenate %25, %27, %29, %31 in 0 : vector<2x8x8xf32>, vector<2x8x8xf32>, vector<2x8x8xf32>, vector<2x8x8xf32> -> vector<8x8x8xf32>
    %33 = vector.extract_strided_slice %14 {offsets = [0, 64], sizes = [16, 8], strides = [1, 1]} : vector<16x96xf32> to vector<16x8xf32>
    %34 = vector.shape_cast %33 : vector<16x8xf32> to vector<2x8x8xf32>
    %35 = vector.extract_strided_slice %14 {offsets = [0, 72], sizes = [16, 8], strides = [1, 1]} : vector<16x96xf32> to vector<16x8xf32>
    %36 = vector.shape_cast %35 : vector<16x8xf32> to vector<2x8x8xf32>
    %37 = vector.extract_strided_slice %14 {offsets = [0, 80], sizes = [16, 8], strides = [1, 1]} : vector<16x96xf32> to vector<16x8xf32>
    %38 = vector.shape_cast %37 : vector<16x8xf32> to vector<2x8x8xf32>
    %39 = vector.extract_strided_slice %14 {offsets = [0, 88], sizes = [16, 8], strides = [1, 1]} : vector<16x96xf32> to vector<16x8xf32>
    %40 = vector.shape_cast %39 : vector<16x8xf32> to vector<2x8x8xf32>
    %41 = tpu.concatenate %34, %36, %38, %40 in 0 : vector<2x8x8xf32>, vector<2x8x8xf32>, vector<2x8x8xf32>, vector<2x8x8xf32> -> vector<8x8x8xf32>
    "tpu.trace_start"() <{level = 10 : i32, message = "bqd,bkd->bqk"}> : () -> ()
    %cst_22 = arith.constant dense<0.000000e+00> : vector<8x8x8xf32>
    %42 = tpu.matmul %23, %32, %cst_22 {dimension_numbers = #tpu.dot_dimension_numbers<[2], [2], [1], [1], [0, 0, 0, 1, 1, 1], [0], [0]>} : vector<8x8x8xf32>, vector<8x8x8xf32>, vector<8x8x8xf32> -> vector<8x8x8xf32>
    "tpu.trace_stop"() : () -> ()
    %cst_23 = arith.constant dense<0xFF800000> : vector<8x8xf32>
    %43 = vector.multi_reduction <maximumf>, %42, %cst_23 [2] : vector<8x8x8xf32> to vector<8x8xf32>
    %44 = vector.shape_cast %43 : vector<8x8xf32> to vector<8x8x1xf32>
    %45 = vector.broadcast %44 : vector<8x8x1xf32> to vector<8x8x8xf32>
    %46 = arith.subf %42, %45 : vector<8x8x8xf32>
    %47 = math.exp %46 : vector<8x8x8xf32>
    %cst_24 = arith.constant dense<0.000000e+00> : vector<8x8xf32>
    %48 = vector.multi_reduction <add>, %47, %cst_24 [2] : vector<8x8x8xf32> to vector<8x8xf32>
    %49 = vector.shape_cast %48 : vector<8x8xf32> to vector<8x8x1xf32>
    %50 = vector.broadcast %49 : vector<8x8x1xf32> to vector<8x8x8xf32>
    %51 = arith.divf %47, %50 : vector<8x8x8xf32>
    "tpu.trace_start"() <{level = 10 : i32, message = "bqk,bkd->bqd"}> : () -> ()
    %cst_25 = arith.constant dense<0.000000e+00> : vector<8x8x8xf32>
    %52 = tpu.matmul %51, %41, %cst_25 {dimension_numbers = #tpu.dot_dimension_numbers<[2], [1], [1], [2], [0, 0, 0, 1, 1, 2], [0], [0]>} : vector<8x8x8xf32>, vector<8x8x8xf32>, vector<8x8x8xf32> -> vector<8x8x8xf32>
    "tpu.trace_stop"() : () -> ()
    %53 = vector.extract_strided_slice %52 {offsets = [0, 0, 0], sizes = [2, 8, 8], strides = [1, 1, 1]} : vector<8x8x8xf32> to vector<2x8x8xf32>
    %54 = vector.extract_strided_slice %52 {offsets = [2, 0, 0], sizes = [2, 8, 8], strides = [1, 1, 1]} : vector<8x8x8xf32> to vector<2x8x8xf32>
    %55 = vector.extract_strided_slice %52 {offsets = [4, 0, 0], sizes = [2, 8, 8], strides = [1, 1, 1]} : vector<8x8x8xf32> to vector<2x8x8xf32>
    %56 = vector.extract_strided_slice %52 {offsets = [6, 0, 0], sizes = [2, 8, 8], strides = [1, 1, 1]} : vector<8x8x8xf32> to vector<2x8x8xf32>
    %57 = tpu.concatenate %53, %54, %55, %56 in 2 : vector<2x8x8xf32>, vector<2x8x8xf32>, vector<2x8x8xf32>, vector<2x8x8xf32> -> vector<2x8x32xf32>
    %58 = vector.shape_cast %57 : vector<2x8x32xf32> to vector<16x32xf32>
    %cst_26 = arith.constant dense<0.000000e+00> : vector<16x32xf32>
    %59 = tpu.matmul %58, %4, %cst_26 {dimension_numbers = #tpu.dot_dimension_numbers<[1], [0], [0], [1], [0, 0, 1, 1], [], []>} : vector<16x32xf32>, vector<32x32xf32>, vector<16x32xf32> -> vector<16x32xf32>
    %60 = vector.broadcast %5 : vector<1x32xf32> to vector<16x32xf32>
    %61 = arith.addf %59, %60 : vector<16x32xf32>
    %62 = arith.addf %1, %61 : vector<16x32xf32>
    %cst_27 = arith.constant dense<0.000000e+00> : vector<16xf32>
    %63 = vector.multi_reduction <add>, %62, %cst_27 [1] : vector<16x32xf32> to vector<16xf32>
    %64 = vector.shape_cast %63 : vector<16xf32> to vector<16x1xf32>
    %cst_28 = arith.constant 3.200000e+01 : f32
    %65 = vector.broadcast %cst_28 : f32 to vector<16x1xf32>
    %66 = arith.divf %64, %65 : vector<16x1xf32>
    %67 = vector.broadcast %66 : vector<16x1xf32> to vector<16x32xf32>
    %68 = arith.subf %62, %67 : vector<16x32xf32>
    %69 = arith.mulf %68, %68 : vector<16x32xf32>
    %cst_29 = arith.constant dense<0.000000e+00> : vector<16xf32>
    %70 = vector.multi_reduction <add>, %69, %cst_29 [1] : vector<16x32xf32> to vector<16xf32>
    %71 = vector.shape_cast %70 : vector<16xf32> to vector<16x1xf32>
    %cst_30 = arith.constant 3.200000e+01 : f32
    %72 = vector.broadcast %cst_30 : f32 to vector<16x1xf32>
    %73 = arith.divf %71, %72 : vector<16x1xf32>
    %74 = vector.broadcast %66 : vector<16x1xf32> to vector<16x32xf32>
    %75 = arith.subf %62, %74 : vector<16x32xf32>
    %cst_31 = arith.constant 9.99999974E-6 : f32
    %76 = vector.broadcast %cst_31 : f32 to vector<16x1xf32>
    %77 = arith.addf %73, %76 : vector<16x1xf32>
    %78 = math.rsqrt %77 : vector<16x1xf32>
    %79 = vector.broadcast %78 : vector<16x1xf32> to vector<16x32xf32>
    %80 = arith.mulf %75, %79 : vector<16x32xf32>
    %81 = vector.broadcast %6 : vector<1x32xf32> to vector<16x32xf32>
    %82 = arith.mulf %80, %81 : vector<16x32xf32>
    %83 = vector.broadcast %7 : vector<1x32xf32> to vector<16x32xf32>
    %84 = arith.addf %82, %83 : vector<16x32xf32>
    %cst_32 = arith.constant dense<0.000000e+00> : vector<16x64xf32>
    %85 = tpu.matmul %84, %8, %cst_32 {dimension_numbers = #tpu.dot_dimension_numbers<[1], [0], [0], [1], [0, 0, 1, 1], [], []>} : vector<16x32xf32>, vector<32x64xf32>, vector<16x64xf32> -> vector<16x64xf32>
    %86 = vector.broadcast %9 : vector<1x64xf32> to vector<16x64xf32>
    %87 = arith.addf %85, %86 : vector<16x64xf32>
    %cst_33 = arith.constant 0.000000e+00 : f32
    %88 = vector.broadcast %cst_33 : f32 to vector<16x64xf32>
    %89 = arith.maximumf %87, %88 : vector<16x64xf32>
    %cst_34 = arith.constant dense<0.000000e+00> : vector<16x32xf32>
    %90 = tpu.matmul %89, %10, %cst_34 {dimension_numbers = #tpu.dot_dimension_numbers<[1], [0], [0], [1], [0, 0, 1, 1], [], []>} : vector<16x64xf32>, vector<64x32xf32>, vector<16x32xf32> -> vector<16x32xf32>
    %91 = vector.broadcast %11 : vector<1x32xf32> to vector<16x32xf32>
    %92 = arith.addf %90, %91 : vector<16x32xf32>
    %93 = arith.addf %62, %92 : vector<16x32xf32>
    %c0_35 = arith.constant 0 : index
    %c0_36 = arith.constant 0 : index
    %94 = vector.load %arg14[%c0_35, %c0_36] : memref<1x32xf32, #tpu.memory_space<vmem>>, vector<1x32xf32>
    %c0_37 = arith.constant 0 : index
    %c0_38 = arith.constant 0 : index
    %95 = vector.load %arg15[%c0_37, %c0_38] : memref<1x32xf32, #tpu.memory_space<vmem>>, vector<1x32xf32>
    %c0_39 = arith.constant 0 : index
    %c0_40 = arith.constant 0 : index
    %96 = vector.load %arg16[%c0_39, %c0_40] : memref<32x96xf32, #tpu.memory_space<vmem>>, vector<32x96xf32>
    %c0_41 = arith.constant 0 : index
    %c0_42 = arith.constant 0 : index
    %97 = vector.load %arg17[%c0_41, %c0_42] : memref<1x96xf32, #tpu.memory_space<vmem>>, vector<1x96xf32>
    %c0_43 = arith.constant 0 : index
    %c0_44 = arith.constant 0 : index
    %98 = vector.load %arg18[%c0_43, %c0_44] : memref<32x32xf32, #tpu.memory_space<vmem>>, vector<32x32xf32>
    %c0_45 = arith.constant 0 : index
    %c0_46 = arith.constant 0 : index
    %99 = vector.load %arg19[%c0_45, %c0_46] : memref<1x32xf32, #tpu.memory_space<vmem>>, vector<1x32xf32>
    %c0_47 = arith.constant 0 : index
    %c0_48 = arith.constant 0 : index
    %100 = vector.load %arg20[%c0_47, %c0_48] : memref<1x32xf32, #tpu.memory_space<vmem>>, vector<1x32xf32>
    %c0_49 = arith.constant 0 : index
    %c0_50 = arith.constant 0 : index
    %101 = vector.load %arg21[%c0_49, %c0_50] : memref<1x32xf32, #tpu.memory_space<vmem>>, vector<1x32xf32>
    %c0_51 = arith.constant 0 : index
    %c0_52 = arith.constant 0 : index
    %102 = vector.load %arg22[%c0_51, %c0_52] : memref<32x64xf32, #tpu.memory_space<vmem>>, vector<32x64xf32>
    %c0_53 = arith.constant 0 : index
    %c0_54 = arith.constant 0 : index
    %103 = vector.load %arg23[%c0_53, %c0_54] : memref<1x64xf32, #tpu.memory_space<vmem>>, vector<1x64xf32>
    %c0_55 = arith.constant 0 : index
    %c0_56 = arith.constant 0 : index
    %104 = vector.load %arg24[%c0_55, %c0_56] : memref<64x32xf32, #tpu.memory_space<vmem>>, vector<64x32xf32>
    %c0_57 = arith.constant 0 : index
    %c0_58 = arith.constant 0 : index
    %105 = vector.load %arg25[%c0_57, %c0_58] : memref<1x32xf32, #tpu.memory_space<vmem>>, vector<1x32xf32>
    %cst_59 = arith.constant dense<0.000000e+00> : vector<16xf32>
    %106 = vector.multi_reduction <add>, %93, %cst_59 [1] : vector<16x32xf32> to vector<16xf32>
    %107 = vector.shape_cast %106 : vector<16xf32> to vector<16x1xf32>
    %cst_60 = arith.constant 3.200000e+01 : f32
    %108 = vector.broadcast %cst_60 : f32 to vector<16x1xf32>
    %109 = arith.divf %107, %108 : vector<16x1xf32>
    %110 = vector.broadcast %109 : vector<16x1xf32> to vector<16x32xf32>
    %111 = arith.subf %93, %110 : vector<16x32xf32>
    %112 = arith.mulf %111, %111 : vector<16x32xf32>
    %cst_61 = arith.constant dense<0.000000e+00> : vector<16xf32>
    %113 = vector.multi_reduction <add>, %112, %cst_61 [1] : vector<16x32xf32> to vector<16xf32>
    %114 = vector.shape_cast %113 : vector<16xf32> to vector<16x1xf32>
    %cst_62 = arith.constant 3.200000e+01 : f32
    %115 = vector.broadcast %cst_62 : f32 to vector<16x1xf32>
    %116 = arith.divf %114, %115 : vector<16x1xf32>
    %117 = vector.broadcast %109 : vector<16x1xf32> to vector<16x32xf32>
    %118 = arith.subf %93, %117 : vector<16x32xf32>
    %cst_63 = arith.constant 9.99999974E-6 : f32
    %119 = vector.broadcast %cst_63 : f32 to vector<16x1xf32>
    %120 = arith.addf %116, %119 : vector<16x1xf32>
    %121 = math.rsqrt %120 : vector<16x1xf32>
    %122 = vector.broadcast %121 : vector<16x1xf32> to vector<16x32xf32>
    %123 = arith.mulf %118, %122 : vector<16x32xf32>
    %124 = vector.broadcast %94 : vector<1x32xf32> to vector<16x32xf32>
    %125 = arith.mulf %123, %124 : vector<16x32xf32>
    %126 = vector.broadcast %95 : vector<1x32xf32> to vector<16x32xf32>
    %127 = arith.addf %125, %126 : vector<16x32xf32>
    %cst_64 = arith.constant dense<0.000000e+00> : vector<16x96xf32>
    %128 = tpu.matmul %127, %96, %cst_64 {dimension_numbers = #tpu.dot_dimension_numbers<[1], [0], [0], [1], [0, 0, 1, 1], [], []>} : vector<16x32xf32>, vector<32x96xf32>, vector<16x96xf32> -> vector<16x96xf32>
    %129 = vector.broadcast %97 : vector<1x96xf32> to vector<16x96xf32>
    %130 = arith.addf %128, %129 : vector<16x96xf32>
    %131 = vector.extract_strided_slice %130 {offsets = [0, 0], sizes = [16, 8], strides = [1, 1]} : vector<16x96xf32> to vector<16x8xf32>
    %132 = vector.shape_cast %131 : vector<16x8xf32> to vector<2x8x8xf32>
    %133 = vector.extract_strided_slice %130 {offsets = [0, 8], sizes = [16, 8], strides = [1, 1]} : vector<16x96xf32> to vector<16x8xf32>
    %134 = vector.shape_cast %133 : vector<16x8xf32> to vector<2x8x8xf32>
    %135 = vector.extract_strided_slice %130 {offsets = [0, 16], sizes = [16, 8], strides = [1, 1]} : vector<16x96xf32> to vector<16x8xf32>
    %136 = vector.shape_cast %135 : vector<16x8xf32> to vector<2x8x8xf32>
    %137 = vector.extract_strided_slice %130 {offsets = [0, 24], sizes = [16, 8], strides = [1, 1]} : vector<16x96xf32> to vector<16x8xf32>
    %138 = vector.shape_cast %137 : vector<16x8xf32> to vector<2x8x8xf32>
    %139 = tpu.concatenate %132, %134, %136, %138 in 0 : vector<2x8x8xf32>, vector<2x8x8xf32>, vector<2x8x8xf32>, vector<2x8x8xf32> -> vector<8x8x8xf32>
    %140 = vector.extract_strided_slice %130 {offsets = [0, 32], sizes = [16, 8], strides = [1, 1]} : vector<16x96xf32> to vector<16x8xf32>
    %141 = vector.shape_cast %140 : vector<16x8xf32> to vector<2x8x8xf32>
    %142 = vector.extract_strided_slice %130 {offsets = [0, 40], sizes = [16, 8], strides = [1, 1]} : vector<16x96xf32> to vector<16x8xf32>
    %143 = vector.shape_cast %142 : vector<16x8xf32> to vector<2x8x8xf32>
    %144 = vector.extract_strided_slice %130 {offsets = [0, 48], sizes = [16, 8], strides = [1, 1]} : vector<16x96xf32> to vector<16x8xf32>
    %145 = vector.shape_cast %144 : vector<16x8xf32> to vector<2x8x8xf32>
    %146 = vector.extract_strided_slice %130 {offsets = [0, 56], sizes = [16, 8], strides = [1, 1]} : vector<16x96xf32> to vector<16x8xf32>
    %147 = vector.shape_cast %146 : vector<16x8xf32> to vector<2x8x8xf32>
    %148 = tpu.concatenate %141, %143, %145, %147 in 0 : vector<2x8x8xf32>, vector<2x8x8xf32>, vector<2x8x8xf32>, vector<2x8x8xf32> -> vector<8x8x8xf32>
    %149 = vector.extract_strided_slice %130 {offsets = [0, 64], sizes = [16, 8], strides = [1, 1]} : vector<16x96xf32> to vector<16x8xf32>
    %150 = vector.shape_cast %149 : vector<16x8xf32> to vector<2x8x8xf32>
    %151 = vector.extract_strided_slice %130 {offsets = [0, 72], sizes = [16, 8], strides = [1, 1]} : vector<16x96xf32> to vector<16x8xf32>
    %152 = vector.shape_cast %151 : vector<16x8xf32> to vector<2x8x8xf32>
    %153 = vector.extract_strided_slice %130 {offsets = [0, 80], sizes = [16, 8], strides = [1, 1]} : vector<16x96xf32> to vector<16x8xf32>
    %154 = vector.shape_cast %153 : vector<16x8xf32> to vector<2x8x8xf32>
    %155 = vector.extract_strided_slice %130 {offsets = [0, 88], sizes = [16, 8], strides = [1, 1]} : vector<16x96xf32> to vector<16x8xf32>
    %156 = vector.shape_cast %155 : vector<16x8xf32> to vector<2x8x8xf32>
    %157 = tpu.concatenate %150, %152, %154, %156 in 0 : vector<2x8x8xf32>, vector<2x8x8xf32>, vector<2x8x8xf32>, vector<2x8x8xf32> -> vector<8x8x8xf32>
    "tpu.trace_start"() <{level = 10 : i32, message = "bqd,bkd->bqk"}> : () -> ()
    %cst_65 = arith.constant dense<0.000000e+00> : vector<8x8x8xf32>
    %158 = tpu.matmul %139, %148, %cst_65 {dimension_numbers = #tpu.dot_dimension_numbers<[2], [2], [1], [1], [0, 0, 0, 1, 1, 1], [0], [0]>} : vector<8x8x8xf32>, vector<8x8x8xf32>, vector<8x8x8xf32> -> vector<8x8x8xf32>
    "tpu.trace_stop"() : () -> ()
    %cst_66 = arith.constant dense<0xFF800000> : vector<8x8xf32>
    %159 = vector.multi_reduction <maximumf>, %158, %cst_66 [2] : vector<8x8x8xf32> to vector<8x8xf32>
    %160 = vector.shape_cast %159 : vector<8x8xf32> to vector<8x8x1xf32>
    %161 = vector.broadcast %160 : vector<8x8x1xf32> to vector<8x8x8xf32>
    %162 = arith.subf %158, %161 : vector<8x8x8xf32>
    %163 = math.exp %162 : vector<8x8x8xf32>
    %cst_67 = arith.constant dense<0.000000e+00> : vector<8x8xf32>
    %164 = vector.multi_reduction <add>, %163, %cst_67 [2] : vector<8x8x8xf32> to vector<8x8xf32>
    %165 = vector.shape_cast %164 : vector<8x8xf32> to vector<8x8x1xf32>
    %166 = vector.broadcast %165 : vector<8x8x1xf32> to vector<8x8x8xf32>
    %167 = arith.divf %163, %166 : vector<8x8x8xf32>
    "tpu.trace_start"() <{level = 10 : i32, message = "bqk,bkd->bqd"}> : () -> ()
    %cst_68 = arith.constant dense<0.000000e+00> : vector<8x8x8xf32>
    %168 = tpu.matmul %167, %157, %cst_68 {dimension_numbers = #tpu.dot_dimension_numbers<[2], [1], [1], [2], [0, 0, 0, 1, 1, 2], [0], [0]>} : vector<8x8x8xf32>, vector<8x8x8xf32>, vector<8x8x8xf32> -> vector<8x8x8xf32>
    "tpu.trace_stop"() : () -> ()
    %169 = vector.extract_strided_slice %168 {offsets = [0, 0, 0], sizes = [2, 8, 8], strides = [1, 1, 1]} : vector<8x8x8xf32> to vector<2x8x8xf32>
    %170 = vector.extract_strided_slice %168 {offsets = [2, 0, 0], sizes = [2, 8, 8], strides = [1, 1, 1]} : vector<8x8x8xf32> to vector<2x8x8xf32>
    %171 = vector.extract_strided_slice %168 {offsets = [4, 0, 0], sizes = [2, 8, 8], strides = [1, 1, 1]} : vector<8x8x8xf32> to vector<2x8x8xf32>
    %172 = vector.extract_strided_slice %168 {offsets = [6, 0, 0], sizes = [2, 8, 8], strides = [1, 1, 1]} : vector<8x8x8xf32> to vector<2x8x8xf32>
    %173 = tpu.concatenate %169, %170, %171, %172 in 2 : vector<2x8x8xf32>, vector<2x8x8xf32>, vector<2x8x8xf32>, vector<2x8x8xf32> -> vector<2x8x32xf32>
    %174 = vector.shape_cast %173 : vector<2x8x32xf32> to vector<16x32xf32>
    %cst_69 = arith.constant dense<0.000000e+00> : vector<16x32xf32>
    %175 = tpu.matmul %174, %98, %cst_69 {dimension_numbers = #tpu.dot_dimension_numbers<[1], [0], [0], [1], [0, 0, 1, 1], [], []>} : vector<16x32xf32>, vector<32x32xf32>, vector<16x32xf32> -> vector<16x32xf32>
    %176 = vector.broadcast %99 : vector<1x32xf32> to vector<16x32xf32>
    %177 = arith.addf %175, %176 : vector<16x32xf32>
    %178 = arith.addf %93, %177 : vector<16x32xf32>
    %cst_70 = arith.constant dense<0.000000e+00> : vector<16xf32>
    %179 = vector.multi_reduction <add>, %178, %cst_70 [1] : vector<16x32xf32> to vector<16xf32>
    %180 = vector.shape_cast %179 : vector<16xf32> to vector<16x1xf32>
    %cst_71 = arith.constant 3.200000e+01 : f32
    %181 = vector.broadcast %cst_71 : f32 to vector<16x1xf32>
    %182 = arith.divf %180, %181 : vector<16x1xf32>
    %183 = vector.broadcast %182 : vector<16x1xf32> to vector<16x32xf32>
    %184 = arith.subf %178, %183 : vector<16x32xf32>
    %185 = arith.mulf %184, %184 : vector<16x32xf32>
    %cst_72 = arith.constant dense<0.000000e+00> : vector<16xf32>
    %186 = vector.multi_reduction <add>, %185, %cst_72 [1] : vector<16x32xf32> to vector<16xf32>
    %187 = vector.shape_cast %186 : vector<16xf32> to vector<16x1xf32>
    %cst_73 = arith.constant 3.200000e+01 : f32
    %188 = vector.broadcast %cst_73 : f32 to vector<16x1xf32>
    %189 = arith.divf %187, %188 : vector<16x1xf32>
    %190 = vector.broadcast %182 : vector<16x1xf32> to vector<16x32xf32>
    %191 = arith.subf %178, %190 : vector<16x32xf32>
    %cst_74 = arith.constant 9.99999974E-6 : f32
    %192 = vector.broadcast %cst_74 : f32 to vector<16x1xf32>
    %193 = arith.addf %189, %192 : vector<16x1xf32>
    %194 = math.rsqrt %193 : vector<16x1xf32>
    %195 = vector.broadcast %194 : vector<16x1xf32> to vector<16x32xf32>
    %196 = arith.mulf %191, %195 : vector<16x32xf32>
    %197 = vector.broadcast %100 : vector<1x32xf32> to vector<16x32xf32>
    %198 = arith.mulf %196, %197 : vector<16x32xf32>
    %199 = vector.broadcast %101 : vector<1x32xf32> to vector<16x32xf32>
    %200 = arith.addf %198, %199 : vector<16x32xf32>
    %cst_75 = arith.constant dense<0.000000e+00> : vector<16x64xf32>
    %201 = tpu.matmul %200, %102, %cst_75 {dimension_numbers = #tpu.dot_dimension_numbers<[1], [0], [0], [1], [0, 0, 1, 1], [], []>} : vector<16x32xf32>, vector<32x64xf32>, vector<16x64xf32> -> vector<16x64xf32>
    %202 = vector.broadcast %103 : vector<1x64xf32> to vector<16x64xf32>
    %203 = arith.addf %201, %202 : vector<16x64xf32>
    %cst_76 = arith.constant 0.000000e+00 : f32
    %204 = vector.broadcast %cst_76 : f32 to vector<16x64xf32>
    %205 = arith.maximumf %203, %204 : vector<16x64xf32>
    %cst_77 = arith.constant dense<0.000000e+00> : vector<16x32xf32>
    %206 = tpu.matmul %205, %104, %cst_77 {dimension_numbers = #tpu.dot_dimension_numbers<[1], [0], [0], [1], [0, 0, 1, 1], [], []>} : vector<16x64xf32>, vector<64x32xf32>, vector<16x32xf32> -> vector<16x32xf32>
    %207 = vector.broadcast %105 : vector<1x32xf32> to vector<16x32xf32>
    %208 = arith.addf %206, %207 : vector<16x32xf32>
    %209 = arith.addf %178, %208 : vector<16x32xf32>
    %210 = vector.shape_cast %209 : vector<16x32xf32> to vector<2x8x32xf32>
    %c0_78 = arith.constant 0 : index
    %c0_79 = arith.constant 0 : index
    %c0_80 = arith.constant 0 : index
    %211 = vector.load %arg26[%c0_78, %c0_79, %c0_80] : memref<2x8x32xf32, #tpu.memory_space<vmem>>, vector<2x8x32xf32>
    tpu.vector_store %arg26[%c0_78, %c0_79, %c0_80], %210 {strides = array<i32>} : memref<2x8x32xf32, #tpu.memory_space<vmem>>, vector<2x8x32xf32>,
    return
  }
  func.func @transform_0(%arg0: i32) -> (i32, i32, i32) {
    %c0_i32 = arith.constant 0 : i32
    %c0_i32_0 = arith.constant 0 : i32
    %c0_i32_1 = arith.constant 0 : i32
    return %arg0, %c0_i32, %c0_i32_0 : i32, i32, i32
  }
  func.func @transform_1(%arg0: i32) -> (i32, i32) {
    %c0_i32 = arith.constant 0 : i32
    %c0_i32_0 = arith.constant 0 : i32
    %c0_i32_1 = arith.constant 0 : i32
    return %c0_i32, %c0_i32_0 : i32, i32
  }
  func.func @transform_2(%arg0: i32) -> (i32, i32) {
    %c0_i32 = arith.constant 0 : i32
    %c0_i32_0 = arith.constant 0 : i32
    %c0_i32_1 = arith.constant 0 : i32
    return %c0_i32, %c0_i32_0 : i32, i32
  }
  func.func @transform_3(%arg0: i32) -> (i32, i32) {
    %c0_i32 = arith.constant 0 : i32
    %c0_i32_0 = arith.constant 0 : i32
    %c0_i32_1 = arith.constant 0 : i32
    return %c0_i32, %c0_i32_0 : i32, i32
  }
  func.func @transform_4(%arg0: i32) -> (i32, i32) {
    %c0_i32 = arith.constant 0 : i32
    %c0_i32_0 = arith.constant 0 : i32
    %c0_i32_1 = arith.constant 0 : i32
    return %c0_i32, %c0_i32_0 : i32, i32
  }
  func.func @transform_5(%arg0: i32) -> (i32, i32) {
    %c0_i32 = arith.constant 0 : i32
    %c0_i32_0 = arith.constant 0 : i32
    %c0_i32_1 = arith.constant 0 : i32
    return %c0_i32, %c0_i32_0 : i32, i32
  }
  func.func @transform_6(%arg0: i32) -> (i32, i32) {
    %c0_i32 = arith.constant 0 : i32
    %c0_i32_0 = arith.constant 0 : i32
    %c0_i32_1 = arith.constant 0 : i32
    return %c0_i32, %c0_i32_0 : i32, i32
  }
  func.func @transform_7(%arg0: i32) -> (i32, i32) {
    %c0_i32 = arith.constant 0 : i32
    %c0_i32_0 = arith.constant 0 : i32
    %c0_i32_1 = arith.constant 0 : i32
    return %c0_i32, %c0_i32_0 : i32, i32
  }
  func.func @transform_8(%arg0: i32) -> (i32, i32) {
    %c0_i32 = arith.constant 0 : i32
    %c0_i32_0 = arith.constant 0 : i32
    %c0_i32_1 = arith.constant 0 : i32
    return %c0_i32, %c0_i32_0 : i32, i32
  }
  func.func @transform_9(%arg0: i32) -> (i32, i32) {
    %c0_i32 = arith.constant 0 : i32
    %c0_i32_0 = arith.constant 0 : i32
    %c0_i32_1 = arith.constant 0 : i32
    return %c0_i32, %c0_i32_0 : i32, i32
  }
  func.func @transform_10(%arg0: i32) -> (i32, i32) {
    %c0_i32 = arith.constant 0 : i32
    %c0_i32_0 = arith.constant 0 : i32
    %c0_i32_1 = arith.constant 0 : i32
    return %c0_i32, %c0_i32_0 : i32, i32
  }
  func.func @transform_11(%arg0: i32) -> (i32, i32) {
    %c0_i32 = arith.constant 0 : i32
    %c0_i32_0 = arith.constant 0 : i32
    %c0_i32_1 = arith.constant 0 : i32
    return %c0_i32, %c0_i32_0 : i32, i32
  }
  func.func @transform_12(%arg0: i32) -> (i32, i32) {
    %c0_i32 = arith.constant 0 : i32
    %c0_i32_0 = arith.constant 0 : i32
    %c0_i32_1 = arith.constant 0 : i32
    return %c0_i32, %c0_i32_0 : i32, i32
  }
  func.func @transform_13(%arg0: i32) -> (i32, i32) {
    %c0_i32 = arith.constant 0 : i32
    %c0_i32_0 = arith.constant 0 : i32
    %c0_i32_1 = arith.constant 0 : i32
    return %c0_i32, %c0_i32_0 : i32, i32
  }
  func.func @transform_14(%arg0: i32) -> (i32, i32) {
    %c0_i32 = arith.constant 0 : i32
    %c0_i32_0 = arith.constant 0 : i32
    %c0_i32_1 = arith.constant 0 : i32
    return %c0_i32, %c0_i32_0 : i32, i32
  }
  func.func @transform_15(%arg0: i32) -> (i32, i32) {
    %c0_i32 = arith.constant 0 : i32
    %c0_i32_0 = arith.constant 0 : i32
    %c0_i32_1 = arith.constant 0 : i32
    return %c0_i32, %c0_i32_0 : i32, i32
  }
  func.func @transform_16(%arg0: i32) -> (i32, i32) {
    %c0_i32 = arith.constant 0 : i32
    %c0_i32_0 = arith.constant 0 : i32
    %c0_i32_1 = arith.constant 0 : i32
    return %c0_i32, %c0_i32_0 : i32, i32
  }
  func.func @transform_17(%arg0: i32) -> (i32, i32) {
    %c0_i32 = arith.constant 0 : i32
    %c0_i32_0 = arith.constant 0 : i32
    %c0_i32_1 = arith.constant 0 : i32
    return %c0_i32, %c0_i32_0 : i32, i32
  }
  func.func @transform_18(%arg0: i32) -> (i32, i32) {
    %c0_i32 = arith.constant 0 : i32
    %c0_i32_0 = arith.constant 0 : i32
    %c0_i32_1 = arith.constant 0 : i32
    return %c0_i32, %c0_i32_0 : i32, i32
  }
  func.func @transform_19(%arg0: i32) -> (i32, i32) {
    %c0_i32 = arith.constant 0 : i32
    %c0_i32_0 = arith.constant 0 : i32
    %c0_i32_1 = arith.constant 0 : i32
    return %c0_i32, %c0_i32_0 : i32, i32
  }
  func.func @transform_20(%arg0: i32) -> (i32, i32) {
    %c0_i32 = arith.constant 0 : i32
    %c0_i32_0 = arith.constant 0 : i32
    %c0_i32_1 = arith.constant 0 : i32
    return %c0_i32, %c0_i32_0 : i32, i32
  }
  func.func @transform_21(%arg0: i32) -> (i32, i32) {
    %c0_i32 = arith.constant 0 : i32
    %c0_i32_0 = arith.constant 0 : i32
    %c0_i32_1 = arith.constant 0 : i32
    return %c0_i32, %c0_i32_0 : i32, i32
  }
  func.func @transform_22(%arg0: i32) -> (i32, i32) {
    %c0_i32 = arith.constant 0 : i32
    %c0_i32_0 = arith.constant 0 : i32
    %c0_i32_1 = arith.constant 0 : i32
    return %c0_i32, %c0_i32_0 : i32, i32
  }
  func.func @transform_23(%arg0: i32) -> (i32, i32) {
    %c0_i32 = arith.constant 0 : i32
    %c0_i32_0 = arith.constant 0 : i32
    %c0_i32_1 = arith.constant 0 : i32
    return %c0_i32, %c0_i32_0 : i32, i32
  }
  func.func @transform_24(%arg0: i32) -> (i32, i32) {
    %c0_i32 = arith.constant 0 : i32
    %c0_i32_0 = arith.constant 0 : i32
    %c0_i32_1 = arith.constant 0 : i32
    return %c0_i32, %c0_i32_0 : i32, i32
  }
  func.func @transform_25(%arg0: i32) -> (i32, i32, i32) {
    %c0_i32 = arith.constant 0 : i32
    %c0_i32_0 = arith.constant 0 : i32
    %c0_i32_1 = arith.constant 0 : i32
    return %arg0, %c0_i32, %c0_i32_0 : i32, i32, i32
  }
}

module attributes {stable_mosaic.version = 11 : i64} {
  func.func @kernel(%arg0: i32, %arg1: memref<2x8x32xf32, #tpu.memory_space<vmem>>, %arg2: memref<1x32xf32, #tpu.memory_space<vmem>>, %arg3: memref<1x32xf32, #tpu.memory_space<vmem>>, %arg4: memref<32x96xf32, #tpu.memory_space<vmem>>, %arg5: memref<1x96xf32, #tpu.memory_space<vmem>>, %arg6: memref<32x32xf32, #tpu.memory_space<vmem>>, %arg7: memref<1x32xf32, #tpu.memory_space<vmem>>, %arg8: memref<1x32xf32, #tpu.memory_space<vmem>>, %arg9: memref<1x32xf32, #tpu.memory_space<vmem>>, %arg10: memref<32x64xf32, #tpu.memory_space<vmem>>, %arg11: memref<1x64xf32, #tpu.memory_space<vmem>>, %arg12: memref<64x32xf32, #tpu.memory_space<vmem>>, %arg13: memref<1x32xf32, #tpu.memory_space<vmem>>, %arg14: memref<1x32xf32, #tpu.memory_space<vmem>>, %arg15: memref<1x32xf32, #tpu.memory_space<vmem>>, %arg16: memref<32x96xf32, #tpu.memory_space<vmem>>, %arg17: memref<1x96xf32, #tpu.memory_space<vmem>>, %arg18: memref<32x32xf32, #tpu.memory_space<vmem>>, %arg19: memref<1x32xf32, #tpu.memory_space<vmem>>, %arg20: memref<1x32xf32, #tpu.memory_space<vmem>>, %arg21: memref<1x32xf32, #tpu.memory_space<vmem>>, %arg22: memref<32x64xf32, #tpu.memory_space<vmem>>, %arg23: memref<1x64xf32, #tpu.memory_space<vmem>>, %arg24: memref<64x32xf32, #tpu.memory_space<vmem>>, %arg25: memref<1x32xf32, #tpu.memory_space<vmem>>, %arg26: memref<2x8x32xf32, #tpu.memory_space<vmem>>) attributes {dimension_semantics = [#tpu.dimension_semantics<parallel>], iteration_bounds = array<i64: 1>, scalar_prefetch = 0 : i64, scratch_operands = 0 : i64, tpu.core_type = #tpu.core_type<tc>, window_params = [{transform_indices = @transform_0, window_bounds = array<i64: 2, 8, 32>}, {pipeline_mode = #tpu.pipeline_mode<synchronous>, transform_indices = @transform_1, window_bounds = array<i64: 1, 32>}, {pipeline_mode = #tpu.pipeline_mode<synchronous>, transform_indices = @transform_2, window_bounds = array<i64: 1, 32>}, {pipeline_mode = #tpu.pipeline_mode<synchronous>, transform_indices = @transform_3, window_bounds = array<i64: 32, 96>}, {pipeline_mode = #tpu.pipeline_mode<synchronous>, transform_indices = @transform_4, window_bounds = array<i64: 1, 96>}, {pipeline_mode = #tpu.pipeline_mode<synchronous>, transform_indices = @transform_5, window_bounds = array<i64: 32, 32>}, {pipeline_mode = #tpu.pipeline_mode<synchronous>, transform_indices = @transform_6, window_bounds = array<i64: 1, 32>}, {pipeline_mode = #tpu.pipeline_mode<synchronous>, transform_indices = @transform_7, window_bounds = array<i64: 1, 32>}, {pipeline_mode = #tpu.pipeline_mode<synchronous>, transform_indices = @transform_8, window_bounds = array<i64: 1, 32>}, {pipeline_mode = #tpu.pipeline_mode<synchronous>, transform_indices = @transform_9, window_bounds = array<i64: 32, 64>}, {pipeline_mode = #tpu.pipeline_mode<synchronous>, transform_indices = @transform_10, window_bounds = array<i64: 1, 64>}, {pipeline_mode = #tpu.pipeline_mode<synchronous>, transform_indices = @transform_11, window_bounds = array<i64: 64, 32>}, {pipeline_mode = #tpu.pipeline_mode<synchronous>, transform_indices = @transform_12, window_bounds = array<i64: 1, 32>}, {pipeline_mode = #tpu.pipeline_mode<synchronous>, transform_indices = @transform_13, window_bounds = array<i64: 1, 32>}, {pipeline_mode = #tpu.pipeline_mode<synchronous>, transform_indices = @transform_14, window_bounds = array<i64: 1, 32>}, {pipeline_mode = #tpu.pipeline_mode<synchronous>, transform_indices = @transform_15, window_bounds = array<i64: 32, 96>}, {pipeline_mode = #tpu.pipeline_mode<synchronous>, transform_indices = @transform_16, window_bounds = array<i64: 1, 96>}, {pipeline_mode = #tpu.pipeline_mode<synchronous>, transform_indices = @transform_17, window_bounds = array<i64: 32, 32>}, {pipeline_mode = #tpu.pipeline_mode<synchronous>, transform_indices = @transform_18, window_bounds = array<i64: 1, 32>}, {pipeline_mode = #tpu.pipeline_mode<synchronous>, transform_indices = @transform_19, window_bounds = array<i64: 1, 32>}, {pipeline_mode = #tpu.pipeline_mode<synchronous>, transform_indices = @transform_20, window_bounds = array<i64: 1, 32>}, {pipeline_mode = #tpu.pipeline_mode<synchronous>, transform_indices = @transform_21, window_bounds = array<i64: 32, 64>}, {pipeline_mode = #tpu.pipeline_mode<synchronous>, transform_indices = @transform_22, window_bounds = array<i64: 1, 64>}, {pipeline_mode = #tpu.pipeline_mode<synchronous>, transform_indices = @transform_23, window_bounds = array<i64: 64, 32>}, {pipeline_mode = #tpu.pipeline_mode<synchronous>, transform_indices = @transform_24, window_bounds = array<i64: 1, 32>}, {transform_indices = @transform_25, window_bounds = array<i64: 2, 8, 32>}]} {
    %c0 = arith.constant 0 : index
    %c0_0 = arith.constant 0 : index
    %c0_1 = arith.constant 0 : index
    %0 = vector.load %arg1[%c0, %c0_0, %c0_1] : memref<2x8x32xf32, #tpu.memory_space<vmem>>, vector<2x8x32xf32>
    %1 = vector.shape_cast %0 : vector<2x8x32xf32> to vector<16x32xf32>
    %c0_2 = arith.constant 0 : index
    %c0_3 = arith.constant 0 : index
    %2 = vector.load %arg4[%c0_2, %c0_3] : memref<32x96xf32, #tpu.memory_space<vmem>>, vector<32x96xf32>
    %c0_4 = arith.constant 0 : index
    %c0_5 = arith.constant 0 : index
    %3 = vector.load %arg5[%c0_4, %c0_5] : memref<1x96xf32, #tpu.memory_space<vmem>>, vector<1x96xf32>
    %c0_6 = arith.constant 0 : index
    %c0_7 = arith.constant 0 : index
    %4 = vector.load %arg6[%c0_6, %c0_7] : memref<32x32xf32, #tpu.memory_space<vmem>>, vector<32x32xf32>
    %c0_8 = arith.constant 0 : index
    %c0_9 = arith.constant 0 : index
    %5 = vector.load %arg7[%c0_8, %c0_9] : memref<1x32xf32, #tpu.memory_space<vmem>>, vector<1x32xf32>
    %c0_10 = arith.constant 0 : index
    %c0_11 = arith.constant 0 : index
    %6 = vector.load %arg8[%c0_10, %c0_11] : memref<1x32xf32, #tpu.memory_space<vmem>>, vector<1x32xf32>
    %c0_12 = arith.constant 0 : index
    %c0_13 = arith.constant 0 : index
    %7 = vector.load %arg9[%c0_12, %c0_13] : memref<1x32xf32, #tpu.memory_space<vmem>>, vector<1x32xf32>
    %c0_14 = arith.constant 0 : index
    %c0_15 = arith.constant 0 : index
    %8 = vector.load %arg10[%c0_14, %c0_15] : memref<32x64xf32, #tpu.memory_space<vmem>>, vector<32x64xf32>
    %c0_16 = arith.constant 0 : index
    %c0_17 = arith.constant 0 : index
    %9 = vector.load %arg11[%c0_16, %c0_17] : memref<1x64xf32, #tpu.memory_space<vmem>>, vector<1x64xf32>
    %c0_18 = arith.constant 0 : index
    %c0_19 = arith.constant 0 : index
    %10 = vector.load %arg12[%c0_18, %c0_19] : memref<64x32xf32, #tpu.memory_space<vmem>>, vector<64x32xf32>
    %c0_20 = arith.constant 0 : index
    %c0_21 = arith.constant 0 : index
    %11 = vector.load %arg13[%c0_20, %c0_21] : memref<1x32xf32, #tpu.memory_space<vmem>>, vector<1x32xf32>
    %cst = arith.constant dense<0.000000e+00> : vector<16x96xf32>
    %12 = tpu.matmul %1, %2, %cst {dimension_numbers = #tpu.dot_dimension_numbers<[1], [0], [0], [1], [0, 0, 1, 1], [], []>} : vector<16x32xf32>, vector<32x96xf32>, vector<16x96xf32> -> vector<16x96xf32>
    %13 = vector.broadcast %3 : vector<1x96xf32> to vector<16x96xf32>
    %14 = arith.addf %12, %13 : vector<16x96xf32>
    %15 = vector.extract_strided_slice %14 {offsets = [0, 0], sizes = [16, 8], strides = [1, 1]} : vector<16x96xf32> to vector<16x8xf32>
    %16 = vector.shape_cast %15 : vector<16x8xf32> to vector<2x8x8xf32>
    %17 = vector.extract_strided_slice %14 {offsets = [0, 8], sizes = [16, 8], strides = [1, 1]} : vector<16x96xf32> to vector<16x8xf32>
    %18 = vector.shape_cast %17 : vector<16x8xf32> to vector<2x8x8xf32>
    %19 = vector.extract_strided_slice %14 {offsets = [0, 16], sizes = [16, 8], strides = [1, 1]} : vector<16x96xf32> to vector<16x8xf32>
    %20 = vector.shape_cast %19 : vector<16x8xf32> to vector<2x8x8xf32>
    %21 = vector.extract_strided_slice %14 {offsets = [0, 24], sizes = [16, 8], strides = [1, 1]} : vector<16x96xf32> to vector<16x8xf32>
    %22 = vector.shape_cast %21 : vector<16x8xf32> to vector<2x8x8xf32>
    %23 = tpu.concatenate %16, %18, %20, %22 in 0 : vector<2x8x8xf32>, vector<2x8x8xf32>, vector<2x8x8xf32>, vector<2x8x8xf32> -> vector<8x8x8xf32>
    %24 = vector.extract_strided_slice %14 {offsets = [0, 32], sizes = [16, 8], strides = [1, 1]} : vector<16x96xf32> to vector<16x8xf32>
    %25 = vector.shape_cast %24 : vector<16x8xf32> to vector<2x8x8xf32>
    %26 = vector.extract_strided_slice %14 {offsets = [0, 40], sizes = [16, 8], strides = [1, 1]} : vector<16x96xf32> to vector<16x8xf32>
    %27 = vector.shape_cast %26 : vector<16x8xf32> to vector<2x8x8xf32>
    %28 = vector.extract_strided_slice %14 {offsets = [0, 48], sizes = [16, 8], strides = [1, 1]} : vector<16x96xf32> to vector<16x8xf32>
    %29 = vector.shape_cast %28 : vector<16x8xf32> to vector<2x8x8xf32>
    %30 = vector.extract_strided_slice %14 {offsets = [0, 56], sizes = [16, 8], strides = [1, 1]} : vector<16x96xf32> to vector<16x8xf32>
    %31 = vector.shape_cast %30 : vector<16x8xf32> to vector<2x8x8xf32>
    %32 = tpu.concatenate %25, %27, %29, %31 in 0 : vector<2x8x8xf32>, vector<2x8x8xf32>, vector<2x8x8xf32>, vector<2x8x8xf32> -> vector<8x8x8xf32>
    %33 = vector.extract_strided_slice %14 {offsets = [0, 64], sizes = [16, 8], strides = [1, 1]} : vector<16x96xf32> to vector<16x8xf32>
    %34 = vector.shape_cast %33 : vector<16x8xf32> to vector<2x8x8xf32>
    %35 = vector.extract_strided_slice %14 {offsets = [0, 72], sizes = [16, 8], strides = [1, 1]} : vector<16x96xf32> to vector<16x8xf32>
    %36 = vector.shape_cast %35 : vector<16x8xf32> to vector<2x8x8xf32>
    %37 = vector.extract_strided_slice %14 {offsets = [0, 80], sizes = [16, 8], strides = [1, 1]} : vector<16x96xf32> to vector<16x8xf32>
    %38 = vector.shape_cast %37 : vector<16x8xf32> to vector<2x8x8xf32>
    %39 = vector.extract_strided_slice %14 {offsets = [0, 88], sizes = [16, 8], strides = [1, 1]} : vector<16x96xf32> to vector<16x8xf32>
    %40 = vector.shape_cast %39 : vector<16x8xf32> to vector<2x8x8xf32>
    %41 = tpu.concatenate %34, %36, %38, %40 in 0 : vector<2x8x8xf32>, vector<2x8x8xf32>, vector<2x8x8xf32>, vector<2x8x8xf32> -> vector<8x8x8xf32>
    "tpu.trace_start"() <{level = 10 : i32, message = "bqd,bkd->bqk"}> : () -> ()
    %cst_22 = arith.constant dense<0.000000e+00> : vector<8x8x8xf32>
    %42 = tpu.matmul %23, %32, %cst_22 {dimension_numbers = #tpu.dot_dimension_numbers<[2], [2], [1], [1], [0, 0, 0, 1, 1, 1], [0], [0]>} : vector<8x8x8xf32>, vector<8x8x8xf32>, vector<8x8x8xf32> -> vector<8x8x8xf32>
    "tpu.trace_stop"() : () -> ()
    %cst_23 = arith.constant dense<0xFF800000> : vector<8x8xf32>
    %43 = vector.multi_reduction <maximumf>, %42, %cst_23 [2] : vector<8x8x8xf32> to vector<8x8xf32>
    %44 = vector.shape_cast %43 : vector<8x8xf32> to vector<8x8x1xf32>
    %45 = vector.broadcast %44 : vector<8x8x1xf32> to vector<8x8x8xf32>
    %46 = arith.subf %42, %45 : vector<8x8x8xf32>
    %47 = math.exp %46 : vector<8x8x8xf32>
    %cst_24 = arith.constant dense<0.000000e+00> : vector<8x8xf32>
    %48 = vector.multi_reduction <add>, %47, %cst_24 [2] : vector<8x8x8xf32> to vector<8x8xf32>
    %49 = vector.shape_cast %48 : vector<8x8xf32> to vector<8x8x1xf32>
    %50 = vector.broadcast %49 : vector<8x8x1xf32> to vector<8x8x8xf32>
    %51 = arith.divf %47, %50 : vector<8x8x8xf32>
    "tpu.trace_start"() <{level = 10 : i32, message = "bqk,bkd->bqd"}> : () -> ()
    %cst_25 = arith.constant dense<0.000000e+00> : vector<8x8x8xf32>
    %52 = tpu.matmul %51, %41, %cst_25 {dimension_numbers = #tpu.dot_dimension_numbers<[2], [1], [1], [2], [0, 0, 0, 1, 1, 2], [0], [0]>} : vector<8x8x8xf32>, vector<8x8x8xf32>, vector<8x8x8xf32> -> vector<8x8x8xf32>
    "tpu.trace_stop"() : () -> ()
    %53 = vector.extract_strided_slice %52 {offsets = [0, 0, 0], sizes = [2, 8, 8], strides = [1, 1, 1]} : vector<8x8x8xf32> to vector<2x8x8xf32>
    %54 = vector.extract_strided_slice %52 {offsets = [2, 0, 0], sizes = [2, 8, 8], strides = [1, 1, 1]} : vector<8x8x8xf32> to vector<2x8x8xf32>
    %55 = vector.extract_strided_slice %52 {offsets = [4, 0, 0], sizes = [2, 8, 8], strides = [1, 1, 1]} : vector<8x8x8xf32> to vector<2x8x8xf32>
    %56 = vector.extract_strided_slice %52 {offsets = [6, 0, 0], sizes = [2, 8, 8], strides = [1, 1, 1]} : vector<8x8x8xf32> to vector<2x8x8xf32>
    %57 = tpu.concatenate %53, %54, %55, %56 in 2 : vector<2x8x8xf32>, vector<2x8x8xf32>, vector<2x8x8xf32>, vector<2x8x8xf32> -> vector<2x8x32xf32>
    %58 = vector.shape_cast %57 : vector<2x8x32xf32> to vector<16x32xf32>
    %cst_26 = arith.constant dense<0.000000e+00> : vector<16x32xf32>
    %59 = tpu.matmul %58, %4, %cst_26 {dimension_numbers = #tpu.dot_dimension_numbers<[1], [0], [0], [1], [0, 0, 1, 1], [], []>} : vector<16x32xf32>, vector<32x32xf32>, vector<16x32xf32> -> vector<16x32xf32>
    %60 = vector.broadcast %5 : vector<1x32xf32> to vector<16x32xf32>
    %61 = arith.addf %59, %60 : vector<16x32xf32>
    %62 = arith.addf %1, %61 : vector<16x32xf32>
    %cst_27 = arith.constant dense<0.000000e+00> : vector<16xf32>
    %63 = vector.multi_reduction <add>, %62, %cst_27 [1] : vector<16x32xf32> to vector<16xf32>
    %64 = vector.shape_cast %63 : vector<16xf32> to vector<16x1xf32>
    %cst_28 = arith.constant 3.200000e+01 : f32
    %65 = vector.broadcast %cst_28 : f32 to vector<16x1xf32>
    %66 = arith.divf %64, %65 : vector<16x1xf32>
    %67 = vector.broadcast %66 : vector<16x1xf32> to vector<16x32xf32>
    %68 = arith.subf %62, %67 : vector<16x32xf32>
    %69 = arith.mulf %68, %68 : vector<16x32xf32>
    %cst_29 = arith.constant dense<0.000000e+00> : vector<16xf32>
    %70 = vector.multi_reduction <add>, %69, %cst_29 [1] : vector<16x32xf32> to vector<16xf32>
    %71 = vector.shape_cast %70 : vector<16xf32> to vector<16x1xf32>
    %cst_30 = arith.constant 3.200000e+01 : f32
    %72 = vector.broadcast %cst_30 : f32 to vector<16x1xf32>
    %73 = arith.divf %71, %72 : vector<16x1xf32>
    %74 = vector.broadcast %66 : vector<16x1xf32> to vector<16x32xf32>
    %75 = arith.subf %62, %74 : vector<16x32xf32>
    %cst_31 = arith.constant 9.99999974E-6 : f32
    %76 = vector.broadcast %cst_31 : f32 to vector<16x1xf32>
    %77 = arith.addf %73, %76 : vector<16x1xf32>
    %78 = math.rsqrt %77 : vector<16x1xf32>
    %79 = vector.broadcast %78 : vector<16x1xf32> to vector<16x32xf32>
    %80 = arith.mulf %75, %79 : vector<16x32xf32>
    %81 = vector.broadcast %6 : vector<1x32xf32> to vector<16x32xf32>
    %82 = arith.mulf %80, %81 : vector<16x32xf32>
    %83 = vector.broadcast %7 : vector<1x32xf32> to vector<16x32xf32>
    %84 = arith.addf %82, %83 : vector<16x32xf32>
    %cst_32 = arith.constant dense<0.000000e+00> : vector<16x64xf32>
    %85 = tpu.matmul %84, %8, %cst_32 {dimension_numbers = #tpu.dot_dimension_numbers<[1], [0], [0], [1], [0, 0, 1, 1], [], []>} : vector<16x32xf32>, vector<32x64xf32>, vector<16x64xf32> -> vector<16x64xf32>
    %86 = vector.broadcast %9 : vector<1x64xf32> to vector<16x64xf32>
    %87 = arith.addf %85, %86 : vector<16x64xf32>
    %cst_33 = arith.constant 0.000000e+00 : f32
    %88 = vector.broadcast %cst_33 : f32 to vector<16x64xf32>
    %89 = arith.maximumf %87, %88 : vector<16x64xf32>
    %cst_34 = arith.constant dense<0.000000e+00> : vector<16x32xf32>
    %90 = tpu.matmul %89, %10, %cst_34 {dimension_numbers = #tpu.dot_dimension_numbers<[1], [0], [0], [1], [0, 0, 1, 1], [], []>} : vector<16x64xf32>, vector<64x32xf32>, vector<16x32xf32> -> vector<16x32xf32>
    %91 = vector.broadcast %11 : vector<1x32xf32> to vector<16x32xf32>
    %92 = arith.addf %90, %91 : vector<16x32xf32>
    %93 = arith.addf %62, %92 : vector<16x32xf32>
    %c0_35 = arith.constant 0 : index
    %c0_36 = arith.constant 0 : index
    %94 = vector.load %arg14[%c0_35, %c0_36] : memref<1x32xf32, #tpu.memory_space<vmem>>, vector<1x32xf32>
    %c0_37 = arith.constant 0 : index
    %c0_38 = arith.constant 0 : index
    %95 = vector.load %arg15[%c0_37, %c0_38] : memref<1x32xf32, #tpu.memory_space<vmem>>, vector<1x32xf32>
    %c0_39 = arith.constant 0 : index
    %c0_40 = arith.constant 0 : index
    %96 = vector.load %arg16[%c0_39, %c0_40] : memref<32x96xf32, #tpu.memory_space<vmem>>, vector<32x96xf32>
    %c0_41 = arith.constant 0 : index
    %c0_42 = arith.constant 0 : index
    %97 = vector.load %arg17[%c0_41, %c0_42] : memref<1x96xf32, #tpu.memory_space<vmem>>, vector<1x96xf32>
    %c0_43 = arith.constant 0 : index
    %c0_44 = arith.constant 0 : index
    %98 = vector.load %arg18[%c0_43, %c0_44] : memref<32x32xf32, #tpu.memory_space<vmem>>, vector<32x32xf32>
    %c0_45 = arith.constant 0 : index
    %c0_46 = arith.constant 0 : index
    %99 = vector.load %arg19[%c0_45, %c0_46] : memref<1x32xf32, #tpu.memory_space<vmem>>, vector<1x32xf32>
    %c0_47 = arith.constant 0 : index
    %c0_48 = arith.constant 0 : index
    %100 = vector.load %arg20[%c0_47, %c0_48] : memref<1x32xf32, #tpu.memory_space<vmem>>, vector<1x32xf32>
    %c0_49 = arith.constant 0 : index
    %c0_50 = arith.constant 0 : index
    %101 = vector.load %arg21[%c0_49, %c0_50] : memref<1x32xf32, #tpu.memory_space<vmem>>, vector<1x32xf32>
    %c0_51 = arith.constant 0 : index
    %c0_52 = arith.constant 0 : index
    %102 = vector.load %arg22[%c0_51, %c0_52] : memref<32x64xf32, #tpu.memory_space<vmem>>, vector<32x64xf32>
    %c0_53 = arith.constant 0 : index
    %c0_54 = arith.constant 0 : index
    %103 = vector.load %arg23[%c0_53, %c0_54] : memref<1x64xf32, #tpu.memory_space<vmem>>, vector<1x64xf32>
    %c0_55 = arith.constant 0 : index
    %c0_56 = arith.constant 0 : index
    %104 = vector.load %arg24[%c0_55, %c0_56] : memref<64x32xf32, #tpu.memory_space<vmem>>, vector<64x32xf32>
    %c0_57 = arith.constant 0 : index
    %c0_58 = arith.constant 0 : index
    %105 = vector.load %arg25[%c0_57, %c0_58] : memref<1x32xf32, #tpu.memory_space<vmem>>, vector<1x32xf32>
    %cst_59 = arith.constant dense<0.000000e+00> : vector<16xf32>
    %106 = vector.multi_reduction <add>, %93, %cst_59 [1] : vector<16x32xf32> to vector<16xf32>
    %107 = vector.shape_cast %106 : vector<16xf32> to vector<16x1xf32>
    %cst_60 = arith.constant 3.200000e+01 : f32
    %108 = vector.broadcast %cst_60 : f32 to vector<16x1xf32>
    %109 = arith.divf %107, %108 : vector<16x1xf32>
    %110 = vector.broadcast %109 : vector<16x1xf32> to vector<16x32xf32>
    %111 = arith.subf %93, %110 : vector<16x32xf32>
    %112 = arith.mulf %111, %111 : vector<16x32xf32>
    %cst_61 = arith.constant dense<0.000000e+00> : vector<16xf32>
    %113 = vector.multi_reduction <add>, %112, %cst_61 [1] : vector<16x32xf32> to vector<16xf32>
    %114 = vector.shape_cast %113 : vector<16xf32> to vector<16x1xf32>
    %cst_62 = arith.constant 3.200000e+01 : f32
    %115 = vector.broadcast %cst_62 : f32 to vector<16x1xf32>
    %116 = arith.divf %114, %115 : vector<16x1xf32>
    %117 = vector.broadcast %109 : vector<16x1xf32> to vector<16x32xf32>
    %118 = arith.subf %93, %117 : vector<16x32xf32>
    %cst_63 = arith.constant 9.99999974E-6 : f32
    %119 = vector.broadcast %cst_63 : f32 to vector<16x1xf32>
    %120 = arith.addf %116, %119 : vector<16x1xf32>
    %121 = math.rsqrt %120 : vector<16x1xf32>
    %122 = vector.broadcast %121 : vector<16x1xf32> to vector<16x32xf32>
    %123 = arith.mulf %118, %122 : vector<16x32xf32>
    %124 = vector.broadcast %94 : vector<1x32xf32> to vector<16x32xf32>
    %125 = arith.mulf %123, %124 : vector<16x32xf32>
    %126 = vector.broadcast %95 : vector<1x32xf32> to vector<16x32xf32>
    %127 = arith.addf %125, %126 : vector<16x32xf32>
    %cst_64 = arith.constant dense<0.000000e+00> : vector<16x96xf32>
    %128 = tpu.matmul %127, %96, %cst_64 {dimension_numbers = #tpu.dot_dimension_numbers<[1], [0], [0], [1], [0, 0, 1, 1], [], []>} : vector<16x32xf32>, vector<32x96xf32>, vector<16x96xf32> -> vector<16x96xf32>
    %129 = vector.broadcast %97 : vector<1x96xf32> to vector<16x96xf32>
    %130 = arith.addf %128, %129 : vector<16x96xf32>
    %131 = vector.extract_strided_slice %130 {offsets = [0, 0], sizes = [16, 8], strides = [1, 1]} : vector<16x96xf32> to vector<16x8xf32>
    %132 = vector.shape_cast %131 : vector<16x8xf32> to vector<2x8x8xf32>
    %133 = vector.extract_strided_slice %130 {offsets = [0, 8], sizes = [16, 8], strides = [1, 1]} : vector<16x96xf32> to vector<16x8xf32>
    %134 = vector.shape_cast %133 : vector<16x8xf32> to vector<2x8x8xf32>
    %135 = vector.extract_strided_slice %130 {offsets = [0, 16], sizes = [16, 8], strides = [1, 1]} : vector<16x96xf32> to vector<16x8xf32>
    %136 = vector.shape_cast %135 : vector<16x8xf32> to vector<2x8x8xf32>
    %137 = vector.extract_strided_slice %130 {offsets = [0, 24], sizes = [16, 8], strides = [1, 1]} : vector<16x96xf32> to vector<16x8xf32>
    %138 = vector.shape_cast %137 : vector<16x8xf32> to vector<2x8x8xf32>
    %139 = tpu.concatenate %132, %134, %136, %138 in 0 : vector<2x8x8xf32>, vector<2x8x8xf32>, vector<2x8x8xf32>, vector<2x8x8xf32> -> vector<8x8x8xf32>
    %140 = vector.extract_strided_slice %130 {offsets = [0, 32], sizes = [16, 8], strides = [1, 1]} : vector<16x96xf32> to vector<16x8xf32>
    %141 = vector.shape_cast %140 : vector<16x8xf32> to vector<2x8x8xf32>
    %142 = vector.extract_strided_slice %130 {offsets = [0, 40], sizes = [16, 8], strides = [1, 1]} : vector<16x96xf32> to vector<16x8xf32>
    %143 = vector.shape_cast %142 : vector<16x8xf32> to vector<2x8x8xf32>
    %144 = vector.extract_strided_slice %130 {offsets = [0, 48], sizes = [16, 8], strides = [1, 1]} : vector<16x96xf32> to vector<16x8xf32>
    %145 = vector.shape_cast %144 : vector<16x8xf32> to vector<2x8x8xf32>
    %146 = vector.extract_strided_slice %130 {offsets = [0, 56], sizes = [16, 8], strides = [1, 1]} : vector<16x96xf32> to vector<16x8xf32>
    %147 = vector.shape_cast %146 : vector<16x8xf32> to vector<2x8x8xf32>
    %148 = tpu.concatenate %141, %143, %145, %147 in 0 : vector<2x8x8xf32>, vector<2x8x8xf32>, vector<2x8x8xf32>, vector<2x8x8xf32> -> vector<8x8x8xf32>
    %149 = vector.extract_strided_slice %130 {offsets = [0, 64], sizes = [16, 8], strides = [1, 1]} : vector<16x96xf32> to vector<16x8xf32>
    %150 = vector.shape_cast %149 : vector<16x8xf32> to vector<2x8x8xf32>
    %151 = vector.extract_strided_slice %130 {offsets = [0, 72], sizes = [16, 8], strides = [1, 1]} : vector<16x96xf32> to vector<16x8xf32>
    %152 = vector.shape_cast %151 : vector<16x8xf32> to vector<2x8x8xf32>
    %153 = vector.extract_strided_slice %130 {offsets = [0, 80], sizes = [16, 8], strides = [1, 1]} : vector<16x96xf32> to vector<16x8xf32>
    %154 = vector.shape_cast %153 : vector<16x8xf32> to vector<2x8x8xf32>
    %155 = vector.extract_strided_slice %130 {offsets = [0, 88], sizes = [16, 8], strides = [1, 1]} : vector<16x96xf32> to vector<16x8xf32>
    %156 = vector.shape_cast %155 : vector<16x8xf32> to vector<2x8x8xf32>
    %157 = tpu.concatenate %150, %152, %154, %156 in 0 : vector<2x8x8xf32>, vector<2x8x8xf32>, vector<2x8x8xf32>, vector<2x8x8xf32> -> vector<8x8x8xf32>
    "tpu.trace_start"() <{level = 10 : i32, message = "bqd,bkd->bqk"}> : () -> ()
    %cst_65 = arith.constant dense<0.000000e+00> : vector<8x8x8xf32>
    %158 = tpu.matmul %139, %148, %cst_65 {dimension_numbers = #tpu.dot_dimension_numbers<[2], [2], [1], [1], [0, 0, 0, 1, 1, 1], [0], [0]>} : vector<8x8x8xf32>, vector<8x8x8xf32>, vector<8x8x8xf32> -> vector<8x8x8xf32>
    "tpu.trace_stop"() : () -> ()
    %cst_66 = arith.constant dense<0xFF800000> : vector<8x8xf32>
    %159 = vector.multi_reduction <maximumf>, %158, %cst_66 [2] : vector<8x8x8xf32> to vector<8x8xf32>
    %160 = vector.shape_cast %159 : vector<8x8xf32> to vector<8x8x1xf32>
    %161 = vector.broadcast %160 : vector<8x8x1xf32> to vector<8x8x8xf32>
    %162 = arith.subf %158, %161 : vector<8x8x8xf32>
    %163 = math.exp %162 : vector<8x8x8xf32>
    %cst_67 = arith.constant dense<0.000000e+00> : vector<8x8xf32>
    %164 = vector.multi_reduction <add>, %163, %cst_67 [2] : vector<8x8x8xf32> to vector<8x8xf32>
    %165 = vector.shape_cast %164 : vector<8x8xf32> to vector<8x8x1xf32>
    %166 = vector.broadcast %165 : vector<8x8x1xf32> to vector<8x8x8xf32>
    %167 = arith.divf %163, %166 : vector<8x8x8xf32>
    "tpu.trace_start"() <{level = 10 : i32, message = "bqk,bkd->bqd"}> : () -> ()
    %cst_68 = arith.constant dense<0.000000e+00> : vector<8x8x8xf32>
    %168 = tpu.matmul %167, %157, %cst_68 {dimension_numbers = #tpu.dot_dimension_numbers<[2], [1], [1], [2], [0, 0, 0, 1, 1, 2], [0], [0]>} : vector<8x8x8xf32>, vector<8x8x8xf32>, vector<8x8x8xf32> -> vector<8x8x8xf32>
    "tpu.trace_stop"() : () -> ()
    %169 = vector.extract_strided_slice %168 {offsets = [0, 0, 0], sizes = [2, 8, 8], strides = [1, 1, 1]} : vector<8x8x8xf32> to vector<2x8x8xf32>
    %170 = vector.extract_strided_slice %168 {offsets = [2, 0, 0], sizes = [2, 8, 8], strides = [1, 1, 1]} : vector<8x8x8xf32> to vector<2x8x8xf32>
    %171 = vector.extract_strided_slice %168 {offsets = [4, 0, 0], sizes = [2, 8, 8], strides = [1, 1, 1]} : vector<8x8x8xf32> to vector<2x8x8xf32>
    %172 = vector.extract_strided_slice %168 {offsets = [6, 0, 0], sizes = [2, 8, 8], strides = [1, 1, 1]} : vector<8x8x8xf32> to vector<2x8x8xf32>
    %173 = tpu.concatenate %169, %170, %171, %172 in 2 : vector<2x8x8xf32>, vector<2x8x8xf32>, vector<2x8x8xf32>, vector<2x8x8xf32> -> vector<2x8x32xf32>
    %174 = vector.shape_cast %173 : vector<2x8x32xf32> to vector<16x32xf32>
    %cst_69 = arith.constant dense<0.000000e+00> : vector<16x32xf32>
    %175 = tpu.matmul %174, %98, %cst_69 {dimension_numbers = #tpu.dot_dimension_numbers<[1], [0], [0], [1], [0, 0, 1, 1], [], []>} : vector<16x32xf32>, vector<32x32xf32>, vector<16x32xf32> -> vector<16x32xf32>
    %176 = vector.broadcast %99 : vector<1x32xf32> to vector<16x32xf32>
    %177 = arith.addf %175, %176 : vector<16x32xf32>
    %178 = arith.addf %93, %177 : vector<16x32xf32>
    %cst_70 = arith.constant dense<0.000000e+00> : vector<16xf32>
    %179 = vector.multi_reduction <add>, %178, %cst_70 [1] : vector<16x32xf32> to vector<16xf32>
    %180 = vector.shape_cast %179 : vector<16xf32> to vector<16x1xf32>
    %cst_71 = arith.constant 3.200000e+01 : f32
    %181 = vector.broadcast %cst_71 : f32 to vector<16x1xf32>
    %182 = arith.divf %180, %181 : vector<16x1xf32>
    %183 = vector.broadcast %182 : vector<16x1xf32> to vector<16x32xf32>
    %184 = arith.subf %178, %183 : vector<16x32xf32>
    %185 = arith.mulf %184, %184 : vector<16x32xf32>
    %cst_72 = arith.constant dense<0.000000e+00> : vector<16xf32>
    %186 = vector.multi_reduction <add>, %185, %cst_72 [1] : vector<16x32xf32> to vector<16xf32>
    %187 = vector.shape_cast %186 : vector<16xf32> to vector<16x1xf32>
    %cst_73 = arith.constant 3.200000e+01 : f32
    %188 = vector.broadcast %cst_73 : f32 to vector<16x1xf32>
    %189 = arith.divf %187, %188 : vector<16x1xf32>
    %190 = vector.broadcast %182 : vector<16x1xf32> to vector<16x32xf32>
    %191 = arith.subf %178, %190 : vector<16x32xf32>
    %cst_74 = arith.constant 9.99999974E-6 : f32
    %192 = vector.broadcast %cst_74 : f32 to vector<16x1xf32>
    %193 = arith.addf %189, %192 : vector<16x1xf32>
    %194 = math.rsqrt %193 : vector<16x1xf32>
    %195 = vector.broadcast %194 : vector<16x1xf32> to vector<16x32xf32>
    %196 = arith.mulf %191, %195 : vector<16x32xf32>
    %197 = vector.broadcast %100 : vector<1x32xf32> to vector<16x32xf32>
    %198 = arith.mulf %196, %197 : vector<16x32xf32>
    %199 = vector.broadcast %101 : vector<1x32xf32> to vector<16x32xf32>
    %200 = arith.addf %198, %199 : vector<16x32xf32>
    %cst_75 = arith.constant dense<0.000000e+00> : vector<16x64xf32>
    %201 = tpu.matmul %200, %102, %cst_75 {dimension_numbers = #tpu.dot_dimension_numbers<[1], [0], [0], [1], [0, 0, 1, 1], [], []>} : vector<16x32xf32>, vector<32x64xf32>, vector<16x64xf32> -> vector<16x64xf32>
    %202 = vector.broadcast %103 : vector<1x64xf32> to vector<16x64xf32>
    %203 = arith.addf %201, %202 : vector<16x64xf32>
    %cst_76 = arith.constant 0.000000e+00 : f32
    %204 = vector.broadcast %cst_76 : f32 to vector<16x64xf32>
    %205 = arith.maximumf %203, %204 : vector<16x64xf32>
    %cst_77 = arith.constant dense<0.000000e+00> : vector<16x32xf32>
    %206 = tpu.matmul %205, %104, %cst_77 {dimension_numbers = #tpu.dot_dimension_numbers<[1], [0], [0], [1], [0, 0, 1, 1], [], []>} : vector<16x64xf32>, vector<64x32xf32>, vector<16x32xf32> -> vector<16x32xf32>
    %207 = vector.broadcast %105 : vector<1x32xf32> to vector<16x32xf32>
    %208 = arith.addf %206, %207 : vector<16x32xf32>
    %209 = arith.addf %178, %208 : vector<16x32xf32>
    %210 = vector.shape_cast %209 : vector<16x32xf32> to vector<2x8x32xf32>
    %c0_78 = arith.constant 0 : index
    %c0_79 = arith.constant 0 : index
    %c0_80 = arith.constant 0 : index
    %211 = vector.load %arg26[%c0_78, %c0_79, %c0_80] : memref<2x8x32xf32, #tpu.memory_space<vmem>>, vector<2x8x32xf32>
    tpu.vector_store %arg26[%c0_78, %c0_79, %c0_80], %210 {strides = array<i32>} : memref<2x8x32xf32, #tpu.memory_space<vmem>>, vector<2x8x32xf32>,
    return
  }
  func.func @transform_0(%arg0: i32) -> (i32, i32, i32) {
    %c0_i32 = arith.constant 0 : i32
    %c0_i32_0 = arith.constant 0 : i32
    %c0_i32_1 = arith.constant 0 : i32
    return %arg0, %c0_i32, %c0_i32_0 : i32, i32, i32
  }
  func.func @transform_1(%arg0: i32) -> (i32, i32) {
    %c0_i32 = arith.constant 0 : i32
    %c0_i32_0 = arith.constant 0 : i32
    %c0_i32_1 = arith.constant 0 : i32
    return %c0_i32, %c0_i32_0 : i32, i32
  }
  func.func @transform_2(%arg0: i32) -> (i32, i32) {
    %c0_i32 = arith.constant 0 : i32
    %c0_i32_0 = arith.constant 0 : i32
    %c0_i32_1 = arith.constant 0 : i32
    return %c0_i32, %c0_i32_0 : i32, i32
  }
  func.func @transform_3(%arg0: i32) -> (i32, i32) {
    %c0_i32 = arith.constant 0 : i32
    %c0_i32_0 = arith.constant 0 : i32
    %c0_i32_1 = arith.constant 0 : i32
    return %c0_i32, %c0_i32_0 : i32, i32
  }
  func.func @transform_4(%arg0: i32) -> (i32, i32) {
    %c0_i32 = arith.constant 0 : i32
    %c0_i32_0 = arith.constant 0 : i32
    %c0_i32_1 = arith.constant 0 : i32
    return %c0_i32, %c0_i32_0 : i32, i32
  }
  func.func @transform_5(%arg0: i32) -> (i32, i32) {
    %c0_i32 = arith.constant 0 : i32
    %c0_i32_0 = arith.constant 0 : i32
    %c0_i32_1 = arith.constant 0 : i32
    return %c0_i32, %c0_i32_0 : i32, i32
  }
  func.func @transform_6(%arg0: i32) -> (i32, i32) {
    %c0_i32 = arith.constant 0 : i32
    %c0_i32_0 = arith.constant 0 : i32
    %c0_i32_1 = arith.constant 0 : i32
    return %c0_i32, %c0_i32_0 : i32, i32
  }
  func.func @transform_7(%arg0: i32) -> (i32, i32) {
    %c0_i32 = arith.constant 0 : i32
    %c0_i32_0 = arith.constant 0 : i32
    %c0_i32_1 = arith.constant 0 : i32
    return %c0_i32, %c0_i32_0 : i32, i32
  }
  func.func @transform_8(%arg0: i32) -> (i32, i32) {
    %c0_i32 = arith.constant 0 : i32
    %c0_i32_0 = arith.constant 0 : i32
    %c0_i32_1 = arith.constant 0 : i32
    return %c0_i32, %c0_i32_0 : i32, i32
  }
  func.func @transform_9(%arg0: i32) -> (i32, i32) {
    %c0_i32 = arith.constant 0 : i32
    %c0_i32_0 = arith.constant 0 : i32
    %c0_i32_1 = arith.constant 0 : i32
    return %c0_i32, %c0_i32_0 : i32, i32
  }
  func.func @transform_10(%arg0: i32) -> (i32, i32) {
    %c0_i32 = arith.constant 0 : i32
    %c0_i32_0 = arith.constant 0 : i32
    %c0_i32_1 = arith.constant 0 : i32
    return %c0_i32, %c0_i32_0 : i32, i32
  }
  func.func @transform_11(%arg0: i32) -> (i32, i32) {
    %c0_i32 = arith.constant 0 : i32
    %c0_i32_0 = arith.constant 0 : i32
    %c0_i32_1 = arith.constant 0 : i32
    return %c0_i32, %c0_i32_0 : i32, i32
  }
  func.func @transform_12(%arg0: i32) -> (i32, i32) {
    %c0_i32 = arith.constant 0 : i32
    %c0_i32_0 = arith.constant 0 : i32
    %c0_i32_1 = arith.constant 0 : i32
    return %c0_i32, %c0_i32_0 : i32, i32
  }
  func.func @transform_13(%arg0: i32) -> (i32, i32) {
    %c0_i32 = arith.constant 0 : i32
    %c0_i32_0 = arith.constant 0 : i32
    %c0_i32_1 = arith.constant 0 : i32
    return %c0_i32, %c0_i32_0 : i32, i32
  }
  func.func @transform_14(%arg0: i32) -> (i32, i32) {
    %c0_i32 = arith.constant 0 : i32
    %c0_i32_0 = arith.constant 0 : i32
    %c0_i32_1 = arith.constant 0 : i32
    return %c0_i32, %c0_i32_0 : i32, i32
  }
  func.func @transform_15(%arg0: i32) -> (i32, i32) {
    %c0_i32 = arith.constant 0 : i32
    %c0_i32_0 = arith.constant 0 : i32
    %c0_i32_1 = arith.constant 0 : i32
    return %c0_i32, %c0_i32_0 : i32, i32
  }
  func.func @transform_16(%arg0: i32) -> (i32, i32) {
    %c0_i32 = arith.constant 0 : i32
    %c0_i32_0 = arith.constant 0 : i32
    %c0_i32_1 = arith.constant 0 : i32
    return %c0_i32, %c0_i32_0 : i32, i32
  }
  func.func @transform_17(%arg0: i32) -> (i32, i32) {
    %c0_i32 = arith.constant 0 : i32
    %c0_i32_0 = arith.constant 0 : i32
    %c0_i32_1 = arith.constant 0 : i32
    return %c0_i32, %c0_i32_0 : i32, i32
  }
  func.func @transform_18(%arg0: i32) -> (i32, i32) {
    %c0_i32 = arith.constant 0 : i32
    %c0_i32_0 = arith.constant 0 : i32
    %c0_i32_1 = arith.constant 0 : i32
    return %c0_i32, %c0_i32_0 : i32, i32
  }
  func.func @transform_19(%arg0: i32) -> (i32, i32) {
    %c0_i32 = arith.constant 0 : i32
    %c0_i32_0 = arith.constant 0 : i32
    %c0_i32_1 = arith.constant 0 : i32
    return %c0_i32, %c0_i32_0 : i32, i32
  }
  func.func @transform_20(%arg0: i32) -> (i32, i32) {
    %c0_i32 = arith.constant 0 : i32
    %c0_i32_0 = arith.constant 0 : i32
    %c0_i32_1 = arith.constant 0 : i32
    return %c0_i32, %c0_i32_0 : i32, i32
  }
  func.func @transform_21(%arg0: i32) -> (i32, i32) {
    %c0_i32 = arith.constant 0 : i32
    %c0_i32_0 = arith.constant 0 : i32
    %c0_i32_1 = arith.constant 0 : i32
    return %c0_i32, %c0_i32_0 : i32, i32
  }
  func.func @transform_22(%arg0: i32) -> (i32, i32) {
    %c0_i32 = arith.constant 0 : i32
    %c0_i32_0 = arith.constant 0 : i32
    %c0_i32_1 = arith.constant 0 : i32
    return %c0_i32, %c0_i32_0 : i32, i32
  }
  func.func @transform_23(%arg0: i32) -> (i32, i32) {
    %c0_i32 = arith.constant 0 : i32
    %c0_i32_0 = arith.constant 0 : i32
    %c0_i32_1 = arith.constant 0 : i32
    return %c0_i32, %c0_i32_0 : i32, i32
  }
  func.func @transform_24(%arg0: i32) -> (i32, i32) {
    %c0_i32 = arith.constant 0 : i32
    %c0_i32_0 = arith.constant 0 : i32
    %c0_i32_1 = arith.constant 0 : i32
    return %c0_i32, %c0_i32_0 : i32, i32
  }
  func.func @transform_25(%arg0: i32) -> (i32, i32, i32) {
    %c0_i32 = arith.constant 0 : i32
    %c0_i32_0 = arith.constant 0 : i32
    %c0_i32_1 = arith.constant 0 : i32
    return %arg0, %c0_i32, %c0_i32_0 : i32, i32, i32
  }
}

</mosaic_0001>

<llo_original>
// kernel: tpu_custom_call.1
$region0: #{tpu_custom_call.1}
  #allocation0 [shape = 'u32[]', space=smem, size = 0x4, offset = 0x4, fixed_abs, tag = 'smem constant byte address 0x4 - core index']
  #allocation1 [shape = 'u32[72,128]{1,0:T(1,128)}', space=vmem, size = 0x9000, scoped, tag = 'internal scratch']
  %s0 = inlined_call_operand.hbm [shape: f32[2,8,32], index: 0, kind: input, shape index: {}]
  %s1 = inlined_call_operand.hbm [shape: f32[1,32], index: 1, kind: input, shape index: {}]
  %s2 = inlined_call_operand.hbm [shape: f32[1,32], index: 2, kind: input, shape index: {}]
  %s3 = inlined_call_operand.vmem [shape: f32[32,96], index: 3, kind: input, shape index: {}]
  %s4 = inlined_call_operand.vmem [shape: f32[1,96], index: 4, kind: input, shape index: {}]
  %s5 = inlined_call_operand.vmem [shape: f32[32,32], index: 5, kind: input, shape index: {}]
  %s6 = inlined_call_operand.vmem [shape: f32[1,32], index: 6, kind: input, shape index: {}]
  %s7 = inlined_call_operand.vmem [shape: f32[1,32], index: 7, kind: input, shape index: {}]
  %s8 = inlined_call_operand.vmem [shape: f32[1,32], index: 8, kind: input, shape index: {}]
  %s9 = inlined_call_operand.vmem [shape: f32[32,64], index: 9, kind: input, shape index: {}]
  %s10 = inlined_call_operand.vmem [shape: f32[1,64], index: 10, kind: input, shape index: {}]
  %s11 = inlined_call_operand.vmem [shape: f32[64,32], index: 11, kind: input, shape index: {}]
  %s12 = inlined_call_operand.vmem [shape: f32[1,32], index: 12, kind: input, shape index: {}]
  %s13 = inlined_call_operand.vmem [shape: f32[1,32], index: 13, kind: input, shape index: {}]
  %s14 = inlined_call_operand.vmem [shape: f32[1,32], index: 14, kind: input, shape index: {}]
  %s15 = inlined_call_operand.vmem [shape: f32[32,96], index: 15, kind: input, shape index: {}]
  %s16 = inlined_call_operand.vmem [shape: f32[1,96], index: 16, kind: input, shape index: {}]
  %s17 = inlined_call_operand.vmem [shape: f32[32,32], index: 17, kind: input, shape index: {}]
  %s18 = inlined_call_operand.vmem [shape: f32[1,32], index: 18, kind: input, shape index: {}]
  %s19 = inlined_call_operand.vmem [shape: f32[1,32], index: 19, kind: input, shape index: {}]
  %s20 = inlined_call_operand.vmem [shape: f32[1,32], index: 20, kind: input, shape index: {}]
  %s21 = inlined_call_operand.hbm [shape: f32[32,64], index: 21, kind: input, shape index: {}]
  %s22 = inlined_call_operand.vmem [shape: f32[1,64], index: 22, kind: input, shape index: {}]
  %s23 = inlined_call_operand.vmem [shape: f32[64,32], index: 23, kind: input, shape index: {}]
  %s24 = inlined_call_operand.vmem [shape: f32[1,32], index: 24, kind: input, shape index: {}]
  %s25 = inlined_call_operand.hbm [shape: f32[2,8,32], index: 25, kind: output, shape index: {}]
  %s26 = sld [smem:[#allocation0]]
  $region126: #{tpu_custom_call.1} parent=0
    _
  %s28 = ssub.s32 1, %s26
  %s29 = scalar_select 0, %s28, %s26
  $region1: #{tpu_custom_call.1} parent=0
    #allocation2 [shape = 'u8[8192]{0}', space=vmem, size = 0x2000, scoped, tag = 'input window, operand 0, single buffered']
    #allocation3 [shape = 's32[1]{0}', space=sflag, size = 0x4, scoped, tag = 'scoped memory for tpu_custom_call.1']
    #allocation4 [shape = 's32[1]{0}', space=sflag, size = 0x4, scoped, tag = 'scoped memory for tpu_custom_call.1']
    #allocation5 [shape = 'u8[512]{0}', space=vmem, size = 0x400, scoped, tag = 'input window, operand 1, single buffered']
    #allocation6 [shape = 's32[1]{0}', space=sflag, size = 0x4, scoped, tag = 'scoped memory for tpu_custom_call.1']
    #allocation7 [shape = 'u8[512]{0}', space=vmem, size = 0x400, scoped, tag = 'input window, operand 2, single buffered']
    #allocation8 [shape = 'u8[16384]{0}', space=vmem, size = 0x4000, scoped, tag = 'input window, operand 21, single buffered']
    #allocation9 [shape = 's32[1]{0}', space=sflag, size = 0x4, scoped, tag = 'scoped memory for tpu_custom_call.1']
    #allocation10 [shape = 'u8[8192]{0}', space=vmem, size = 0x2000, scoped, tag = 'output window, operand 0, single buffered']
    %30 = vsyncpa [#allocation3], 0
    %31 = vsyncpa [#allocation6], 0
    %32 = vsyncpa [#allocation9], 0
    %33 = vsyncpa [#allocation4], 0
    // Predicated region
    $region2: #{tpu_custom_call.1} parent=1 // pred_check
      _
    $region3: #{tpu_custom_call.1} parent=1 // pred_check_branch
      %35 = sbr.rel (0) target = $region5
    $region4: #{tpu_custom_call.1} parent=1 // pred_region
      %37 = vsyncadd [#allocation3], 0
      %s38 = sshll.u32 %s0, 4
      %s39 = int_to_ptr.hbm [resolvable:$true] %s38
      %s40 = sshll.u32 [#allocation2], 4
      %s41 = int_to_ptr.vmem [resolvable:$true] %s40
      %46 = dma.hbm_to_vmem [thread:$0]  %s39, 256, %s41, [#allocation3], 128, 128, 8
    $region5: #{tpu_custom_call.1} parent=1 // pred_fallthru
      _
    // Predicated region
    $region6: #{tpu_custom_call.1} parent=1 // pred_check
      _
    $region7: #{tpu_custom_call.1} parent=1 // pred_check_branch
      %48 = sbr.rel (0) target = $region9
    $region8: #{tpu_custom_call.1} parent=1 // pred_region
      %50 = vsyncadd [#allocation6], 0
      %s52 = sshll.u32 %s1, 4
      %s53 = int_to_ptr.hbm [resolvable:$true] %s52
      %s54 = sshll.u32 [#allocation5], 4
      %s55 = int_to_ptr.vmem [resolvable:$true] %s54
      %57 = dma.hbm_to_vmem [thread:$0]  %s53, 16, %s55, [#allocation6]
    $region9: #{tpu_custom_call.1} parent=1 // pred_fallthru
      _
    // Predicated region
    $region10: #{tpu_custom_call.1} parent=1 // pred_check
      _
    $region11: #{tpu_custom_call.1} parent=1 // pred_check_branch
      %59 = sbr.rel (0) target = $region13
    $region12: #{tpu_custom_call.1} parent=1 // pred_region
      %61 = vsyncadd [#allocation6], 0
      %s63 = sshll.u32 %s2, 4
      %s64 = int_to_ptr.hbm [resolvable:$true] %s63
      %s65 = sshll.u32 [#allocation7], 4
      %s66 = int_to_ptr.vmem [resolvable:$true] %s65
      %68 = dma.hbm_to_vmem [thread:$0]  %s64, 16, %s66, [#allocation6]
    $region13: #{tpu_custom_call.1} parent=1 // pred_fallthru
      _
    // Predicated region
    $region14: #{tpu_custom_call.1} parent=1 // pred_check
      _
    $region15: #{tpu_custom_call.1} parent=1 // pred_check_branch
      %70 = sbr.rel (0) target = $region17
    $region16: #{tpu_custom_call.1} parent=1 // pred_region
      _
    $region17: #{tpu_custom_call.1} parent=1 // pred_fallthru
      _
    // Predicated region
    $region18: #{tpu_custom_call.1} parent=1 // pred_check
      _
    $region19: #{tpu_custom_call.1} parent=1 // pred_check_branch
      %72 = sbr.rel (0) target = $region21
    $region20: #{tpu_custom_call.1} parent=1 // pred_region
      _
    $region21: #{tpu_custom_call.1} parent=1 // pred_fallthru
      _
    // Predicated region
    $region22: #{tpu_custom_call.1} parent=1 // pred_check
      _
    $region23: #{tpu_custom_call.1} parent=1 // pred_check_branch
      %74 = sbr.rel (0) target = $region25
    $region24: #{tpu_custom_call.1} parent=1 // pred_region
      _
    $region25: #{tpu_custom_call.1} parent=1 // pred_fallthru
      _
    // Predicated region
    $region26: #{tpu_custom_call.1} parent=1 // pred_check
      _
    $region27: #{tpu_custom_call.1} parent=1 // pred_check_branch
      %76 = sbr.rel (0) target = $region29
    $region28: #{tpu_custom_call.1} parent=1 // pred_region
      _
    $region29: #{tpu_custom_call.1} parent=1 // pred_fallthru
      _
    // Predicated region
    $region30: #{tpu_custom_call.1} parent=1 // pred_check
      _
    $region31: #{tpu_custom_call.1} parent=1 // pred_check_branch
      %78 = sbr.rel (0) target = $region33
    $region32: #{tpu_custom_call.1} parent=1 // pred_region
      _
    $region33: #{tpu_custom_call.1} parent=1 // pred_fallthru
      _
    // Predicated region
    $region34: #{tpu_custom_call.1} parent=1 // pred_check
      _
    $region35: #{tpu_custom_call.1} parent=1 // pred_check_branch
      %80 = sbr.rel (0) target = $region37
    $region36: #{tpu_custom_call.1} parent=1 // pred_region
      _
    $region37: #{tpu_custom_call.1} parent=1 // pred_fallthru
      _
    // Predicated region
    $region38: #{tpu_custom_call.1} parent=1 // pred_check
      _
    $region39: #{tpu_custom_call.1} parent=1 // pred_check_branch
      %82 = sbr.rel (0) target = $region41
    $region40: #{tpu_custom_call.1} parent=1 // pred_region
      _
    $region41: #{tpu_custom_call.1} parent=1 // pred_fallthru
      _
    // Predicated region
    $region42: #{tpu_custom_call.1} parent=1 // pred_check
      _
    $region43: #{tpu_custom_call.1} parent=1 // pred_check_branch
      %84 = sbr.rel (0) target = $region45
    $region44: #{tpu_custom_call.1} parent=1 // pred_region
      _
    $region45: #{tpu_custom_call.1} parent=1 // pred_fallthru
      _
    // Predicated region
    $region46: #{tpu_custom_call.1} parent=1 // pred_check
      _
    $region47: #{tpu_custom_call.1} parent=1 // pred_check_branch
      %86 = sbr.rel (0) target = $region49
    $region48: #{tpu_custom_call.1} parent=1 // pred_region
      _
    $region49: #{tpu_custom_call.1} parent=1 // pred_fallthru
      _
    // Predicated region
    $region50: #{tpu_custom_call.1} parent=1 // pred_check
      _
    $region51: #{tpu_custom_call.1} parent=1 // pred_check_branch
      %88 = sbr.rel (0) target = $region53
    $region52: #{tpu_custom_call.1} parent=1 // pred_region
      _
    $region53: #{tpu_custom_call.1} parent=1 // pred_fallthru
      _
    // Predicated region
    $region54: #{tpu_custom_call.1} parent=1 // pred_check
      _
    $region55: #{tpu_custom_call.1} parent=1 // pred_check_branch
      %90 = sbr.rel (0) target = $region57
    $region56: #{tpu_custom_call.1} parent=1 // pred_region
      _
    $region57: #{tpu_custom_call.1} parent=1 // pred_fallthru
      _
    // Predicated region
    $region58: #{tpu_custom_call.1} parent=1 // pred_check
      _
    $region59: #{tpu_custom_call.1} parent=1 // pred_check_branch
      %92 = sbr.rel (0) target = $region61
    $region60: #{tpu_custom_call.1} parent=1 // pred_region
      _
    $region61: #{tpu_custom_call.1} parent=1 // pred_fallthru
      _
    // Predicated region
    $region62: #{tpu_custom_call.1} parent=1 // pred_check
      _
    $region63: #{tpu_custom_call.1} parent=1 // pred_check_branch
      %94 = sbr.rel (0) target = $region65
    $region64: #{tpu_custom_call.1} parent=1 // pred_region
      _
    $region65: #{tpu_custom_call.1} parent=1 // pred_fallthru
      _
    // Predicated region
    $region66: #{tpu_custom_call.1} parent=1 // pred_check
      _
    $region67: #{tpu_custom_call.1} parent=1 // pred_check_branch
      %96 = sbr.rel (0) target = $region69
    $region68: #{tpu_custom_call.1} parent=1 // pred_region
      _
    $region69: #{tpu_custom_call.1} parent=1 // pred_fallthru
      _
    // Predicated region
    $region70: #{tpu_custom_call.1} parent=1 // pred_check
      _
    $region71: #{tpu_custom_call.1} parent=1 // pred_check_branch
      %98 = sbr.rel (0) target = $region73
    $region72: #{tpu_custom_call.1} parent=1 // pred_region
      _
    $region73: #{tpu_custom_call.1} parent=1 // pred_fallthru
      _
    // Predicated region
    $region74: #{tpu_custom_call.1} parent=1 // pred_check
      _
    $region75: #{tpu_custom_call.1} parent=1 // pred_check_branch
      %100 = sbr.rel (0) target = $region77
    $region76: #{tpu_custom_call.1} parent=1 // pred_region
      _
    $region77: #{tpu_custom_call.1} parent=1 // pred_fallthru
      _
    // Predicated region
    $region78: #{tpu_custom_call.1} parent=1 // pred_check
      _
    $region79: #{tpu_custom_call.1} parent=1 // pred_check_branch
      %102 = sbr.rel (0) target = $region81
    $region80: #{tpu_custom_call.1} parent=1 // pred_region
      _
    $region81: #{tpu_custom_call.1} parent=1 // pred_fallthru
      _
    // Predicated region
    $region82: #{tpu_custom_call.1} parent=1 // pred_check
      _
    $region83: #{tpu_custom_call.1} parent=1 // pred_check_branch
      %104 = sbr.rel (0) target = $region85
    $region84: #{tpu_custom_call.1} parent=1 // pred_region
      _
    $region85: #{tpu_custom_call.1} parent=1 // pred_fallthru
      _
    // Predicated region
    $region86: #{tpu_custom_call.1} parent=1 // pred_check
      _
    $region87: #{tpu_custom_call.1} parent=1 // pred_check_branch
      %106 = sbr.rel (0) target = $region89
    $region88: #{tpu_custom_call.1} parent=1 // pred_region
      %108 = vsyncadd [#allocation9], 0
      %s109 = sshll.u32 %s21, 4
      %s110 = int_to_ptr.hbm [resolvable:$true] %s109
      %s111 = sshll.u32 [#allocation8], 4
      %s112 = int_to_ptr.vmem [resolvable:$true] %s111
      %117 = dma.hbm_to_vmem [thread:$0]  %s110, 512, %s112, [#allocation9], 128, 128, 8
    $region89: #{tpu_custom_call.1} parent=1 // pred_fallthru
      _
    // Predicated region
    $region90: #{tpu_custom_call.1} parent=1 // pred_check
      _
    $region91: #{tpu_custom_call.1} parent=1 // pred_check_branch
      %119 = sbr.rel (0) target = $region93
    $region92: #{tpu_custom_call.1} parent=1 // pred_region
      _
    $region93: #{tpu_custom_call.1} parent=1 // pred_fallthru
      _
    // Predicated region
    $region94: #{tpu_custom_call.1} parent=1 // pred_check
      _
    $region95: #{tpu_custom_call.1} parent=1 // pred_check_branch
      %121 = sbr.rel (0) target = $region97
    $region96: #{tpu_custom_call.1} parent=1 // pred_region
      _
    $region97: #{tpu_custom_call.1} parent=1 // pred_fallthru
      _
    // Predicated region
    $region98: #{tpu_custom_call.1} parent=1 // pred_check
      _
    $region99: #{tpu_custom_call.1} parent=1 // pred_check_branch
      %123 = sbr.rel (0) target = $region101
    $region100: #{tpu_custom_call.1} parent=1 // pred_region
      _
    $region101: #{tpu_custom_call.1} parent=1 // pred_fallthru
      _
    // Predicated region
    $region102: #{tpu_custom_call.1} parent=1 // pred_check
      _
    $region103: #{tpu_custom_call.1} parent=1 // pred_check_branch
      %125 = sbr.rel (0) target = $region105
    $region104: #{tpu_custom_call.1} parent=1 // pred_region
      %127 = dma.done [#allocation3], 256
    $region105: #{tpu_custom_call.1} parent=1 // pred_fallthru
      _
    // Predicated region
    $region106: #{tpu_custom_call.1} parent=1 // pred_check
      _
    $region107: #{tpu_custom_call.1} parent=1 // pred_check_branch
      %129 = sbr.rel (0) target = $region109
    $region108: #{tpu_custom_call.1} parent=1 // pred_region
      %131 = dma.done [#allocation6], 16
    $region109: #{tpu_custom_call.1} parent=1 // pred_fallthru
      _
    // Predicated region
    $region110: #{tpu_custom_call.1} parent=1 // pred_check
      _
    $region111: #{tpu_custom_call.1} parent=1 // pred_check_branch
      %133 = sbr.rel (0) target = $region113
    $region112: #{tpu_custom_call.1} parent=1 // pred_region
      %135 = dma.done [#allocation6], 16
    $region113: #{tpu_custom_call.1} parent=1 // pred_fallthru
      _
    // Predicated region
    $region114: #{tpu_custom_call.1} parent=1 // pred_check
      _
    $region115: #{tpu_custom_call.1} parent=1 // pred_check_branch
      %137 = sbr.rel (0) target = $region117
    $region116: #{tpu_custom_call.1} parent=1 // pred_region
      %139 = dma.done [#allocation9], 512
    $region117: #{tpu_custom_call.1} parent=1 // pred_fallthru
      _
    %v140 = vld [vmem:[#allocation2] sm:$0xff]
    %v141 = vld [vmem:[#allocation2 + $0x8] sm:$0xff]
    %v142 = vld [vmem:[%s3] sm:$0xff]
    %v143 = vld [vmem:[%s3 + $0x8] sm:$0xff]
    %v144 = vld [vmem:[%s3 + $0x10] sm:$0xff]
    %v145 = vld [vmem:[%s3 + $0x18] sm:$0xff]
    %v146 = vld [vmem:[%s4] sm:$0x1]
    %v147 = vld [vmem:[%s5] sm:$0xff]
    %v148 = vld [vmem:[%s5 + $0x8] sm:$0xff]
    %v149 = vld [vmem:[%s5 + $0x10] sm:$0xff]
    %v150 = vld [vmem:[%s5 + $0x18] sm:$0xff]
    %v151 = vld [vmem:[%s6] sm:$0x1]
    %v152 = vld [vmem:[%s7] sm:$0x1]
    %v153 = vld [vmem:[%s8] sm:$0x1]
    %v154 = vld [vmem:[%s9] sm:$0xff]
    %v155 = vld [vmem:[%s9 + $0x8] sm:$0xff]
    %v156 = vld [vmem:[%s9 + $0x10] sm:$0xff]
    %v157 = vld [vmem:[%s9 + $0x18] sm:$0xff]
    %v158 = vld [vmem:[%s10] sm:$0x1]
    %v159 = vld [vmem:[%s11] sm:$0xff]
    %v160 = vld [vmem:[%s11 + $0x8] sm:$0xff]
    %v161 = vld [vmem:[%s11 + $0x10] sm:$0xff]
    %v162 = vld [vmem:[%s11 + $0x18] sm:$0xff]
    %v163 = vld [vmem:[%s11 + $0x20] sm:$0xff]
    %v164 = vld [vmem:[%s11 + $0x28] sm:$0xff]
    %v165 = vld [vmem:[%s11 + $0x30] sm:$0xff]
    %v166 = vld [vmem:[%s11 + $0x38] sm:$0xff]
    %v167 = vld [vmem:[%s12] sm:$0x1]
    %v169 = vperm.slane %v146, 0
    %vm171 = vcmask 261120
    %v173 = vsel %vm171, %v140, 0
    %v176 = vsel %vm171, %v141, 0
    %178 = vmatpush.msra.mxu0 0.0
    %179 = vmatpush.msra.mxu0 0.0
    %180 = vmatpush.msra.mxu0 0.0
    %181 = vmatpush.msra.mxu0 0.0
    %182 = vmatpush.msra.mxu0 0.0
    %183 = vmatpush.msra.mxu0 0.0
    %184 = vmatpush.msra.mxu0 0.0
    %185 = vmatpush.msra.mxu0 0.0
    %186 = vmatpush.msra.mxu0 0.0
    %187 = vmatpush.msra.mxu0 0.0
    %188 = vmatpush.msra.mxu0 0.0
    %189 = vmatpush.msra.mxu0 0.0
    %190 = vmatpush.msra.mxu0 %v145
    %191 = vmatpush.msra.mxu0 %v144
    %192 = vmatpush.msra.mxu0 %v143
    %193 = vmatpush.msra.mxu0 %v142
    %194 = vmatmul.f32.gmra.mxu0 %v173
    %v195 = vpop.f32.mrf.mxu0
    %v196 = vadd.f32 %v169, %v195
    %197 = vmatmul.f32.gmra.mxu0 %v176
    %v198 = vpop.f32.mrf.mxu0
    %v199 = vadd.f32 %v169, %v198
    %200 = vdwg.mxu0
    %203 = vrot.lane.b32.xlu0 %v196, 120
    %v204 = vpop.permute.xlu0 %203
    %205 = vrot.lane.b32.xlu0 %v199, 120
    %v206 = vpop.permute.xlu0 %205
    %207 = vrot.lane.b32.xlu0 %v196, 112
    %v208 = vpop.permute.xlu0 %207
    %209 = vrot.lane.b32.xlu0 %v199, 112
    %v210 = vpop.permute.xlu0 %209
    %211 = vrot.lane.b32.xlu0 %v196, 104
    %v212 = vpop.permute.xlu0 %211
    %213 = vrot.lane.b32.xlu0 %v199, 104
    %v214 = vpop.permute.xlu0 %213
    %215 = vrot.lane.b32.xlu0 %v196, 96
    %v216 = vpop.permute.xlu0 %215
    %vm217 = vcmask 64512
    %v218 = vsel %vm217, %v196, 0
    %v220 = vsel %vm217, %v216, 0
    %222 = vmatpush.xpose.msra.mxu0 0.0
    %223 = vmatpush.xpose.msra.mxu0 0.0
    %224 = vmatpush.xpose.msra.mxu0 0.0
    %225 = vmatpush.xpose.msra.mxu0 0.0
    %226 = vmatpush.xpose.msra.mxu0 0.0
    %227 = vmatpush.xpose.msra.mxu0 0.0
    %228 = vmatpush.xpose.msra.mxu0 0.0
    %229 = vmatpush.xpose.msra.mxu0 0.0
    %230 = vmatpush.xpose.msra.mxu0 0.0
    %231 = vmatpush.xpose.msra.mxu0 0.0
    %232 = vmatpush.xpose.msra.mxu0 0.0
    %233 = vmatpush.xpose.msra.mxu0 0.0
    %234 = vmatpush.xpose.msra.mxu0 0.0
    %235 = vmatpush.xpose.msra.mxu0 0.0
    %236 = vmatpush.xpose.msra.mxu0 0.0
    %237 = vmatpush.xpose.msra.mxu0 %v220
    %238 = vmatmul.f32.gmra.mxu0 %v218
    %v239 = vpop.f32.mrf.mxu0
    %v240 = vadd.f32 0.0, %v239
    %241 = vdwg.mxu0
    %242 = vrot.lane.b32.xlu0 %v199, 96
    %v243 = vpop.permute.xlu0 %242
    %v244 = vsel %vm217, %v199, 0
    %v246 = vsel %vm217, %v243, 0
    %248 = vmatpush.xpose.msra.mxu0 0.0
    %249 = vmatpush.xpose.msra.mxu0 0.0
    %250 = vmatpush.xpose.msra.mxu0 0.0
    %251 = vmatpush.xpose.msra.mxu0 0.0
    %252 = vmatpush.xpose.msra.mxu0 0.0
    %253 = vmatpush.xpose.msra.mxu0 0.0
    %254 = vmatpush.xpose.msra.mxu0 0.0
    %255 = vmatpush.xpose.msra.mxu0 0.0
    %256 = vmatpush.xpose.msra.mxu0 0.0
    %257 = vmatpush.xpose.msra.mxu0 0.0
    %258 = vmatpush.xpose.msra.mxu0 0.0
    %259 = vmatpush.xpose.msra.mxu0 0.0
    %260 = vmatpush.xpose.msra.mxu0 0.0
    %261 = vmatpush.xpose.msra.mxu0 0.0
    %262 = vmatpush.xpose.msra.mxu0 0.0
    %263 = vmatpush.xpose.msra.mxu0 %v246
    %264 = vmatmul.f32.gmra.mxu0 %v244
    %v265 = vpop.f32.mrf.mxu0
    %v266 = vadd.f32 0.0, %v265
    %267 = vdwg.mxu0
    %268 = vrot.lane.b32.xlu0 %v204, 96
    %v269 = vpop.permute.xlu0 %268
    %v270 = vsel %vm217, %v204, 0
    %v272 = vsel %vm217, %v269, 0
    %274 = vmatpush.xpose.msra.mxu0 0.0
    %275 = vmatpush.xpose.msra.mxu0 0.0
    %276 = vmatpush.xpose.msra.mxu0 0.0
    %277 = vmatpush.xpose.msra.mxu0 0.0
    %278 = vmatpush.xpose.msra.mxu0 0.0
    %279 = vmatpush.xpose.msra.mxu0 0.0
    %280 = vmatpush.xpose.msra.mxu0 0.0
    %281 = vmatpush.xpose.msra.mxu0 0.0
    %282 = vmatpush.xpose.msra.mxu0 0.0
    %283 = vmatpush.xpose.msra.mxu0 0.0
    %284 = vmatpush.xpose.msra.mxu0 0.0
    %285 = vmatpush.xpose.msra.mxu0 0.0
    %286 = vmatpush.xpose.msra.mxu0 0.0
    %287 = vmatpush.xpose.msra.mxu0 0.0
    %288 = vmatpush.xpose.msra.mxu0 0.0
    %289 = vmatpush.xpose.msra.mxu0 %v272
    %290 = vmatmul.f32.gmra.mxu0 %v270
    %v291 = vpop.f32.mrf.mxu0
    %v292 = vadd.f32 0.0, %v291
    %293 = vdwg.mxu0
    %294 = vrot.lane.b32.xlu0 %v206, 96
    %v295 = vpop.permute.xlu0 %294
    %v296 = vsel %vm217, %v206, 0
    %v298 = vsel %vm217, %v295, 0
    %300 = vmatpush.xpose.msra.mxu0 0.0
    %301 = vmatpush.xpose.msra.mxu0 0.0
    %302 = vmatpush.xpose.msra.mxu0 0.0
    %303 = vmatpush.xpose.msra.mxu0 0.0
    %304 = vmatpush.xpose.msra.mxu0 0.0
    %305 = vmatpush.xpose.msra.mxu0 0.0
    %306 = vmatpush.xpose.msra.mxu0 0.0
    %307 = vmatpush.xpose.msra.mxu0 0.0
    %308 = vmatpush.xpose.msra.mxu0 0.0
    %309 = vmatpush.xpose.msra.mxu0 0.0
    %310 = vmatpush.xpose.msra.mxu0 0.0
    %311 = vmatpush.xpose.msra.mxu0 0.0
    %312 = vmatpush.xpose.msra.mxu0 0.0
    %313 = vmatpush.xpose.msra.mxu0 0.0
    %314 = vmatpush.xpose.msra.mxu0 0.0
    %315 = vmatpush.xpose.msra.mxu0 %v298
    %316 = vmatmul.f32.gmra.mxu0 %v296
    %v317 = vpop.f32.mrf.mxu0
    %v318 = vadd.f32 0.0, %v317
    %319 = vdwg.mxu0
    %320 = vrot.lane.b32.xlu0 %v208, 96
    %v321 = vpop.permute.xlu0 %320
    %v322 = vsel %vm217, %v208, 0
    %v324 = vsel %vm217, %v321, 0
    %326 = vmatpush.xpose.msra.mxu0 0.0
    %327 = vmatpush.xpose.msra.mxu0 0.0
    %328 = vmatpush.xpose.msra.mxu0 0.0
    %329 = vmatpush.xpose.msra.mxu0 0.0
    %330 = vmatpush.xpose.msra.mxu0 0.0
    %331 = vmatpush.xpose.msra.mxu0 0.0
    %332 = vmatpush.xpose.msra.mxu0 0.0
    %333 = vmatpush.xpose.msra.mxu0 0.0
    %334 = vmatpush.xpose.msra.mxu0 0.0
    %335 = vmatpush.xpose.msra.mxu0 0.0
    %336 = vmatpush.xpose.msra.mxu0 0.0
    %337 = vmatpush.xpose.msra.mxu0 0.0
    %338 = vmatpush.xpose.msra.mxu0 0.0
    %339 = vmatpush.xpose.msra.mxu0 0.0
    %340 = vmatpush.xpose.msra.mxu0 0.0
    %341 = vmatpush.xpose.msra.mxu0 %v324
    %342 = vmatmul.f32.gmra.mxu0 %v322
    %v343 = vpop.f32.mrf.mxu0
    %v344 = vadd.f32 0.0, %v343
    %345 = vdwg.mxu0
    %346 = vrot.lane.b32.xlu0 %v210, 96
    %v347 = vpop.permute.xlu0 %346
    %v348 = vsel %vm217, %v210, 0
    %v350 = vsel %vm217, %v347, 0
    %352 = vmatpush.xpose.msra.mxu0 0.0
    %353 = vmatpush.xpose.msra.mxu0 0.0
    %354 = vmatpush.xpose.msra.mxu0 0.0
    %355 = vmatpush.xpose.msra.mxu0 0.0
    %356 = vmatpush.xpose.msra.mxu0 0.0
    %357 = vmatpush.xpose.msra.mxu0 0.0
    %358 = vmatpush.xpose.msra.mxu0 0.0
    %359 = vmatpush.xpose.msra.mxu0 0.0
    %360 = vmatpush.xpose.msra.mxu0 0.0
    %361 = vmatpush.xpose.msra.mxu0 0.0
    %362 = vmatpush.xpose.msra.mxu0 0.0
    %363 = vmatpush.xpose.msra.mxu0 0.0
    %364 = vmatpush.xpose.msra.mxu0 0.0
    %365 = vmatpush.xpose.msra.mxu0 0.0
    %366 = vmatpush.xpose.msra.mxu0 0.0
    %367 = vmatpush.xpose.msra.mxu0 %v350
    %368 = vmatmul.f32.gmra.mxu0 %v348
    %v369 = vpop.f32.mrf.mxu0
    %v370 = vadd.f32 0.0, %v369
    %371 = vdwg.mxu0
    %372 = vrot.lane.b32.xlu0 %v212, 96
    %v373 = vpop.permute.xlu0 %372
    %v374 = vsel %vm217, %v212, 0
    %v376 = vsel %vm217, %v373, 0
    %378 = vmatpush.xpose.msra.mxu0 0.0
    %379 = vmatpush.xpose.msra.mxu0 0.0
    %380 = vmatpush.xpose.msra.mxu0 0.0
    %381 = vmatpush.xpose.msra.mxu0 0.0
    %382 = vmatpush.xpose.msra.mxu0 0.0
    %383 = vmatpush.xpose.msra.mxu0 0.0
    %384 = vmatpush.xpose.msra.mxu0 0.0
    %385 = vmatpush.xpose.msra.mxu0 0.0
    %386 = vmatpush.xpose.msra.mxu0 0.0
    %387 = vmatpush.xpose.msra.mxu0 0.0
    %388 = vmatpush.xpose.msra.mxu0 0.0
    %389 = vmatpush.xpose.msra.mxu0 0.0
    %390 = vmatpush.xpose.msra.mxu0 0.0
    %391 = vmatpush.xpose.msra.mxu0 0.0
    %392 = vmatpush.xpose.msra.mxu0 0.0
    %393 = vmatpush.xpose.msra.mxu0 %v376
    %394 = vmatmul.f32.gmra.mxu0 %v374
    %v395 = vpop.f32.mrf.mxu0
    %v396 = vadd.f32 0.0, %v395
    %397 = vdwg.mxu0
    %398 = vrot.lane.b32.xlu0 %v214, 96
    %v399 = vpop.permute.xlu0 %398
    %v400 = vsel %vm217, %v214, 0
    %v402 = vsel %vm217, %v399, 0
    %404 = vmatpush.xpose.msra.mxu0 0.0
    %405 = vmatpush.xpose.msra.mxu0 0.0
    %406 = vmatpush.xpose.msra.mxu0 0.0
    %407 = vmatpush.xpose.msra.mxu0 0.0
    %408 = vmatpush.xpose.msra.mxu0 0.0
    %409 = vmatpush.xpose.msra.mxu0 0.0
    %410 = vmatpush.xpose.msra.mxu0 0.0
    %411 = vmatpush.xpose.msra.mxu0 0.0
    %412 = vmatpush.xpose.msra.mxu0 0.0
    %413 = vmatpush.xpose.msra.mxu0 0.0
    %414 = vmatpush.xpose.msra.mxu0 0.0
    %415 = vmatpush.xpose.msra.mxu0 0.0
    %416 = vmatpush.xpose.msra.mxu0 0.0
    %417 = vmatpush.xpose.msra.mxu0 0.0
    %418 = vmatpush.xpose.msra.mxu0 0.0
    %419 = vmatpush.xpose.msra.mxu0 %v402
    %420 = vmatmul.f32.gmra.mxu0 %v400
    %v421 = vpop.f32.mrf.mxu0
    %v422 = vadd.f32 0.0, %v421
    %423 = vdwg.mxu0
    %v424 = vsel %vm217, %v240, -inf
    %425 = vmax.xlane.f32.xlu0 %v424
    %v426 = vpop.xlane.xlu0 %425
    %v427 = vsel %vm217, %v266, -inf
    %428 = vmax.xlane.f32.xlu0 %v427
    %v429 = vpop.xlane.xlu0 %428
    %v430 = vsel %vm217, %v292, -inf
    %431 = vmax.xlane.f32.xlu0 %v430
    %v432 = vpop.xlane.xlu0 %431
    %v433 = vsel %vm217, %v318, -inf
    %434 = vmax.xlane.f32.xlu0 %v433
    %v435 = vpop.xlane.xlu0 %434
    %v436 = vsel %vm217, %v344, -inf
    %437 = vmax.xlane.f32.xlu0 %v436
    %v438 = vpop.xlane.xlu0 %437
    %v439 = vsel %vm217, %v370, -inf
    %440 = vmax.xlane.f32.xlu0 %v439
    %v441 = vpop.xlane.xlu0 %440
    %v442 = vsel %vm217, %v396, -inf
    %443 = vmax.xlane.f32.xlu0 %v442
    %v444 = vpop.xlane.xlu0 %443
    %v445 = vsel %vm217, %v422, -inf
    %446 = vmax.xlane.f32.xlu0 %v445
    %v447 = vpop.xlane.xlu0 %446
    %v448 = vsub.f32 %v240, %v426
    %v449 = vsub.f32 %v266, %v429
    %v450 = vsub.f32 %v292, %v432
    %v451 = vsub.f32 %v318, %v435
    %v452 = vsub.f32 %v344, %v438
    %v453 = vsub.f32 %v370, %v441
    %v454 = vsub.f32 %v396, %v444
    %v455 = vsub.f32 %v422, %v447
    %v456 = vmul.f32 %v448, 1.442695
    %v457 = vpow.pop %v456
    %v458 = vmul.f32 %v449, 1.442695
    %v459 = vpow.pop %v458
    %v460 = vmul.f32 %v450, 1.442695
    %v461 = vpow.pop %v460
    %v462 = vmul.f32 %v451, 1.442695
    %v463 = vpow.pop %v462
    %v464 = vmul.f32 %v452, 1.442695
    %v465 = vpow.pop %v464
    %v466 = vmul.f32 %v453, 1.442695
    %v467 = vpow.pop %v466
    %v468 = vmul.f32 %v454, 1.442695
    %v469 = vpow.pop %v468
    %v470 = vmul.f32 %v455, 1.442695
    %v471 = vpow.pop %v470
    %v472 = vsel %vm217, %v457, 0.0
    %473 = vadd.xlane.f32.xlu0 %v472
    %v474 = vpop.xlane.xlu0 %473
    %v475 = vsel %vm217, %v459, 0.0
    %476 = vadd.xlane.f32.xlu0 %v475
    %v477 = vpop.xlane.xlu0 %476
    %v478 = vsel %vm217, %v461, 0.0
    %479 = vadd.xlane.f32.xlu0 %v478
    %v480 = vpop.xlane.xlu0 %479
    %v481 = vsel %vm217, %v463, 0.0
    %482 = vadd.xlane.f32.xlu0 %v481
    %v483 = vpop.xlane.xlu0 %482
    %v484 = vsel %vm217, %v465, 0.0
    %485 = vadd.xlane.f32.xlu0 %v484
    %v486 = vpop.xlane.xlu0 %485
    %v487 = vsel %vm217, %v467, 0.0
    %488 = vadd.xlane.f32.xlu0 %v487
    %v489 = vpop.xlane.xlu0 %488
    %v490 = vsel %vm217, %v469, 0.0
    %491 = vadd.xlane.f32.xlu0 %v490
    %v492 = vpop.xlane.xlu0 %491
    %v493 = vsel %vm217, %v471, 0.0
    %494 = vadd.xlane.f32.xlu0 %v493
    %v495 = vpop.xlane.xlu0 %494
    %v496 = vrcp.pop %v474
    %v497 = vmul.f32 %v474, %v496
    %v498 = vsub.f32 1.0, %v497
    %v499 = vmul.f32 %v496, %v498
    %v500 = vadd.f32 %v496, %v499
    %vm501 = vweird.f32 %v474
    %vm502 = vweird.f32 %v496
    %vm503 = vmor %vm501, %vm502
    %v504 = vsel %vm503, %v496, %v500
    %v505 = vand.u32 2147483647, %v474
    %vm506 = vcmp.eq.f32.partialorder %v505, 8.507059e+37
    %v507 = vand.u32 %v474, 2147483648
    %v508 = vor.u32 1.1754944e-38, %v507
    %v509 = vsel %vm506, %v508, %v504
    %v510 = vmul.f32 %v457, %v509
    %v511 = vrcp.pop %v477
    %v512 = vmul.f32 %v477, %v511
    %v513 = vsub.f32 1.0, %v512
    %v514 = vmul.f32 %v511, %v513
    %v515 = vadd.f32 %v511, %v514
    %vm516 = vweird.f32 %v477
    %vm517 = vweird.f32 %v511
    %vm518 = vmor %vm516, %vm517
    %v519 = vsel %vm518, %v511, %v515
    %v520 = vand.u32 2147483647, %v477
    %vm521 = vcmp.eq.f32.partialorder %v520, 8.507059e+37
    %v522 = vand.u32 %v477, 2147483648
    %v523 = vor.u32 1.1754944e-38, %v522
    %v524 = vsel %vm521, %v523, %v519
    %v525 = vmul.f32 %v459, %v524
    %v526 = vrcp.pop %v480
    %v527 = vmul.f32 %v480, %v526
    %v528 = vsub.f32 1.0, %v527
    %v529 = vmul.f32 %v526, %v528
    %v530 = vadd.f32 %v526, %v529
    %vm531 = vweird.f32 %v480
    %vm532 = vweird.f32 %v526
    %vm533 = vmor %vm531, %vm532
    %v534 = vsel %vm533, %v526, %v530
    %v535 = vand.u32 2147483647, %v480
    %vm536 = vcmp.eq.f32.partialorder %v535, 8.507059e+37
    %v537 = vand.u32 %v480, 2147483648
    %v538 = vor.u32 1.1754944e-38, %v537
    %v539 = vsel %vm536, %v538, %v534
    %v540 = vmul.f32 %v461, %v539
    %v541 = vrcp.pop %v483
    %v542 = vmul.f32 %v483, %v541
    %v543 = vsub.f32 1.0, %v542
    %v544 = vmul.f32 %v541, %v543
    %v545 = vadd.f32 %v541, %v544
    %vm546 = vweird.f32 %v483
    %vm547 = vweird.f32 %v541
    %vm548 = vmor %vm546, %vm547
    %v549 = vsel %vm548, %v541, %v545
    %v550 = vand.u32 2147483647, %v483
    %vm551 = vcmp.eq.f32.partialorder %v550, 8.507059e+37
    %v552 = vand.u32 %v483, 2147483648
    %v553 = vor.u32 1.1754944e-38, %v552
    %v554 = vsel %vm551, %v553, %v549
    %v555 = vmul.f32 %v463, %v554
    %v556 = vrcp.pop %v486
    %v557 = vmul.f32 %v486, %v556
    %v558 = vsub.f32 1.0, %v557
    %v559 = vmul.f32 %v556, %v558
    %v560 = vadd.f32 %v556, %v559
    %vm561 = vweird.f32 %v486
    %vm562 = vweird.f32 %v556
    %vm563 = vmor %vm561, %vm562
    %v564 = vsel %vm563, %v556, %v560
    %v565 = vand.u32 2147483647, %v486
    %vm566 = vcmp.eq.f32.partialorder %v565, 8.507059e+37
    %v567 = vand.u32 %v486, 2147483648
    %v568 = vor.u32 1.1754944e-38, %v567
    %v569 = vsel %vm566, %v568, %v564
    %v570 = vmul.f32 %v465, %v569
    %v571 = vrcp.pop %v489
    %v572 = vmul.f32 %v489, %v571
    %v573 = vsub.f32 1.0, %v572
    %v574 = vmul.f32 %v571, %v573
    %v575 = vadd.f32 %v571, %v574
    %vm576 = vweird.f32 %v489
    %vm577 = vweird.f32 %v571
    %vm578 = vmor %vm576, %vm577
    %v579 = vsel %vm578, %v571, %v575
    %v580 = vand.u32 2147483647, %v489
    %vm581 = vcmp.eq.f32.partialorder %v580, 8.507059e+37
    %v582 = vand.u32 %v489, 2147483648
    %v583 = vor.u32 1.1754944e-38, %v582
    %v584 = vsel %vm581, %v583, %v579
    %v585 = vmul.f32 %v467, %v584
    %v586 = vrcp.pop %v492
    %v587 = vmul.f32 %v492, %v586
    %v588 = vsub.f32 1.0, %v587
    %v589 = vmul.f32 %v586, %v588
    %v590 = vadd.f32 %v586, %v589
    %vm591 = vweird.f32 %v492
    %vm592 = vweird.f32 %v586
    %vm593 = vmor %vm591, %vm592
    %v594 = vsel %vm593, %v586, %v590
    %v595 = vand.u32 2147483647, %v492
    %vm596 = vcmp.eq.f32.partialorder %v595, 8.507059e+37
    %v597 = vand.u32 %v492, 2147483648
    %v598 = vor.u32 1.1754944e-38, %v597
    %v599 = vsel %vm596, %v598, %v594
    %v600 = vmul.f32 %v469, %v599
    %v601 = vrcp.pop %v495
    %v602 = vmul.f32 %v495, %v601
    %v603 = vsub.f32 1.0, %v602
    %v604 = vmul.f32 %v601, %v603
    %v605 = vadd.f32 %v601, %v604
    %vm606 = vweird.f32 %v495
    %vm607 = vweird.f32 %v601
    %vm608 = vmor %vm606, %vm607
    %v609 = vsel %vm608, %v601, %v605
    %v610 = vand.u32 2147483647, %v495
    %vm611 = vcmp.eq.f32.partialorder %v610, 8.507059e+37
    %v612 = vand.u32 %v495, 2147483648
    %v613 = vor.u32 1.1754944e-38, %v612
    %v614 = vsel %vm611, %v613, %v609
    %v615 = vmul.f32 %v471, %v614
    %616 = vrot.lane.b32.xlu0 %v196, 64
    %v617 = vpop.permute.xlu0 %616
    %v620 = vsel %vm217, %v510, 0
    %622 = vmatpush.msra.mxu0 0.0
    %623 = vmatpush.msra.mxu0 0.0
    %624 = vmatpush.msra.mxu0 0.0
    %625 = vmatpush.msra.mxu0 0.0
    %626 = vmatpush.msra.mxu0 0.0
    %627 = vmatpush.msra.mxu0 0.0
    %628 = vmatpush.msra.mxu0 0.0
    %629 = vmatpush.msra.mxu0 0.0
    %630 = vmatpush.msra.mxu0 0.0
    %631 = vmatpush.msra.mxu0 0.0
    %632 = vmatpush.msra.mxu0 0.0
    %633 = vmatpush.msra.mxu0 0.0
    %634 = vmatpush.msra.mxu0 0.0
    %635 = vmatpush.msra.mxu0 0.0
    %636 = vmatpush.msra.mxu0 0.0
    %637 = vmatpush.msra.mxu0 %v617
    %638 = vmatmul.f32.gmra.mxu0 %v620
    %v639 = vpop.f32.mrf.mxu0
    %v640 = vadd.f32 0.0, %v639
    %641 = vdwg.mxu0
    %642 = vrot.lane.b32.xlu0 %v199, 64
    %v643 = vpop.permute.xlu0 %642
    %v646 = vsel %vm217, %v525, 0
    %648 = vmatpush.msra.mxu0 0.0
    %649 = vmatpush.msra.mxu0 0.0
    %650 = vmatpush.msra.mxu0 0.0
    %651 = vmatpush.msra.mxu0 0.0
    %652 = vmatpush.msra.mxu0 0.0
    %653 = vmatpush.msra.mxu0 0.0
    %654 = vmatpush.msra.mxu0 0.0
    %655 = vmatpush.msra.mxu0 0.0
    %656 = vmatpush.msra.mxu0 0.0
    %657 = vmatpush.msra.mxu0 0.0
    %658 = vmatpush.msra.mxu0 0.0
    %659 = vmatpush.msra.mxu0 0.0
    %660 = vmatpush.msra.mxu0 0.0
    %661 = vmatpush.msra.mxu0 0.0
    %662 = vmatpush.msra.mxu0 0.0
    %663 = vmatpush.msra.mxu0 %v643
    %664 = vmatmul.f32.gmra.mxu0 %v646
    %v665 = vpop.f32.mrf.mxu0
    %v666 = vadd.f32 0.0, %v665
    %667 = vdwg.mxu0
    %668 = vrot.lane.b32.xlu0 %v204, 64
    %v669 = vpop.permute.xlu0 %668
    %v672 = vsel %vm217, %v540, 0
    %674 = vmatpush.msra.mxu0 0.0
    %675 = vmatpush.msra.mxu0 0.0
    %676 = vmatpush.msra.mxu0 0.0
    %677 = vmatpush.msra.mxu0 0.0
    %678 = vmatpush.msra.mxu0 0.0
    %679 = vmatpush.msra.mxu0 0.0
    %680 = vmatpush.msra.mxu0 0.0
    %681 = vmatpush.msra.mxu0 0.0
    %682 = vmatpush.msra.mxu0 0.0
    %683 = vmatpush.msra.mxu0 0.0
    %684 = vmatpush.msra.mxu0 0.0
    %685 = vmatpush.msra.mxu0 0.0
    %686 = vmatpush.msra.mxu0 0.0
    %687 = vmatpush.msra.mxu0 0.0
    %688 = vmatpush.msra.mxu0 0.0
    %689 = vmatpush.msra.mxu0 %v669
    %690 = vmatmul.f32.gmra.mxu0 %v672
    %v691 = vpop.f32.mrf.mxu0
    %v692 = vadd.f32 0.0, %v691
    %693 = vdwg.mxu0
    %694 = vrot.lane.b32.xlu0 %v206, 64
    %v695 = vpop.permute.xlu0 %694
    %v698 = vsel %vm217, %v555, 0
    %700 = vmatpush.msra.mxu0 0.0
    %701 = vmatpush.msra.mxu0 0.0
    %702 = vmatpush.msra.mxu0 0.0
    %703 = vmatpush.msra.mxu0 0.0
    %704 = vmatpush.msra.mxu0 0.0
    %705 = vmatpush.msra.mxu0 0.0
    %706 = vmatpush.msra.mxu0 0.0
    %707 = vmatpush.msra.mxu0 0.0
    %708 = vmatpush.msra.mxu0 0.0
    %709 = vmatpush.msra.mxu0 0.0
    %710 = vmatpush.msra.mxu0 0.0
    %711 = vmatpush.msra.mxu0 0.0
    %712 = vmatpush.msra.mxu0 0.0
    %713 = vmatpush.msra.mxu0 0.0
    %714 = vmatpush.msra.mxu0 0.0
    %715 = vmatpush.msra.mxu0 %v695
    %716 = vmatmul.f32.gmra.mxu0 %v698
    %v717 = vpop.f32.mrf.mxu0
    %v718 = vadd.f32 0.0, %v717
    %719 = vdwg.mxu0
    %720 = vrot.lane.b32.xlu0 %v208, 64
    %v721 = vpop.permute.xlu0 %720
    %v724 = vsel %vm217, %v570, 0
    %726 = vmatpush.msra.mxu0 0.0
    %727 = vmatpush.msra.mxu0 0.0
    %728 = vmatpush.msra.mxu0 0.0
    %729 = vmatpush.msra.mxu0 0.0
    %730 = vmatpush.msra.mxu0 0.0
    %731 = vmatpush.msra.mxu0 0.0
    %732 = vmatpush.msra.mxu0 0.0
    %733 = vmatpush.msra.mxu0 0.0
    %734 = vmatpush.msra.mxu0 0.0
    %735 = vmatpush.msra.mxu0 0.0
    %736 = vmatpush.msra.mxu0 0.0
    %737 = vmatpush.msra.mxu0 0.0
    %738 = vmatpush.msra.mxu0 0.0
    %739 = vmatpush.msra.mxu0 0.0
    %740 = vmatpush.msra.mxu0 0.0
    %741 = vmatpush.msra.mxu0 %v721
    %742 = vmatmul.f32.gmra.mxu0 %v724
    %v743 = vpop.f32.mrf.mxu0
    %v744 = vadd.f32 0.0, %v743
    %745 = vdwg.mxu0
    %746 = vrot.lane.b32.xlu0 %v210, 64
    %v747 = vpop.permute.xlu0 %746
    %v750 = vsel %vm217, %v585, 0
    %752 = vmatpush.msra.mxu0 0.0
    %753 = vmatpush.msra.mxu0 0.0
    %754 = vmatpush.msra.mxu0 0.0
    %755 = vmatpush.msra.mxu0 0.0
    %756 = vmatpush.msra.mxu0 0.0
    %757 = vmatpush.msra.mxu0 0.0
    %758 = vmatpush.msra.mxu0 0.0
    %759 = vmatpush.msra.mxu0 0.0
    %760 = vmatpush.msra.mxu0 0.0
    %761 = vmatpush.msra.mxu0 0.0
    %762 = vmatpush.msra.mxu0 0.0
    %763 = vmatpush.msra.mxu0 0.0
    %764 = vmatpush.msra.mxu0 0.0
    %765 = vmatpush.msra.mxu0 0.0
    %766 = vmatpush.msra.mxu0 0.0
    %767 = vmatpush.msra.mxu0 %v747
    %768 = vmatmul.f32.gmra.mxu0 %v750
    %v769 = vpop.f32.mrf.mxu0
    %v770 = vadd.f32 0.0, %v769
    %771 = vdwg.mxu0
    %772 = vrot.lane.b32.xlu0 %v212, 64
    %v773 = vpop.permute.xlu0 %772
    %v776 = vsel %vm217, %v600, 0
    %778 = vmatpush.msra.mxu0 0.0
    %779 = vmatpush.msra.mxu0 0.0
    %780 = vmatpush.msra.mxu0 0.0
    %781 = vmatpush.msra.mxu0 0.0
    %782 = vmatpush.msra.mxu0 0.0
    %783 = vmatpush.msra.mxu0 0.0
    %784 = vmatpush.msra.mxu0 0.0
    %785 = vmatpush.msra.mxu0 0.0
    %786 = vmatpush.msra.mxu0 0.0
    %787 = vmatpush.msra.mxu0 0.0
    %788 = vmatpush.msra.mxu0 0.0
    %789 = vmatpush.msra.mxu0 0.0
    %790 = vmatpush.msra.mxu0 0.0
    %791 = vmatpush.msra.mxu0 0.0
    %792 = vmatpush.msra.mxu0 0.0
    %793 = vmatpush.msra.mxu0 %v773
    %794 = vmatmul.f32.gmra.mxu0 %v776
    %v795 = vpop.f32.mrf.mxu0
    %v796 = vadd.f32 0.0, %v795
    %797 = vdwg.mxu0
    %798 = vrot.lane.b32.xlu0 %v214, 64
    %v799 = vpop.permute.xlu0 %798
    %v802 = vsel %vm217, %v615, 0
    %804 = vmatpush.msra.mxu0 0.0
    %805 = vmatpush.msra.mxu0 0.0
    %806 = vmatpush.msra.mxu0 0.0
    %807 = vmatpush.msra.mxu0 0.0
    %808 = vmatpush.msra.mxu0 0.0
    %809 = vmatpush.msra.mxu0 0.0
    %810 = vmatpush.msra.mxu0 0.0
    %811 = vmatpush.msra.mxu0 0.0
    %812 = vmatpush.msra.mxu0 0.0
    %813 = vmatpush.msra.mxu0 0.0
    %814 = vmatpush.msra.mxu0 0.0
    %815 = vmatpush.msra.mxu0 0.0
    %816 = vmatpush.msra.mxu0 0.0
    %817 = vmatpush.msra.mxu0 0.0
    %818 = vmatpush.msra.mxu0 0.0
    %819 = vmatpush.msra.mxu0 %v799
    %820 = vmatmul.f32.gmra.mxu0 %v802
    %v821 = vpop.f32.mrf.mxu0
    %v822 = vadd.f32 0.0, %v821
    %823 = vdwg.mxu0
    %826 = vrot.lane.b32.xlu0 %v692, 8
    %v827 = vpop.permute.xlu0 %826
    %828 = vrot.lane.b32.xlu0 %v718, 8
    %v829 = vpop.permute.xlu0 %828
    %834 = vrot.lane.b32.xlu0 %v744, 16
    %v835 = vpop.permute.xlu0 %834
    %836 = vrot.lane.b32.xlu0 %v770, 16
    %v837 = vpop.permute.xlu0 %836
    %842 = vrot.lane.b32.xlu0 %v796, 24
    %v843 = vpop.permute.xlu0 %842
    %844 = vrot.lane.b32.xlu0 %v822, 24
    %v845 = vpop.permute.xlu0 %844
    %v848 = vsel %vm217, %v640, %v827
    %v849 = vsel %vm217, %v666, %v829
    %vm850 = vcmask 130048
    %v851 = vsel %vm850, %v848, %v835
    %v852 = vsel %vm850, %v849, %v837
    %vm853 = vcmask 195584
    %v854 = vsel %vm853, %v851, %v843
    %v855 = vsel %vm853, %v852, %v845
    %v857 = vperm.slane %v151, 0
    %v860 = vsel %vm171, %v854, 0
    %v863 = vsel %vm171, %v855, 0
    %865 = vmatpush.msra.mxu0 0.0
    %866 = vmatpush.msra.mxu0 0.0
    %867 = vmatpush.msra.mxu0 0.0
    %868 = vmatpush.msra.mxu0 0.0
    %869 = vmatpush.msra.mxu0 0.0
    %870 = vmatpush.msra.mxu0 0.0
    %871 = vmatpush.msra.mxu0 0.0
    %872 = vmatpush.msra.mxu0 0.0
    %873 = vmatpush.msra.mxu0 0.0
    %874 = vmatpush.msra.mxu0 0.0
    %875 = vmatpush.msra.mxu0 0.0
    %876 = vmatpush.msra.mxu0 0.0
    %877 = vmatpush.msra.mxu0 %v150
    %878 = vmatpush.msra.mxu0 %v149
    %879 = vmatpush.msra.mxu0 %v148
    %880 = vmatpush.msra.mxu0 %v147
    %881 = vmatmul.f32.gmra.mxu0 %v860
    %v882 = vpop.f32.mrf.mxu0
    %v883 = vadd.f32 %v857, %v882
    %884 = vmatmul.f32.gmra.mxu0 %v863
    %v885 = vpop.f32.mrf.mxu0
    %v886 = vadd.f32 %v857, %v885
    %887 = vdwg.mxu0
    %v888 = vadd.f32 %v140, %v883
    %v889 = vadd.f32 %v141, %v886
    %v890 = vsel %vm171, %v888, 0.0
    %891 = vadd.xlane.f32.xlu0 %v890
    %v892 = vpop.xlane.xlu0 %891
    %v893 = vsel %vm171, %v889, 0.0
    %894 = vadd.xlane.f32.xlu0 %v893
    %v895 = vpop.xlane.xlu0 %894
    %v896 = vrcp.pop 32.0
    %v897 = vmul.f32 32.0, %v896
    %v898 = vsub.f32 1.0, %v897
    %v899 = vmul.f32 %v896, %v898
    %v900 = vadd.f32 %v896, %v899
    %vm901 = vweird.f32 %v896
    %v902 = vsel %vm901, %v896, %v900
    %v903 = vmul.f32 %v892, %v902
    %v904 = vmul.f32 %v895, %v902
    %v905 = vsub.f32 %v888, %v903
    %v906 = vsub.f32 %v889, %v904
    %v907 = vmul.f32 %v905, %v905
    %v908 = vmul.f32 %v906, %v906
    %v909 = vsel %vm171, %v907, 0.0
    %910 = vadd.xlane.f32.xlu0 %v909
    %v911 = vpop.xlane.xlu0 %910
    %v912 = vsel %vm171, %v908, 0.0
    %913 = vadd.xlane.f32.xlu0 %v912
    %v914 = vpop.xlane.xlu0 %913
    %v915 = vmul.f32 %v911, %v902
    %v916 = vmul.f32 %v914, %v902
    %v917 = vadd.f32 %v915, 1e-05
    %v918 = vadd.f32 %v916, 1e-05
    %v919 = vrsqrt.pop %v917
    %v920 = vmul.f32 %v919, %v917
    %v921 = vmul.f32 %v920, %v919
    %v922 = vmul.f32 0.5, %v921
    %v923 = vsub.f32 1.5, %v922
    %v924 = vmul.f32 %v919, %v923
    %vm925 = vweird.f32 %v917
    %vm926 = vweird.f32 %v919
    %vm927 = vmor %vm925, %vm926
    %v928 = vsel %vm927, %v919, %v924
    %v929 = vrsqrt.pop %v918
    %v930 = vmul.f32 %v929, %v918
    %v931 = vmul.f32 %v930, %v929
    %v932 = vmul.f32 0.5, %v931
    %v933 = vsub.f32 1.5, %v932
    %v934 = vmul.f32 %v929, %v933
    %vm935 = vweird.f32 %v918
    %vm936 = vweird.f32 %v929
    %vm937 = vmor %vm935, %vm936
    %v938 = vsel %vm937, %v929, %v934
    %v939 = vmul.f32 %v905, %v928
    %v940 = vmul.f32 %v906, %v938
    %v942 = vperm.slane %v152, 0
    %v944 = vmul.f32 %v939, %v942
    %v945 = vmul.f32 %v940, %v942
    %v947 = vperm.slane %v153, 0
    %v949 = vadd.f32 %v944, %v947
    %v950 = vadd.f32 %v945, %v947
    %v952 = vperm.slane %v158, 0
    %v955 = vsel %vm171, %v949, 0
    %v958 = vsel %vm171, %v950, 0
    %960 = vmatpush.msra.mxu0 0.0
    %961 = vmatpush.msra.mxu0 0.0
    %962 = vmatpush.msra.mxu0 0.0
    %963 = vmatpush.msra.mxu0 0.0
    %964 = vmatpush.msra.mxu0 0.0
    %965 = vmatpush.msra.mxu0 0.0
    %966 = vmatpush.msra.mxu0 0.0
    %967 = vmatpush.msra.mxu0 0.0
    %968 = vmatpush.msra.mxu0 0.0
    %969 = vmatpush.msra.mxu0 0.0
    %970 = vmatpush.msra.mxu0 0.0
    %971 = vmatpush.msra.mxu0 0.0
    %972 = vmatpush.msra.mxu0 %v157
    %973 = vmatpush.msra.mxu0 %v156
    %974 = vmatpush.msra.mxu0 %v155
    %975 = vmatpush.msra.mxu0 %v154
    %976 = vmatmul.f32.gmra.mxu0 %v955
    %v977 = vpop.f32.mrf.mxu0
    %v978 = vadd.f32 %v952, %v977
    %979 = vmatmul.f32.gmra.mxu0 %v958
    %v980 = vpop.f32.mrf.mxu0
    %v981 = vadd.f32 %v952, %v980
    %982 = vdwg.mxu0
    %v983 = vmax.f32 %v978, 0.0
    %v984 = vmax.f32 %v981, 0.0
    %v986 = vperm.slane %v167, 0
    %vm988 = vcmask 523264
    %v990 = vsel %vm988, %v983, 0
    %v993 = vsel %vm988, %v984, 0
    %995 = vmatpush.msra.mxu0 0.0
    %996 = vmatpush.msra.mxu0 0.0
    %997 = vmatpush.msra.mxu0 0.0
    %998 = vmatpush.msra.mxu0 0.0
    %999 = vmatpush.msra.mxu0 0.0
    %1000 = vmatpush.msra.mxu0 0.0
    %1001 = vmatpush.msra.mxu0 0.0
    %1002 = vmatpush.msra.mxu0 0.0
    %1003 = vmatpush.msra.mxu0 %v166
    %1004 = vmatpush.msra.mxu0 %v165
    %1005 = vmatpush.msra.mxu0 %v164
    %1006 = vmatpush.msra.mxu0 %v163
    %1007 = vmatpush.msra.mxu0 %v162
    %1008 = vmatpush.msra.mxu0 %v161
    %1009 = vmatpush.msra.mxu0 %v160
    %1010 = vmatpush.msra.mxu0 %v159
    %1011 = vmatmul.f32.gmra.mxu0 %v990
    %v1012 = vpop.f32.mrf.mxu0
    %v1013 = vadd.f32 %v986, %v1012
    %1014 = vmatmul.f32.gmra.mxu0 %v993
    %v1015 = vpop.f32.mrf.mxu0
    %v1016 = vadd.f32 %v986, %v1015
    %1017 = vdwg.mxu0
    %v1018 = vadd.f32 %v888, %v1013
    %v1019 = vadd.f32 %v889, %v1016
    %v1020 = vld [vmem:[%s13] sm:$0x1]
    %v1021 = vld [vmem:[%s14] sm:$0x1]
    %v1022 = vld [vmem:[%s15] sm:$0xff]
    %v1023 = vld [vmem:[%s15 + $0x8] sm:$0xff]
    %v1024 = vld [vmem:[%s15 + $0x10] sm:$0xff]
    %v1025 = vld [vmem:[%s15 + $0x18] sm:$0xff]
    %v1026 = vld [vmem:[%s16] sm:$0x1]
    %v1027 = vld [vmem:[%s17] sm:$0xff]
    %v1028 = vld [vmem:[%s17 + $0x8] sm:$0xff]
    %v1029 = vld [vmem:[%s17 + $0x10] sm:$0xff]
    %v1030 = vld [vmem:[%s17 + $0x18] sm:$0xff]
    %v1031 = vld [vmem:[%s18] sm:$0x1]
    %v1032 = vld [vmem:[%s19] sm:$0x1]
    %v1033 = vld [vmem:[%s20] sm:$0x1]
    %v1034 = vld [vmem:[#allocation8] sm:$0xff]
    %v1035 = vld [vmem:[#allocation8 + $0x8] sm:$0xff]
    %v1036 = vld [vmem:[#allocation8 + $0x10] sm:$0xff]
    %v1037 = vld [vmem:[#allocation8 + $0x18] sm:$0xff]
    %v1038 = vld [vmem:[%s22] sm:$0x1]
    %v1039 = vld [vmem:[%s23] sm:$0xff]
    %v1040 = vld [vmem:[%s23 + $0x8] sm:$0xff]
    %v1041 = vld [vmem:[%s23 + $0x10] sm:$0xff]
    %v1042 = vld [vmem:[%s23 + $0x18] sm:$0xff]
    %v1043 = vld [vmem:[%s23 + $0x20] sm:$0xff]
    %v1044 = vld [vmem:[%s23 + $0x28] sm:$0xff]
    %v1045 = vld [vmem:[%s23 + $0x30] sm:$0xff]
    %v1046 = vld [vmem:[%s23 + $0x38] sm:$0xff]
    %v1047 = vld [vmem:[%s24] sm:$0x1]
    %v1048 = vsel %vm171, %v1018, 0.0
    %1049 = vadd.xlane.f32.xlu0 %v1048
    %v1050 = vpop.xlane.xlu0 %1049
    %v1051 = vsel %vm171, %v1019, 0.0
    %1052 = vadd.xlane.f32.xlu0 %v1051
    %v1053 = vpop.xlane.xlu0 %1052
    %v1054 = vmul.f32 %v1050, %v902
    %v1055 = vmul.f32 %v1053, %v902
    %v1056 = vsub.f32 %v1018, %v1054
    %v1057 = vsub.f32 %v1019, %v1055
    %v1058 = vmul.f32 %v1056, %v1056
    %v1059 = vmul.f32 %v1057, %v1057
    %v1060 = vsel %vm171, %v1058, 0.0
    %1061 = vadd.xlane.f32.xlu0 %v1060
    %v1062 = vpop.xlane.xlu0 %1061
    %v1063 = vsel %vm171, %v1059, 0.0
    %1064 = vadd.xlane.f32.xlu0 %v1063
    %v1065 = vpop.xlane.xlu0 %1064
    %v1066 = vmul.f32 %v1062, %v902
    %v1067 = vmul.f32 %v1065, %v902
    %v1068 = vadd.f32 %v1066, 1e-05
    %v1069 = vadd.f32 %v1067, 1e-05
    %v1070 = vrsqrt.pop %v1068
    %v1071 = vmul.f32 %v1070, %v1068
    %v1072 = vmul.f32 %v1071, %v1070
    %v1073 = vmul.f32 0.5, %v1072
    %v1074 = vsub.f32 1.5, %v1073
    %v1075 = vmul.f32 %v1070, %v1074
    %vm1076 = vweird.f32 %v1068
    %vm1077 = vweird.f32 %v1070
    %vm1078 = vmor %vm1076, %vm1077
    %v1079 = vsel %vm1078, %v1070, %v1075
    %v1080 = vrsqrt.pop %v1069
    %v1081 = vmul.f32 %v1080, %v1069
    %v1082 = vmul.f32 %v1081, %v1080
    %v1083 = vmul.f32 0.5, %v1082
    %v1084 = vsub.f32 1.5, %v1083
    %v1085 = vmul.f32 %v1080, %v1084
    %vm1086 = vweird.f32 %v1069
    %vm1087 = vweird.f32 %v1080
    %vm1088 = vmor %vm1086, %vm1087
    %v1089 = vsel %vm1088, %v1080, %v1085
    %v1090 = vmul.f32 %v1056, %v1079
    %v1091 = vmul.f32 %v1057, %v1089
    %v1093 = vperm.slane %v1020, 0
    %v1095 = vmul.f32 %v1090, %v1093
    %v1096 = vmul.f32 %v1091, %v1093
    %v1098 = vperm.slane %v1021, 0
    %v1100 = vadd.f32 %v1095, %v1098
    %v1101 = vadd.f32 %v1096, %v1098
    %v1103 = vperm.slane %v1026, 0
    %v1106 = vsel %vm171, %v1100, 0
    %v1109 = vsel %vm171, %v1101, 0
    %1111 = vmatpush.msra.mxu0 0.0
    %1112 = vmatpush.msra.mxu0 0.0
    %1113 = vmatpush.msra.mxu0 0.0
    %1114 = vmatpush.msra.mxu0 0.0
    %1115 = vmatpush.msra.mxu0 0.0
    %1116 = vmatpush.msra.mxu0 0.0
    %1117 = vmatpush.msra.mxu0 0.0
    %1118 = vmatpush.msra.mxu0 0.0
    %1119 = vmatpush.msra.mxu0 0.0
    %1120 = vmatpush.msra.mxu0 0.0
    %1121 = vmatpush.msra.mxu0 0.0
    %1122 = vmatpush.msra.mxu0 0.0
    %1123 = vmatpush.msra.mxu0 %v1025
    %1124 = vmatpush.msra.mxu0 %v1024
    %1125 = vmatpush.msra.mxu0 %v1023
    %1126 = vmatpush.msra.mxu0 %v1022
    %1127 = vmatmul.f32.gmra.mxu0 %v1106
    %v1128 = vpop.f32.mrf.mxu0
    %v1129 = vadd.f32 %v1103, %v1128
    %1130 = vmatmul.f32.gmra.mxu0 %v1109
    %v1131 = vpop.f32.mrf.mxu0
    %v1132 = vadd.f32 %v1103, %v1131
    %1133 = vdwg.mxu0
    %1136 = vrot.lane.b32.xlu0 %v1129, 120
    %v1137 = vpop.permute.xlu0 %1136
    %1138 = vrot.lane.b32.xlu0 %v1132, 120
    %v1139 = vpop.permute.xlu0 %1138
    %1140 = vrot.lane.b32.xlu0 %v1129, 112
    %v1141 = vpop.permute.xlu0 %1140
    %1142 = vrot.lane.b32.xlu0 %v1132, 112
    %v1143 = vpop.permute.xlu0 %1142
    %1144 = vrot.lane.b32.xlu0 %v1129, 104
    %v1145 = vpop.permute.xlu0 %1144
    %1146 = vrot.lane.b32.xlu0 %v1132, 104
    %v1147 = vpop.permute.xlu0 %1146
    %1148 = vrot.lane.b32.xlu0 %v1129, 96
    %v1149 = vpop.permute.xlu0 %1148
    %v1150 = vsel %vm217, %v1129, 0
    %v1152 = vsel %vm217, %v1149, 0
    %1154 = vmatpush.xpose.msra.mxu0 0.0
    %1155 = vmatpush.xpose.msra.mxu0 0.0
    %1156 = vmatpush.xpose.msra.mxu0 0.0
    %1157 = vmatpush.xpose.msra.mxu0 0.0
    %1158 = vmatpush.xpose.msra.mxu0 0.0
    %1159 = vmatpush.xpose.msra.mxu0 0.0
    %1160 = vmatpush.xpose.msra.mxu0 0.0
    %1161 = vmatpush.xpose.msra.mxu0 0.0
    %1162 = vmatpush.xpose.msra.mxu0 0.0
    %1163 = vmatpush.xpose.msra.mxu0 0.0
    %1164 = vmatpush.xpose.msra.mxu0 0.0
    %1165 = vmatpush.xpose.msra.mxu0 0.0
    %1166 = vmatpush.xpose.msra.mxu0 0.0
    %1167 = vmatpush.xpose.msra.mxu0 0.0
    %1168 = vmatpush.xpose.msra.mxu0 0.0
    %1169 = vmatpush.xpose.msra.mxu0 %v1152
    %1170 = vmatmul.f32.gmra.mxu0 %v1150
    %v1171 = vpop.f32.mrf.mxu0
    %v1172 = vadd.f32 0.0, %v1171
    %1173 = vdwg.mxu0
    %1174 = vrot.lane.b32.xlu0 %v1132, 96
    %v1175 = vpop.permute.xlu0 %1174
    %v1176 = vsel %vm217, %v1132, 0
    %v1178 = vsel %vm217, %v1175, 0
    %1180 = vmatpush.xpose.msra.mxu0 0.0
    %1181 = vmatpush.xpose.msra.mxu0 0.0
    %1182 = vmatpush.xpose.msra.mxu0 0.0
    %1183 = vmatpush.xpose.msra.mxu0 0.0
    %1184 = vmatpush.xpose.msra.mxu0 0.0
    %1185 = vmatpush.xpose.msra.mxu0 0.0
    %1186 = vmatpush.xpose.msra.mxu0 0.0
    %1187 = vmatpush.xpose.msra.mxu0 0.0
    %1188 = vmatpush.xpose.msra.mxu0 0.0
    %1189 = vmatpush.xpose.msra.mxu0 0.0
    %1190 = vmatpush.xpose.msra.mxu0 0.0
    %1191 = vmatpush.xpose.msra.mxu0 0.0
    %1192 = vmatpush.xpose.msra.mxu0 0.0
    %1193 = vmatpush.xpose.msra.mxu0 0.0
    %1194 = vmatpush.xpose.msra.mxu0 0.0
    %1195 = vmatpush.xpose.msra.mxu0 %v1178
    %1196 = vmatmul.f32.gmra.mxu0 %v1176
    %v1197 = vpop.f32.mrf.mxu0
    %v1198 = vadd.f32 0.0, %v1197
    %1199 = vdwg.mxu0
    %1200 = vrot.lane.b32.xlu0 %v1137, 96
    %v1201 = vpop.permute.xlu0 %1200
    %v1202 = vsel %vm217, %v1137, 0
    %v1204 = vsel %vm217, %v1201, 0
    %1206 = vmatpush.xpose.msra.mxu0 0.0
    %1207 = vmatpush.xpose.msra.mxu0 0.0
    %1208 = vmatpush.xpose.msra.mxu0 0.0
    %1209 = vmatpush.xpose.msra.mxu0 0.0
    %1210 = vmatpush.xpose.msra.mxu0 0.0
    %1211 = vmatpush.xpose.msra.mxu0 0.0
    %1212 = vmatpush.xpose.msra.mxu0 0.0
    %1213 = vmatpush.xpose.msra.mxu0 0.0
    %1214 = vmatpush.xpose.msra.mxu0 0.0
    %1215 = vmatpush.xpose.msra.mxu0 0.0
    %1216 = vmatpush.xpose.msra.mxu0 0.0
    %1217 = vmatpush.xpose.msra.mxu0 0.0
    %1218 = vmatpush.xpose.msra.mxu0 0.0
    %1219 = vmatpush.xpose.msra.mxu0 0.0
    %1220 = vmatpush.xpose.msra.mxu0 0.0
    %1221 = vmatpush.xpose.msra.mxu0 %v1204
    %1222 = vmatmul.f32.gmra.mxu0 %v1202
    %v1223 = vpop.f32.mrf.mxu0
    %v1224 = vadd.f32 0.0, %v1223
    %1225 = vdwg.mxu0
    %1226 = vrot.lane.b32.xlu0 %v1139, 96
    %v1227 = vpop.permute.xlu0 %1226
    %v1228 = vsel %vm217, %v1139, 0
    %v1230 = vsel %vm217, %v1227, 0
    %1232 = vmatpush.xpose.msra.mxu0 0.0
    %1233 = vmatpush.xpose.msra.mxu0 0.0
    %1234 = vmatpush.xpose.msra.mxu0 0.0
    %1235 = vmatpush.xpose.msra.mxu0 0.0
    %1236 = vmatpush.xpose.msra.mxu0 0.0
    %1237 = vmatpush.xpose.msra.mxu0 0.0
    %1238 = vmatpush.xpose.msra.mxu0 0.0
    %1239 = vmatpush.xpose.msra.mxu0 0.0
    %1240 = vmatpush.xpose.msra.mxu0 0.0
    %1241 = vmatpush.xpose.msra.mxu0 0.0
    %1242 = vmatpush.xpose.msra.mxu0 0.0
    %1243 = vmatpush.xpose.msra.mxu0 0.0
    %1244 = vmatpush.xpose.msra.mxu0 0.0
    %1245 = vmatpush.xpose.msra.mxu0 0.0
    %1246 = vmatpush.xpose.msra.mxu0 0.0
    %1247 = vmatpush.xpose.msra.mxu0 %v1230
    %1248 = vmatmul.f32.gmra.mxu0 %v1228
    %v1249 = vpop.f32.mrf.mxu0
    %v1250 = vadd.f32 0.0, %v1249
    %1251 = vdwg.mxu0
    %1252 = vrot.lane.b32.xlu0 %v1141, 96
    %v1253 = vpop.permute.xlu0 %1252
    %v1254 = vsel %vm217, %v1141, 0
    %v1256 = vsel %vm217, %v1253, 0
    %1258 = vmatpush.xpose.msra.mxu0 0.0
    %1259 = vmatpush.xpose.msra.mxu0 0.0
    %1260 = vmatpush.xpose.msra.mxu0 0.0
    %1261 = vmatpush.xpose.msra.mxu0 0.0
    %1262 = vmatpush.xpose.msra.mxu0 0.0
    %1263 = vmatpush.xpose.msra.mxu0 0.0
    %1264 = vmatpush.xpose.msra.mxu0 0.0
    %1265 = vmatpush.xpose.msra.mxu0 0.0
    %1266 = vmatpush.xpose.msra.mxu0 0.0
    %1267 = vmatpush.xpose.msra.mxu0 0.0
    %1268 = vmatpush.xpose.msra.mxu0 0.0
    %1269 = vmatpush.xpose.msra.mxu0 0.0
    %1270 = vmatpush.xpose.msra.mxu0 0.0
    %1271 = vmatpush.xpose.msra.mxu0 0.0
    %1272 = vmatpush.xpose.msra.mxu0 0.0
    %1273 = vmatpush.xpose.msra.mxu0 %v1256
    %1274 = vmatmul.f32.gmra.mxu0 %v1254
    %v1275 = vpop.f32.mrf.mxu0
    %v1276 = vadd.f32 0.0, %v1275
    %1277 = vdwg.mxu0
    %1278 = vrot.lane.b32.xlu0 %v1143, 96
    %v1279 = vpop.permute.xlu0 %1278
    %v1280 = vsel %vm217, %v1143, 0
    %v1282 = vsel %vm217, %v1279, 0
    %1284 = vmatpush.xpose.msra.mxu0 0.0
    %1285 = vmatpush.xpose.msra.mxu0 0.0
    %1286 = vmatpush.xpose.msra.mxu0 0.0
    %1287 = vmatpush.xpose.msra.mxu0 0.0
    %1288 = vmatpush.xpose.msra.mxu0 0.0
    %1289 = vmatpush.xpose.msra.mxu0 0.0
    %1290 = vmatpush.xpose.msra.mxu0 0.0
    %1291 = vmatpush.xpose.msra.mxu0 0.0
    %1292 = vmatpush.xpose.msra.mxu0 0.0
    %1293 = vmatpush.xpose.msra.mxu0 0.0
    %1294 = vmatpush.xpose.msra.mxu0 0.0
    %1295 = vmatpush.xpose.msra.mxu0 0.0
    %1296 = vmatpush.xpose.msra.mxu0 0.0
    %1297 = vmatpush.xpose.msra.mxu0 0.0
    %1298 = vmatpush.xpose.msra.mxu0 0.0
    %1299 = vmatpush.xpose.msra.mxu0 %v1282
    %1300 = vmatmul.f32.gmra.mxu0 %v1280
    %v1301 = vpop.f32.mrf.mxu0
    %v1302 = vadd.f32 0.0, %v1301
    %1303 = vdwg.mxu0
    %1304 = vrot.lane.b32.xlu0 %v1145, 96
    %v1305 = vpop.permute.xlu0 %1304
    %v1306 = vsel %vm217, %v1145, 0
    %v1308 = vsel %vm217, %v1305, 0
    %1310 = vmatpush.xpose.msra.mxu0 0.0
    %1311 = vmatpush.xpose.msra.mxu0 0.0
    %1312 = vmatpush.xpose.msra.mxu0 0.0
    %1313 = vmatpush.xpose.msra.mxu0 0.0
    %1314 = vmatpush.xpose.msra.mxu0 0.0
    %1315 = vmatpush.xpose.msra.mxu0 0.0
    %1316 = vmatpush.xpose.msra.mxu0 0.0
    %1317 = vmatpush.xpose.msra.mxu0 0.0
    %1318 = vmatpush.xpose.msra.mxu0 0.0
    %1319 = vmatpush.xpose.msra.mxu0 0.0
    %1320 = vmatpush.xpose.msra.mxu0 0.0
    %1321 = vmatpush.xpose.msra.mxu0 0.0
    %1322 = vmatpush.xpose.msra.mxu0 0.0
    %1323 = vmatpush.xpose.msra.mxu0 0.0
    %1324 = vmatpush.xpose.msra.mxu0 0.0
    %1325 = vmatpush.xpose.msra.mxu0 %v1308
    %1326 = vmatmul.f32.gmra.mxu0 %v1306
    %v1327 = vpop.f32.mrf.mxu0
    %v1328 = vadd.f32 0.0, %v1327
    %1329 = vdwg.mxu0
    %1330 = vrot.lane.b32.xlu0 %v1147, 96
    %v1331 = vpop.permute.xlu0 %1330
    %v1332 = vsel %vm217, %v1147, 0
    %v1334 = vsel %vm217, %v1331, 0
    %1336 = vmatpush.xpose.msra.mxu0 0.0
    %1337 = vmatpush.xpose.msra.mxu0 0.0
    %1338 = vmatpush.xpose.msra.mxu0 0.0
    %1339 = vmatpush.xpose.msra.mxu0 0.0
    %1340 = vmatpush.xpose.msra.mxu0 0.0
    %1341 = vmatpush.xpose.msra.mxu0 0.0
    %1342 = vmatpush.xpose.msra.mxu0 0.0
    %1343 = vmatpush.xpose.msra.mxu0 0.0
    %1344 = vmatpush.xpose.msra.mxu0 0.0
    %1345 = vmatpush.xpose.msra.mxu0 0.0
    %1346 = vmatpush.xpose.msra.mxu0 0.0
    %1347 = vmatpush.xpose.msra.mxu0 0.0
    %1348 = vmatpush.xpose.msra.mxu0 0.0
    %1349 = vmatpush.xpose.msra.mxu0 0.0
    %1350 = vmatpush.xpose.msra.mxu0 0.0
    %1351 = vmatpush.xpose.msra.mxu0 %v1334
    %1352 = vmatmul.f32.gmra.mxu0 %v1332
    %v1353 = vpop.f32.mrf.mxu0
    %v1354 = vadd.f32 0.0, %v1353
    %1355 = vdwg.mxu0
    %v1356 = vsel %vm217, %v1172, -inf
    %1357 = vmax.xlane.f32.xlu0 %v1356
    %v1358 = vpop.xlane.xlu0 %1357
    %v1359 = vsel %vm217, %v1198, -inf
    %1360 = vmax.xlane.f32.xlu0 %v1359
    %v1361 = vpop.xlane.xlu0 %1360
    %v1362 = vsel %vm217, %v1224, -inf
    %1363 = vmax.xlane.f32.xlu0 %v1362
    %v1364 = vpop.xlane.xlu0 %1363
    %v1365 = vsel %vm217, %v1250, -inf
    %1366 = vmax.xlane.f32.xlu0 %v1365
    %v1367 = vpop.xlane.xlu0 %1366
    %v1368 = vsel %vm217, %v1276, -inf
    %1369 = vmax.xlane.f32.xlu0 %v1368
    %v1370 = vpop.xlane.xlu0 %1369
    %v1371 = vsel %vm217, %v1302, -inf
    %1372 = vmax.xlane.f32.xlu0 %v1371
    %v1373 = vpop.xlane.xlu0 %1372
    %v1374 = vsel %vm217, %v1328, -inf
    %1375 = vmax.xlane.f32.xlu0 %v1374
    %v1376 = vpop.xlane.xlu0 %1375
    %v1377 = vsel %vm217, %v1354, -inf
    %1378 = vmax.xlane.f32.xlu0 %v1377
    %v1379 = vpop.xlane.xlu0 %1378
    %v1380 = vsub.f32 %v1172, %v1358
    %v1381 = vsub.f32 %v1198, %v1361
    %v1382 = vsub.f32 %v1224, %v1364
    %v1383 = vsub.f32 %v1250, %v1367
    %v1384 = vsub.f32 %v1276, %v1370
    %v1385 = vsub.f32 %v1302, %v1373
    %v1386 = vsub.f32 %v1328, %v1376
    %v1387 = vsub.f32 %v1354, %v1379
    %v1388 = vmul.f32 %v1380, 1.442695
    %v1389 = vpow.pop %v1388
    %v1390 = vmul.f32 %v1381, 1.442695
    %v1391 = vpow.pop %v1390
    %v1392 = vmul.f32 %v1382, 1.442695
    %v1393 = vpow.pop %v1392
    %v1394 = vmul.f32 %v1383, 1.442695
    %v1395 = vpow.pop %v1394
    %v1396 = vmul.f32 %v1384, 1.442695
    %v1397 = vpow.pop %v1396
    %v1398 = vmul.f32 %v1385, 1.442695
    %v1399 = vpow.pop %v1398
    %v1400 = vmul.f32 %v1386, 1.442695
    %v1401 = vpow.pop %v1400
    %v1402 = vmul.f32 %v1387, 1.442695
    %v1403 = vpow.pop %v1402
    %v1404 = vsel %vm217, %v1389, 0.0
    %1405 = vadd.xlane.f32.xlu0 %v1404
    %v1406 = vpop.xlane.xlu0 %1405
    %v1407 = vsel %vm217, %v1391, 0.0
    %1408 = vadd.xlane.f32.xlu0 %v1407
    %v1409 = vpop.xlane.xlu0 %1408
    %v1410 = vsel %vm217, %v1393, 0.0
    %1411 = vadd.xlane.f32.xlu0 %v1410
    %v1412 = vpop.xlane.xlu0 %1411
    %v1413 = vsel %vm217, %v1395, 0.0
    %1414 = vadd.xlane.f32.xlu0 %v1413
    %v1415 = vpop.xlane.xlu0 %1414
    %v1416 = vsel %vm217, %v1397, 0.0
    %1417 = vadd.xlane.f32.xlu0 %v1416
    %v1418 = vpop.xlane.xlu0 %1417
    %v1419 = vsel %vm217, %v1399, 0.0
    %1420 = vadd.xlane.f32.xlu0 %v1419
    %v1421 = vpop.xlane.xlu0 %1420
    %v1422 = vsel %vm217, %v1401, 0.0
    %1423 = vadd.xlane.f32.xlu0 %v1422
    %v1424 = vpop.xlane.xlu0 %1423
    %v1425 = vsel %vm217, %v1403, 0.0
    %1426 = vadd.xlane.f32.xlu0 %v1425
    %v1427 = vpop.xlane.xlu0 %1426
    %v1428 = vrcp.pop %v1406
    %v1429 = vmul.f32 %v1406, %v1428
    %v1430 = vsub.f32 1.0, %v1429
    %v1431 = vmul.f32 %v1428, %v1430
    %v1432 = vadd.f32 %v1428, %v1431
    %vm1433 = vweird.f32 %v1406
    %vm1434 = vweird.f32 %v1428
    %vm1435 = vmor %vm1433, %vm1434
    %v1436 = vsel %vm1435, %v1428, %v1432
    %v1437 = vand.u32 2147483647, %v1406
    %vm1438 = vcmp.eq.f32.partialorder %v1437, 8.507059e+37
    %v1439 = vand.u32 %v1406, 2147483648
    %v1440 = vor.u32 1.1754944e-38, %v1439
    %v1441 = vsel %vm1438, %v1440, %v1436
    %v1442 = vmul.f32 %v1389, %v1441
    %v1443 = vrcp.pop %v1409
    %v1444 = vmul.f32 %v1409, %v1443
    %v1445 = vsub.f32 1.0, %v1444
    %v1446 = vmul.f32 %v1443, %v1445
    %v1447 = vadd.f32 %v1443, %v1446
    %vm1448 = vweird.f32 %v1409
    %vm1449 = vweird.f32 %v1443
    %vm1450 = vmor %vm1448, %vm1449
    %v1451 = vsel %vm1450, %v1443, %v1447
    %v1452 = vand.u32 2147483647, %v1409
    %vm1453 = vcmp.eq.f32.partialorder %v1452, 8.507059e+37
    %v1454 = vand.u32 %v1409, 2147483648
    %v1455 = vor.u32 1.1754944e-38, %v1454
    %v1456 = vsel %vm1453, %v1455, %v1451
    %v1457 = vmul.f32 %v1391, %v1456
    %v1458 = vrcp.pop %v1412
    %v1459 = vmul.f32 %v1412, %v1458
    %v1460 = vsub.f32 1.0, %v1459
    %v1461 = vmul.f32 %v1458, %v1460
    %v1462 = vadd.f32 %v1458, %v1461
    %vm1463 = vweird.f32 %v1412
    %vm1464 = vweird.f32 %v1458
    %vm1465 = vmor %vm1463, %vm1464
    %v1466 = vsel %vm1465, %v1458, %v1462
    %v1467 = vand.u32 2147483647, %v1412
    %vm1468 = vcmp.eq.f32.partialorder %v1467, 8.507059e+37
    %v1469 = vand.u32 %v1412, 2147483648
    %v1470 = vor.u32 1.1754944e-38, %v1469
    %v1471 = vsel %vm1468, %v1470, %v1466
    %v1472 = vmul.f32 %v1393, %v1471
    %v1473 = vrcp.pop %v1415
    %v1474 = vmul.f32 %v1415, %v1473
    %v1475 = vsub.f32 1.0, %v1474
    %v1476 = vmul.f32 %v1473, %v1475
    %v1477 = vadd.f32 %v1473, %v1476
    %vm1478 = vweird.f32 %v1415
    %vm1479 = vweird.f32 %v1473
    %vm1480 = vmor %vm1478, %vm1479
    %v1481 = vsel %vm1480, %v1473, %v1477
    %v1482 = vand.u32 2147483647, %v1415
    %vm1483 = vcmp.eq.f32.partialorder %v1482, 8.507059e+37
    %v1484 = vand.u32 %v1415, 2147483648
    %v1485 = vor.u32 1.1754944e-38, %v1484
    %v1486 = vsel %vm1483, %v1485, %v1481
    %v1487 = vmul.f32 %v1395, %v1486
    %v1488 = vrcp.pop %v1418
    %v1489 = vmul.f32 %v1418, %v1488
    %v1490 = vsub.f32 1.0, %v1489
    %v1491 = vmul.f32 %v1488, %v1490
    %v1492 = vadd.f32 %v1488, %v1491
    %vm1493 = vweird.f32 %v1418
    %vm1494 = vweird.f32 %v1488
    %vm1495 = vmor %vm1493, %vm1494
    %v1496 = vsel %vm1495, %v1488, %v1492
    %v1497 = vand.u32 2147483647, %v1418
    %vm1498 = vcmp.eq.f32.partialorder %v1497, 8.507059e+37
    %v1499 = vand.u32 %v1418, 2147483648
    %v1500 = vor.u32 1.1754944e-38, %v1499
    %v1501 = vsel %vm1498, %v1500, %v1496
    %v1502 = vmul.f32 %v1397, %v1501
    %v1503 = vrcp.pop %v1421
    %v1504 = vmul.f32 %v1421, %v1503
    %v1505 = vsub.f32 1.0, %v1504
    %v1506 = vmul.f32 %v1503, %v1505
    %v1507 = vadd.f32 %v1503, %v1506
    %vm1508 = vweird.f32 %v1421
    %vm1509 = vweird.f32 %v1503
    %vm1510 = vmor %vm1508, %vm1509
    %v1511 = vsel %vm1510, %v1503, %v1507
    %v1512 = vand.u32 2147483647, %v1421
    %vm1513 = vcmp.eq.f32.partialorder %v1512, 8.507059e+37
    %v1514 = vand.u32 %v1421, 2147483648
    %v1515 = vor.u32 1.1754944e-38, %v1514
    %v1516 = vsel %vm1513, %v1515, %v1511
    %v1517 = vmul.f32 %v1399, %v1516
    %v1518 = vrcp.pop %v1424
    %v1519 = vmul.f32 %v1424, %v1518
    %v1520 = vsub.f32 1.0, %v1519
    %v1521 = vmul.f32 %v1518, %v1520
    %v1522 = vadd.f32 %v1518, %v1521
    %vm1523 = vweird.f32 %v1424
    %vm1524 = vweird.f32 %v1518
    %vm1525 = vmor %vm1523, %vm1524
    %v1526 = vsel %vm1525, %v1518, %v1522
    %v1527 = vand.u32 2147483647, %v1424
    %vm1528 = vcmp.eq.f32.partialorder %v1527, 8.507059e+37
    %v1529 = vand.u32 %v1424, 2147483648
    %v1530 = vor.u32 1.1754944e-38, %v1529
    %v1531 = vsel %vm1528, %v1530, %v1526
    %v1532 = vmul.f32 %v1401, %v1531
    %v1533 = vrcp.pop %v1427
    %v1534 = vmul.f32 %v1427, %v1533
    %v1535 = vsub.f32 1.0, %v1534
    %v1536 = vmul.f32 %v1533, %v1535
    %v1537 = vadd.f32 %v1533, %v1536
    %vm1538 = vweird.f32 %v1427
    %vm1539 = vweird.f32 %v1533
    %vm1540 = vmor %vm1538, %vm1539
    %v1541 = vsel %vm1540, %v1533, %v1537
    %v1542 = vand.u32 2147483647, %v1427
    %vm1543 = vcmp.eq.f32.partialorder %v1542, 8.507059e+37
    %v1544 = vand.u32 %v1427, 2147483648
    %v1545 = vor.u32 1.1754944e-38, %v1544
    %v1546 = vsel %vm1543, %v1545, %v1541
    %v1547 = vmul.f32 %v1403, %v1546
    %1548 = vrot.lane.b32.xlu0 %v1129, 64
    %v1549 = vpop.permute.xlu0 %1548
    %v1552 = vsel %vm217, %v1442, 0
    %1554 = vmatpush.msra.mxu0 0.0
    %1555 = vmatpush.msra.mxu0 0.0
    %1556 = vmatpush.msra.mxu0 0.0
    %1557 = vmatpush.msra.mxu0 0.0
    %1558 = vmatpush.msra.mxu0 0.0
    %1559 = vmatpush.msra.mxu0 0.0
    %1560 = vmatpush.msra.mxu0 0.0
    %1561 = vmatpush.msra.mxu0 0.0
    %1562 = vmatpush.msra.mxu0 0.0
    %1563 = vmatpush.msra.mxu0 0.0
    %1564 = vmatpush.msra.mxu0 0.0
    %1565 = vmatpush.msra.mxu0 0.0
    %1566 = vmatpush.msra.mxu0 0.0
    %1567 = vmatpush.msra.mxu0 0.0
    %1568 = vmatpush.msra.mxu0 0.0
    %1569 = vmatpush.msra.mxu0 %v1549
    %1570 = vmatmul.f32.gmra.mxu0 %v1552
    %v1571 = vpop.f32.mrf.mxu0
    %v1572 = vadd.f32 0.0, %v1571
    %1573 = vdwg.mxu0
    %1574 = vrot.lane.b32.xlu0 %v1132, 64
    %v1575 = vpop.permute.xlu0 %1574
    %v1578 = vsel %vm217, %v1457, 0
    %1580 = vmatpush.msra.mxu0 0.0
    %1581 = vmatpush.msra.mxu0 0.0
    %1582 = vmatpush.msra.mxu0 0.0
    %1583 = vmatpush.msra.mxu0 0.0
    %1584 = vmatpush.msra.mxu0 0.0
    %1585 = vmatpush.msra.mxu0 0.0
    %1586 = vmatpush.msra.mxu0 0.0
    %1587 = vmatpush.msra.mxu0 0.0
    %1588 = vmatpush.msra.mxu0 0.0
    %1589 = vmatpush.msra.mxu0 0.0
    %1590 = vmatpush.msra.mxu0 0.0
    %1591 = vmatpush.msra.mxu0 0.0
    %1592 = vmatpush.msra.mxu0 0.0
    %1593 = vmatpush.msra.mxu0 0.0
    %1594 = vmatpush.msra.mxu0 0.0
    %1595 = vmatpush.msra.mxu0 %v1575
    %1596 = vmatmul.f32.gmra.mxu0 %v1578
    %v1597 = vpop.f32.mrf.mxu0
    %v1598 = vadd.f32 0.0, %v1597
    %1599 = vdwg.mxu0
    %1600 = vrot.lane.b32.xlu0 %v1137, 64
    %v1601 = vpop.permute.xlu0 %1600
    %v1604 = vsel %vm217, %v1472, 0
    %1606 = vmatpush.msra.mxu0 0.0
    %1607 = vmatpush.msra.mxu0 0.0
    %1608 = vmatpush.msra.mxu0 0.0
    %1609 = vmatpush.msra.mxu0 0.0
    %1610 = vmatpush.msra.mxu0 0.0
    %1611 = vmatpush.msra.mxu0 0.0
    %1612 = vmatpush.msra.mxu0 0.0
    %1613 = vmatpush.msra.mxu0 0.0
    %1614 = vmatpush.msra.mxu0 0.0
    %1615 = vmatpush.msra.mxu0 0.0
    %1616 = vmatpush.msra.mxu0 0.0
    %1617 = vmatpush.msra.mxu0 0.0
    %1618 = vmatpush.msra.mxu0 0.0
    %1619 = vmatpush.msra.mxu0 0.0
    %1620 = vmatpush.msra.mxu0 0.0
    %1621 = vmatpush.msra.mxu0 %v1601
    %1622 = vmatmul.f32.gmra.mxu0 %v1604
    %v1623 = vpop.f32.mrf.mxu0
    %v1624 = vadd.f32 0.0, %v1623
    %1625 = vdwg.mxu0
    %1626 = vrot.lane.b32.xlu0 %v1139, 64
    %v1627 = vpop.permute.xlu0 %1626
    %v1630 = vsel %vm217, %v1487, 0
    %1632 = vmatpush.msra.mxu0 0.0
    %1633 = vmatpush.msra.mxu0 0.0
    %1634 = vmatpush.msra.mxu0 0.0
    %1635 = vmatpush.msra.mxu0 0.0
    %1636 = vmatpush.msra.mxu0 0.0
    %1637 = vmatpush.msra.mxu0 0.0
    %1638 = vmatpush.msra.mxu0 0.0
    %1639 = vmatpush.msra.mxu0 0.0
    %1640 = vmatpush.msra.mxu0 0.0
    %1641 = vmatpush.msra.mxu0 0.0
    %1642 = vmatpush.msra.mxu0 0.0
    %1643 = vmatpush.msra.mxu0 0.0
    %1644 = vmatpush.msra.mxu0 0.0
    %1645 = vmatpush.msra.mxu0 0.0
    %1646 = vmatpush.msra.mxu0 0.0
    %1647 = vmatpush.msra.mxu0 %v1627
    %1648 = vmatmul.f32.gmra.mxu0 %v1630
    %v1649 = vpop.f32.mrf.mxu0
    %v1650 = vadd.f32 0.0, %v1649
    %1651 = vdwg.mxu0
    %1652 = vrot.lane.b32.xlu0 %v1141, 64
    %v1653 = vpop.permute.xlu0 %1652
    %v1656 = vsel %vm217, %v1502, 0
    %1658 = vmatpush.msra.mxu0 0.0
    %1659 = vmatpush.msra.mxu0 0.0
    %1660 = vmatpush.msra.mxu0 0.0
    %1661 = vmatpush.msra.mxu0 0.0
    %1662 = vmatpush.msra.mxu0 0.0
    %1663 = vmatpush.msra.mxu0 0.0
    %1664 = vmatpush.msra.mxu0 0.0
    %1665 = vmatpush.msra.mxu0 0.0
    %1666 = vmatpush.msra.mxu0 0.0
    %1667 = vmatpush.msra.mxu0 0.0
    %1668 = vmatpush.msra.mxu0 0.0
    %1669 = vmatpush.msra.mxu0 0.0
    %1670 = vmatpush.msra.mxu0 0.0
    %1671 = vmatpush.msra.mxu0 0.0
    %1672 = vmatpush.msra.mxu0 0.0
    %1673 = vmatpush.msra.mxu0 %v1653
    %1674 = vmatmul.f32.gmra.mxu0 %v1656
    %v1675 = vpop.f32.mrf.mxu0
    %v1676 = vadd.f32 0.0, %v1675
    %1677 = vdwg.mxu0
    %1678 = vrot.lane.b32.xlu0 %v1143, 64
    %v1679 = vpop.permute.xlu0 %1678
    %v1682 = vsel %vm217, %v1517, 0
    %1684 = vmatpush.msra.mxu0 0.0
    %1685 = vmatpush.msra.mxu0 0.0
    %1686 = vmatpush.msra.mxu0 0.0
    %1687 = vmatpush.msra.mxu0 0.0
    %1688 = vmatpush.msra.mxu0 0.0
    %1689 = vmatpush.msra.mxu0 0.0
    %1690 = vmatpush.msra.mxu0 0.0
    %1691 = vmatpush.msra.mxu0 0.0
    %1692 = vmatpush.msra.mxu0 0.0
    %1693 = vmatpush.msra.mxu0 0.0
    %1694 = vmatpush.msra.mxu0 0.0
    %1695 = vmatpush.msra.mxu0 0.0
    %1696 = vmatpush.msra.mxu0 0.0
    %1697 = vmatpush.msra.mxu0 0.0
    %1698 = vmatpush.msra.mxu0 0.0
    %1699 = vmatpush.msra.mxu0 %v1679
    %1700 = vmatmul.f32.gmra.mxu0 %v1682
    %v1701 = vpop.f32.mrf.mxu0
    %v1702 = vadd.f32 0.0, %v1701
    %1703 = vdwg.mxu0
    %1704 = vrot.lane.b32.xlu0 %v1145, 64
    %v1705 = vpop.permute.xlu0 %1704
    %v1708 = vsel %vm217, %v1532, 0
    %1710 = vmatpush.msra.mxu0 0.0
    %1711 = vmatpush.msra.mxu0 0.0
    %1712 = vmatpush.msra.mxu0 0.0
    %1713 = vmatpush.msra.mxu0 0.0
    %1714 = vmatpush.msra.mxu0 0.0
    %1715 = vmatpush.msra.mxu0 0.0
    %1716 = vmatpush.msra.mxu0 0.0
    %1717 = vmatpush.msra.mxu0 0.0
    %1718 = vmatpush.msra.mxu0 0.0
    %1719 = vmatpush.msra.mxu0 0.0
    %1720 = vmatpush.msra.mxu0 0.0
    %1721 = vmatpush.msra.mxu0 0.0
    %1722 = vmatpush.msra.mxu0 0.0
    %1723 = vmatpush.msra.mxu0 0.0
    %1724 = vmatpush.msra.mxu0 0.0
    %1725 = vmatpush.msra.mxu0 %v1705
    %1726 = vmatmul.f32.gmra.mxu0 %v1708
    %v1727 = vpop.f32.mrf.mxu0
    %v1728 = vadd.f32 0.0, %v1727
    %1729 = vdwg.mxu0
    %1730 = vrot.lane.b32.xlu0 %v1147, 64
    %v1731 = vpop.permute.xlu0 %1730
    %v1734 = vsel %vm217, %v1547, 0
    %1736 = vmatpush.msra.mxu0 0.0
    %1737 = vmatpush.msra.mxu0 0.0
    %1738 = vmatpush.msra.mxu0 0.0
    %1739 = vmatpush.msra.mxu0 0.0
    %1740 = vmatpush.msra.mxu0 0.0
    %1741 = vmatpush.msra.mxu0 0.0
    %1742 = vmatpush.msra.mxu0 0.0
    %1743 = vmatpush.msra.mxu0 0.0
    %1744 = vmatpush.msra.mxu0 0.0
    %1745 = vmatpush.msra.mxu0 0.0
    %1746 = vmatpush.msra.mxu0 0.0
    %1747 = vmatpush.msra.mxu0 0.0
    %1748 = vmatpush.msra.mxu0 0.0
    %1749 = vmatpush.msra.mxu0 0.0
    %1750 = vmatpush.msra.mxu0 0.0
    %1751 = vmatpush.msra.mxu0 %v1731
    %1752 = vmatmul.f32.gmra.mxu0 %v1734
    %v1753 = vpop.f32.mrf.mxu0
    %v1754 = vadd.f32 0.0, %v1753
    %1755 = vdwg.mxu0
    %1758 = vrot.lane.b32.xlu0 %v1624, 8
    %v1759 = vpop.permute.xlu0 %1758
    %1760 = vrot.lane.b32.xlu0 %v1650, 8
    %v1761 = vpop.permute.xlu0 %1760
    %1766 = vrot.lane.b32.xlu0 %v1676, 16
    %v1767 = vpop.permute.xlu0 %1766
    %1768 = vrot.lane.b32.xlu0 %v1702, 16
    %v1769 = vpop.permute.xlu0 %1768
    %1774 = vrot.lane.b32.xlu0 %v1728, 24
    %v1775 = vpop.permute.xlu0 %1774
    %1776 = vrot.lane.b32.xlu0 %v1754, 24
    %v1777 = vpop.permute.xlu0 %1776
    %v1780 = vsel %vm217, %v1572, %v1759
    %v1781 = vsel %vm217, %v1598, %v1761
    %v1782 = vsel %vm850, %v1780, %v1767
    %v1783 = vsel %vm850, %v1781, %v1769
    %v1784 = vsel %vm853, %v1782, %v1775
    %v1785 = vsel %vm853, %v1783, %v1777
    %v1787 = vperm.slane %v1031, 0
    %v1790 = vsel %vm171, %v1784, 0
    %v1793 = vsel %vm171, %v1785, 0
    %1795 = vmatpush.msra.mxu0 0.0
    %1796 = vmatpush.msra.mxu0 0.0
    %1797 = vmatpush.msra.mxu0 0.0
    %1798 = vmatpush.msra.mxu0 0.0
    %1799 = vmatpush.msra.mxu0 0.0
    %1800 = vmatpush.msra.mxu0 0.0
    %1801 = vmatpush.msra.mxu0 0.0
    %1802 = vmatpush.msra.mxu0 0.0
    %1803 = vmatpush.msra.mxu0 0.0
    %1804 = vmatpush.msra.mxu0 0.0
    %1805 = vmatpush.msra.mxu0 0.0
    %1806 = vmatpush.msra.mxu0 0.0
    %1807 = vmatpush.msra.mxu0 %v1030
    %1808 = vmatpush.msra.mxu0 %v1029
    %1809 = vmatpush.msra.mxu0 %v1028
    %1810 = vmatpush.msra.mxu0 %v1027
    %1811 = vmatmul.f32.gmra.mxu0 %v1790
    %v1812 = vpop.f32.mrf.mxu0
    %v1813 = vadd.f32 %v1787, %v1812
    %1814 = vmatmul.f32.gmra.mxu0 %v1793
    %v1815 = vpop.f32.mrf.mxu0
    %v1816 = vadd.f32 %v1787, %v1815
    %1817 = vdwg.mxu0
    %v1818 = vadd.f32 %v1018, %v1813
    %v1819 = vadd.f32 %v1019, %v1816
    %v1820 = vsel %vm171, %v1818, 0.0
    %1821 = vadd.xlane.f32.xlu0 %v1820
    %v1822 = vpop.xlane.xlu0 %1821
    %v1823 = vsel %vm171, %v1819, 0.0
    %1824 = vadd.xlane.f32.xlu0 %v1823
    %v1825 = vpop.xlane.xlu0 %1824
    %v1826 = vmul.f32 %v1822, %v902
    %v1827 = vmul.f32 %v1825, %v902
    %v1828 = vsub.f32 %v1818, %v1826
    %v1829 = vsub.f32 %v1819, %v1827
    %v1830 = vmul.f32 %v1828, %v1828
    %v1831 = vmul.f32 %v1829, %v1829
    %v1832 = vsel %vm171, %v1830, 0.0
    %1833 = vadd.xlane.f32.xlu0 %v1832
    %v1834 = vpop.xlane.xlu0 %1833
    %v1835 = vsel %vm171, %v1831, 0.0
    %1836 = vadd.xlane.f32.xlu0 %v1835
    %v1837 = vpop.xlane.xlu0 %1836
    %v1838 = vmul.f32 %v1834, %v902
    %v1839 = vmul.f32 %v1837, %v902
    %v1840 = vadd.f32 %v1838, 1e-05
    %v1841 = vadd.f32 %v1839, 1e-05
    %v1842 = vrsqrt.pop %v1840
    %v1843 = vmul.f32 %v1842, %v1840
    %v1844 = vmul.f32 %v1843, %v1842
    %v1845 = vmul.f32 0.5, %v1844
    %v1846 = vsub.f32 1.5, %v1845
    %v1847 = vmul.f32 %v1842, %v1846
    %vm1848 = vweird.f32 %v1840
    %vm1849 = vweird.f32 %v1842
    %vm1850 = vmor %vm1848, %vm1849
    %v1851 = vsel %vm1850, %v1842, %v1847
    %v1852 = vrsqrt.pop %v1841
    %v1853 = vmul.f32 %v1852, %v1841
    %v1854 = vmul.f32 %v1853, %v1852
    %v1855 = vmul.f32 0.5, %v1854
    %v1856 = vsub.f32 1.5, %v1855
    %v1857 = vmul.f32 %v1852, %v1856
    %vm1858 = vweird.f32 %v1841
    %vm1859 = vweird.f32 %v1852
    %vm1860 = vmor %vm1858, %vm1859
    %v1861 = vsel %vm1860, %v1852, %v1857
    %v1862 = vmul.f32 %v1828, %v1851
    %v1863 = vmul.f32 %v1829, %v1861
    %v1865 = vperm.slane %v1032, 0
    %v1867 = vmul.f32 %v1862, %v1865
    %v1868 = vmul.f32 %v1863, %v1865
    %v1870 = vperm.slane %v1033, 0
    %v1872 = vadd.f32 %v1867, %v1870
    %v1873 = vadd.f32 %v1868, %v1870
    %v1875 = vperm.slane %v1038, 0
    %v1878 = vsel %vm171, %v1872, 0
    %v1881 = vsel %vm171, %v1873, 0
    %1883 = vmatpush.msra.mxu0 0.0
    %1884 = vmatpush.msra.mxu0 0.0
    %1885 = vmatpush.msra.mxu0 0.0
    %1886 = vmatpush.msra.mxu0 0.0
    %1887 = vmatpush.msra.mxu0 0.0
    %1888 = vmatpush.msra.mxu0 0.0
    %1889 = vmatpush.msra.mxu0 0.0
    %1890 = vmatpush.msra.mxu0 0.0
    %1891 = vmatpush.msra.mxu0 0.0
    %1892 = vmatpush.msra.mxu0 0.0
    %1893 = vmatpush.msra.mxu0 0.0
    %1894 = vmatpush.msra.mxu0 0.0
    %1895 = vmatpush.msra.mxu0 %v1037
    %1896 = vmatpush.msra.mxu0 %v1036
    %1897 = vmatpush.msra.mxu0 %v1035
    %1898 = vmatpush.msra.mxu0 %v1034
    %1899 = vmatmul.f32.gmra.mxu0 %v1878
    %v1900 = vpop.f32.mrf.mxu0
    %v1901 = vadd.f32 %v1875, %v1900
    %1902 = vmatmul.f32.gmra.mxu0 %v1881
    %v1903 = vpop.f32.mrf.mxu0
    %v1904 = vadd.f32 %v1875, %v1903
    %1905 = vdwg.mxu0
    %v1906 = vmax.f32 %v1901, 0.0
    %v1907 = vmax.f32 %v1904, 0.0
    %v1909 = vperm.slane %v1047, 0
    %v1912 = vsel %vm988, %v1906, 0
    %v1915 = vsel %vm988, %v1907, 0
    %1917 = vmatpush.msra.mxu0 0.0
    %1918 = vmatpush.msra.mxu0 0.0
    %1919 = vmatpush.msra.mxu0 0.0
    %1920 = vmatpush.msra.mxu0 0.0
    %1921 = vmatpush.msra.mxu0 0.0
    %1922 = vmatpush.msra.mxu0 0.0
    %1923 = vmatpush.msra.mxu0 0.0
    %1924 = vmatpush.msra.mxu0 0.0
    %1925 = vmatpush.msra.mxu0 %v1046
    %1926 = vmatpush.msra.mxu0 %v1045
    %1927 = vmatpush.msra.mxu0 %v1044
    %1928 = vmatpush.msra.mxu0 %v1043
    %1929 = vmatpush.msra.mxu0 %v1042
    %1930 = vmatpush.msra.mxu0 %v1041
    %1931 = vmatpush.msra.mxu0 %v1040
    %1932 = vmatpush.msra.mxu0 %v1039
    %1933 = vmatmul.f32.gmra.mxu0 %v1912
    %v1934 = vpop.f32.mrf.mxu0
    %v1935 = vadd.f32 %v1909, %v1934
    %1936 = vmatmul.f32.gmra.mxu0 %v1915
    %v1937 = vpop.f32.mrf.mxu0
    %v1938 = vadd.f32 %v1909, %v1937
    %1939 = vdwg.mxu0
    %v1940 = vadd.f32 %v1818, %v1935
    %v1941 = vadd.f32 %v1819, %v1938
    %1942 = vst.msk [vmem:[#allocation10] sm:$0xff] %vm171, %v1940
    %1943 = vst.msk [vmem:[#allocation10 + $0x8] sm:$0xff] %vm171, %v1941
    // Predicated region
    $region118: #{tpu_custom_call.1} parent=1 // pred_check
      _
    $region119: #{tpu_custom_call.1} parent=1 // pred_check_branch
      %1945 = sbr.rel (0) target = $region121
    $region120: #{tpu_custom_call.1} parent=1 // pred_region
      %1947 = vsyncadd [#allocation4], 0
      %s1948 = sshll.u32 [#allocation10], 4
      %s1949 = int_to_ptr.vmem [resolvable:$true] %s1948
      %s1950 = sshll.u32 %s25, 4
      %s1951 = int_to_ptr.hbm [resolvable:$true] %s1950
      %1956 = dma.vmem_to_hbm [thread:$0]  %s1949, 256, %s1951, [#allocation4], 128, 128, 8
    $region121: #{tpu_custom_call.1} parent=1 // pred_fallthru
      _
    // Predicated region
    $region122: #{tpu_custom_call.1} parent=1 // pred_check
      _
    $region123: #{tpu_custom_call.1} parent=1 // pred_check_branch
      %1958 = sbr.rel (0) target = $region125
    $region124: #{tpu_custom_call.1} parent=1 // pred_region
      %1960 = dma.done [#allocation4], 256
    $region125: #{tpu_custom_call.1} parent=1 // pred_fallthru
      _
    %1961 = vsyncpa [#allocation3], 1
    %1962 = vsyncpa [#allocation6], 1
    %1963 = vsyncpa [#allocation9], 1
    %1964 = vsyncpa [#allocation4], 1

// kernel: tpu_custom_call.1
$region0: #{tpu_custom_call.1}
  #allocation0 [shape = 'u32[]', space=smem, size = 0x4, offset = 0x4, fixed_abs, tag = 'smem constant byte address 0x4 - core index']
  #allocation1 [shape = 'u32[72,128]{1,0:T(1,128)}', space=vmem, size = 0x9000, scoped, tag = 'internal scratch']
  %s0 = inlined_call_operand.hbm [shape: f32[2,8,32], index: 0, kind: input, shape index: {}]
  %s1 = inlined_call_operand.hbm [shape: f32[1,32], index: 1, kind: input, shape index: {}]
  %s2 = inlined_call_operand.hbm [shape: f32[1,32], index: 2, kind: input, shape index: {}]
  %s3 = inlined_call_operand.vmem [shape: f32[32,96], index: 3, kind: input, shape index: {}]
  %s4 = inlined_call_operand.vmem [shape: f32[1,96], index: 4, kind: input, shape index: {}]
  %s5 = inlined_call_operand.vmem [shape: f32[32,32], index: 5, kind: input, shape index: {}]
  %s6 = inlined_call_operand.vmem [shape: f32[1,32], index: 6, kind: input, shape index: {}]
  %s7 = inlined_call_operand.vmem [shape: f32[1,32], index: 7, kind: input, shape index: {}]
  %s8 = inlined_call_operand.vmem [shape: f32[1,32], index: 8, kind: input, shape index: {}]
  %s9 = inlined_call_operand.vmem [shape: f32[32,64], index: 9, kind: input, shape index: {}]
  %s10 = inlined_call_operand.vmem [shape: f32[1,64], index: 10, kind: input, shape index: {}]
  %s11 = inlined_call_operand.vmem [shape: f32[64,32], index: 11, kind: input, shape index: {}]
  %s12 = inlined_call_operand.vmem [shape: f32[1,32], index: 12, kind: input, shape index: {}]
  %s13 = inlined_call_operand.vmem [shape: f32[1,32], index: 13, kind: input, shape index: {}]
  %s14 = inlined_call_operand.vmem [shape: f32[1,32], index: 14, kind: input, shape index: {}]
  %s15 = inlined_call_operand.vmem [shape: f32[32,96], index: 15, kind: input, shape index: {}]
  %s16 = inlined_call_operand.vmem [shape: f32[1,96], index: 16, kind: input, shape index: {}]
  %s17 = inlined_call_operand.vmem [shape: f32[32,32], index: 17, kind: input, shape index: {}]
  %s18 = inlined_call_operand.vmem [shape: f32[1,32], index: 18, kind: input, shape index: {}]
  %s19 = inlined_call_operand.vmem [shape: f32[1,32], index: 19, kind: input, shape index: {}]
  %s20 = inlined_call_operand.vmem [shape: f32[1,32], index: 20, kind: input, shape index: {}]
  %s21 = inlined_call_operand.hbm [shape: f32[32,64], index: 21, kind: input, shape index: {}]
  %s22 = inlined_call_operand.vmem [shape: f32[1,64], index: 22, kind: input, shape index: {}]
  %s23 = inlined_call_operand.vmem [shape: f32[64,32], index: 23, kind: input, shape index: {}]
  %s24 = inlined_call_operand.vmem [shape: f32[1,32], index: 24, kind: input, shape index: {}]
  %s25 = inlined_call_operand.hbm [shape: f32[2,8,32], index: 25, kind: output, shape index: {}]
  %s26 = sld [smem:[#allocation0]]
  $region126: #{tpu_custom_call.1} parent=0
    _
  %s28 = ssub.s32 1, %s26
  %s29 = scalar_select 0, %s28, %s26
  $region1: #{tpu_custom_call.1} parent=0
    #allocation2 [shape = 'u8[8192]{0}', space=vmem, size = 0x2000, scoped, tag = 'input window, operand 0, single buffered']
    #allocation3 [shape = 's32[1]{0}', space=sflag, size = 0x4, scoped, tag = 'scoped memory for tpu_custom_call.1']
    #allocation4 [shape = 's32[1]{0}', space=sflag, size = 0x4, scoped, tag = 'scoped memory for tpu_custom_call.1']
    #allocation5 [shape = 'u8[512]{0}', space=vmem, size = 0x400, scoped, tag = 'input window, operand 1, single buffered']
    #allocation6 [shape = 's32[1]{0}', space=sflag, size = 0x4, scoped, tag = 'scoped memory for tpu_custom_call.1']
    #allocation7 [shape = 'u8[512]{0}', space=vmem, size = 0x400, scoped, tag = 'input window, operand 2, single buffered']
    #allocation8 [shape = 'u8[16384]{0}', space=vmem, size = 0x4000, scoped, tag = 'input window, operand 21, single buffered']
    #allocation9 [shape = 's32[1]{0}', space=sflag, size = 0x4, scoped, tag = 'scoped memory for tpu_custom_call.1']
    #allocation10 [shape = 'u8[8192]{0}', space=vmem, size = 0x2000, scoped, tag = 'output window, operand 0, single buffered']
    %30 = vsyncpa [#allocation3], 0
    %31 = vsyncpa [#allocation6], 0
    %32 = vsyncpa [#allocation9], 0
    %33 = vsyncpa [#allocation4], 0
    // Predicated region
    $region2: #{tpu_custom_call.1} parent=1 // pred_check
      _
    $region3: #{tpu_custom_call.1} parent=1 // pred_check_branch
      %35 = sbr.rel (0) target = $region5
    $region4: #{tpu_custom_call.1} parent=1 // pred_region
      %37 = vsyncadd [#allocation3], 0
      %s38 = sshll.u32 %s0, 4
      %s39 = int_to_ptr.hbm [resolvable:$true] %s38
      %s40 = sshll.u32 [#allocation2], 4
      %s41 = int_to_ptr.vmem [resolvable:$true] %s40
      %46 = dma.hbm_to_vmem [thread:$0]  %s39, 256, %s41, [#allocation3], 128, 128, 8
    $region5: #{tpu_custom_call.1} parent=1 // pred_fallthru
      _
    // Predicated region
    $region6: #{tpu_custom_call.1} parent=1 // pred_check
      _
    $region7: #{tpu_custom_call.1} parent=1 // pred_check_branch
      %48 = sbr.rel (0) target = $region9
    $region8: #{tpu_custom_call.1} parent=1 // pred_region
      %50 = vsyncadd [#allocation6], 0
      %s52 = sshll.u32 %s1, 4
      %s53 = int_to_ptr.hbm [resolvable:$true] %s52
      %s54 = sshll.u32 [#allocation5], 4
      %s55 = int_to_ptr.vmem [resolvable:$true] %s54
      %57 = dma.hbm_to_vmem [thread:$0]  %s53, 16, %s55, [#allocation6]
    $region9: #{tpu_custom_call.1} parent=1 // pred_fallthru
      _
    // Predicated region
    $region10: #{tpu_custom_call.1} parent=1 // pred_check
      _
    $region11: #{tpu_custom_call.1} parent=1 // pred_check_branch
      %59 = sbr.rel (0) target = $region13
    $region12: #{tpu_custom_call.1} parent=1 // pred_region
      %61 = vsyncadd [#allocation6], 0
      %s63 = sshll.u32 %s2, 4
      %s64 = int_to_ptr.hbm [resolvable:$true] %s63
      %s65 = sshll.u32 [#allocation7], 4
      %s66 = int_to_ptr.vmem [resolvable:$true] %s65
      %68 = dma.hbm_to_vmem [thread:$0]  %s64, 16, %s66, [#allocation6]
    $region13: #{tpu_custom_call.1} parent=1 // pred_fallthru
      _
    // Predicated region
    $region14: #{tpu_custom_call.1} parent=1 // pred_check
      _
    $region15: #{tpu_custom_call.1} parent=1 // pred_check_branch
      %70 = sbr.rel (0) target = $region17
    $region16: #{tpu_custom_call.1} parent=1 // pred_region
      _
    $region17: #{tpu_custom_call.1} parent=1 // pred_fallthru
      _
    // Predicated region
    $region18: #{tpu_custom_call.1} parent=1 // pred_check
      _
    $region19: #{tpu_custom_call.1} parent=1 // pred_check_branch
      %72 = sbr.rel (0) target = $region21
    $region20: #{tpu_custom_call.1} parent=1 // pred_region
      _
    $region21: #{tpu_custom_call.1} parent=1 // pred_fallthru
      _
    // Predicated region
    $region22: #{tpu_custom_call.1} parent=1 // pred_check
      _
    $region23: #{tpu_custom_call.1} parent=1 // pred_check_branch
      %74 = sbr.rel (0) target = $region25
    $region24: #{tpu_custom_call.1} parent=1 // pred_region
      _
    $region25: #{tpu_custom_call.1} parent=1 // pred_fallthru
      _
    // Predicated region
    $region26: #{tpu_custom_call.1} parent=1 // pred_check
      _
    $region27: #{tpu_custom_call.1} parent=1 // pred_check_branch
      %76 = sbr.rel (0) target = $region29
    $region28: #{tpu_custom_call.1} parent=1 // pred_region
      _
    $region29: #{tpu_custom_call.1} parent=1 // pred_fallthru
      _
    // Predicated region
    $region30: #{tpu_custom_call.1} parent=1 // pred_check
      _
    $region31: #{tpu_custom_call.1} parent=1 // pred_check_branch
      %78 = sbr.rel (0) target = $region33
    $region32: #{tpu_custom_call.1} parent=1 // pred_region
      _
    $region33: #{tpu_custom_call.1} parent=1 // pred_fallthru
      _
    // Predicated region
    $region34: #{tpu_custom_call.1} parent=1 // pred_check
      _
    $region35: #{tpu_custom_call.1} parent=1 // pred_check_branch
      %80 = sbr.rel (0) target = $region37
    $region36: #{tpu_custom_call.1} parent=1 // pred_region
      _
    $region37: #{tpu_custom_call.1} parent=1 // pred_fallthru
      _
    // Predicated region
    $region38: #{tpu_custom_call.1} parent=1 // pred_check
      _
    $region39: #{tpu_custom_call.1} parent=1 // pred_check_branch
      %82 = sbr.rel (0) target = $region41
    $region40: #{tpu_custom_call.1} parent=1 // pred_region
      _
    $region41: #{tpu_custom_call.1} parent=1 // pred_fallthru
      _
    // Predicated region
    $region42: #{tpu_custom_call.1} parent=1 // pred_check
      _
    $region43: #{tpu_custom_call.1} parent=1 // pred_check_branch
      %84 = sbr.rel (0) target = $region45
    $region44: #{tpu_custom_call.1} parent=1 // pred_region
      _
    $region45: #{tpu_custom_call.1} parent=1 // pred_fallthru
      _
    // Predicated region
    $region46: #{tpu_custom_call.1} parent=1 // pred_check
      _
    $region47: #{tpu_custom_call.1} parent=1 // pred_check_branch
      %86 = sbr.rel (0) target = $region49
    $region48: #{tpu_custom_call.1} parent=1 // pred_region
      _
    $region49: #{tpu_custom_call.1} parent=1 // pred_fallthru
      _
    // Predicated region
    $region50: #{tpu_custom_call.1} parent=1 // pred_check
      _
    $region51: #{tpu_custom_call.1} parent=1 // pred_check_branch
      %88 = sbr.rel (0) target = $region53
    $region52: #{tpu_custom_call.1} parent=1 // pred_region
      _
    $region53: #{tpu_custom_call.1} parent=1 // pred_fallthru
      _
    // Predicated region
    $region54: #{tpu_custom_call.1} parent=1 // pred_check
      _
    $region55: #{tpu_custom_call.1} parent=1 // pred_check_branch
      %90 = sbr.rel (0) target = $region57
    $region56: #{tpu_custom_call.1} parent=1 // pred_region
      _
    $region57: #{tpu_custom_call.1} parent=1 // pred_fallthru
      _
    // Predicated region
    $region58: #{tpu_custom_call.1} parent=1 // pred_check
      _
    $region59: #{tpu_custom_call.1} parent=1 // pred_check_branch
      %92 = sbr.rel (0) target = $region61
    $region60: #{tpu_custom_call.1} parent=1 // pred_region
      _
    $region61: #{tpu_custom_call.1} parent=1 // pred_fallthru
      _
    // Predicated region
    $region62: #{tpu_custom_call.1} parent=1 // pred_check
      _
    $region63: #{tpu_custom_call.1} parent=1 // pred_check_branch
      %94 = sbr.rel (0) target = $region65
    $region64: #{tpu_custom_call.1} parent=1 // pred_region
      _
    $region65: #{tpu_custom_call.1} parent=1 // pred_fallthru
      _
    // Predicated region
    $region66: #{tpu_custom_call.1} parent=1 // pred_check
      _
    $region67: #{tpu_custom_call.1} parent=1 // pred_check_branch
      %96 = sbr.rel (0) target = $region69
    $region68: #{tpu_custom_call.1} parent=1 // pred_region
      _
    $region69: #{tpu_custom_call.1} parent=1 // pred_fallthru
      _
    // Predicated region
    $region70: #{tpu_custom_call.1} parent=1 // pred_check
      _
    $region71: #{tpu_custom_call.1} parent=1 // pred_check_branch
      %98 = sbr.rel (0) target = $region73
    $region72: #{tpu_custom_call.1} parent=1 // pred_region
      _
    $region73: #{tpu_custom_call.1} parent=1 // pred_fallthru
      _
    // Predicated region
    $region74: #{tpu_custom_call.1} parent=1 // pred_check
      _
    $region75: #{tpu_custom_call.1} parent=1 // pred_check_branch
      %100 = sbr.rel (0) target = $region77
    $region76: #{tpu_custom_call.1} parent=1 // pred_region
      _
    $region77: #{tpu_custom_call.1} parent=1 // pred_fallthru
      _
    // Predicated region
    $region78: #{tpu_custom_call.1} parent=1 // pred_check
      _
    $region79: #{tpu_custom_call.1} parent=1 // pred_check_branch
      %102 = sbr.rel (0) target = $region81
    $region80: #{tpu_custom_call.1} parent=1 // pred_region
      _
    $region81: #{tpu_custom_call.1} parent=1 // pred_fallthru
      _
    // Predicated region
    $region82: #{tpu_custom_call.1} parent=1 // pred_check
      _
    $region83: #{tpu_custom_call.1} parent=1 // pred_check_branch
      %104 = sbr.rel (0) target = $region85
    $region84: #{tpu_custom_call.1} parent=1 // pred_region
      _
    $region85: #{tpu_custom_call.1} parent=1 // pred_fallthru
      _
    // Predicated region
    $region86: #{tpu_custom_call.1} parent=1 // pred_check
      _
    $region87: #{tpu_custom_call.1} parent=1 // pred_check_branch
      %106 = sbr.rel (0) target = $region89
    $region88: #{tpu_custom_call.1} parent=1 // pred_region
      %108 = vsyncadd [#allocation9], 0
      %s109 = sshll.u32 %s21, 4
      %s110 = int_to_ptr.hbm [resolvable:$true] %s109
      %s111 = sshll.u32 [#allocation8], 4
      %s112 = int_to_ptr.vmem [resolvable:$true] %s111
      %117 = dma.hbm_to_vmem [thread:$0]  %s110, 512, %s112, [#allocation9], 128, 128, 8
    $region89: #{tpu_custom_call.1} parent=1 // pred_fallthru
      _
    // Predicated region
    $region90: #{tpu_custom_call.1} parent=1 // pred_check
      _
    $region91: #{tpu_custom_call.1} parent=1 // pred_check_branch
      %119 = sbr.rel (0) target = $region93
    $region92: #{tpu_custom_call.1} parent=1 // pred_region
      _
    $region93: #{tpu_custom_call.1} parent=1 // pred_fallthru
      _
    // Predicated region
    $region94: #{tpu_custom_call.1} parent=1 // pred_check
      _
    $region95: #{tpu_custom_call.1} parent=1 // pred_check_branch
      %121 = sbr.rel (0) target = $region97
    $region96: #{tpu_custom_call.1} parent=1 // pred_region
      _
    $region97: #{tpu_custom_call.1} parent=1 // pred_fallthru
      _
    // Predicated region
    $region98: #{tpu_custom_call.1} parent=1 // pred_check
      _
    $region99: #{tpu_custom_call.1} parent=1 // pred_check_branch
      %123 = sbr.rel (0) target = $region101
    $region100: #{tpu_custom_call.1} parent=1 // pred_region
      _
    $region101: #{tpu_custom_call.1} parent=1 // pred_fallthru
      _
    // Predicated region
    $region102: #{tpu_custom_call.1} parent=1 // pred_check
      _
    $region103: #{tpu_custom_call.1} parent=1 // pred_check_branch
      %125 = sbr.rel (0) target = $region105
    $region104: #{tpu_custom_call.1} parent=1 // pred_region
      %127 = dma.done [#allocation3], 256
    $region105: #{tpu_custom_call.1} parent=1 // pred_fallthru
      _
    // Predicated region
    $region106: #{tpu_custom_call.1} parent=1 // pred_check
      _
    $region107: #{tpu_custom_call.1} parent=1 // pred_check_branch
      %129 = sbr.rel (0) target = $region109
    $region108: #{tpu_custom_call.1} parent=1 // pred_region
      %131 = dma.done [#allocation6], 16
    $region109: #{tpu_custom_call.1} parent=1 // pred_fallthru
      _
    // Predicated region
    $region110: #{tpu_custom_call.1} parent=1 // pred_check
      _
    $region111: #{tpu_custom_call.1} parent=1 // pred_check_branch
      %133 = sbr.rel (0) target = $region113
    $region112: #{tpu_custom_call.1} parent=1 // pred_region
      %135 = dma.done [#allocation6], 16
    $region113: #{tpu_custom_call.1} parent=1 // pred_fallthru
      _
    // Predicated region
    $region114: #{tpu_custom_call.1} parent=1 // pred_check
      _
    $region115: #{tpu_custom_call.1} parent=1 // pred_check_branch
      %137 = sbr.rel (0) target = $region117
    $region116: #{tpu_custom_call.1} parent=1 // pred_region
      %139 = dma.done [#allocation9], 512
    $region117: #{tpu_custom_call.1} parent=1 // pred_fallthru
      _
    %v140 = vld [vmem:[#allocation2] sm:$0xff]
    %v141 = vld [vmem:[#allocation2 + $0x8] sm:$0xff]
    %v142 = vld [vmem:[%s3] sm:$0xff]
    %v143 = vld [vmem:[%s3 + $0x8] sm:$0xff]
    %v144 = vld [vmem:[%s3 + $0x10] sm:$0xff]
    %v145 = vld [vmem:[%s3 + $0x18] sm:$0xff]
    %v146 = vld [vmem:[%s4] sm:$0x1]
    %v147 = vld [vmem:[%s5] sm:$0xff]
    %v148 = vld [vmem:[%s5 + $0x8] sm:$0xff]
    %v149 = vld [vmem:[%s5 + $0x10] sm:$0xff]
    %v150 = vld [vmem:[%s5 + $0x18] sm:$0xff]
    %v151 = vld [vmem:[%s6] sm:$0x1]
    %v152 = vld [vmem:[%s7] sm:$0x1]
    %v153 = vld [vmem:[%s8] sm:$0x1]
    %v154 = vld [vmem:[%s9] sm:$0xff]
    %v155 = vld [vmem:[%s9 + $0x8] sm:$0xff]
    %v156 = vld [vmem:[%s9 + $0x10] sm:$0xff]
    %v157 = vld [vmem:[%s9 + $0x18] sm:$0xff]
    %v158 = vld [vmem:[%s10] sm:$0x1]
    %v159 = vld [vmem:[%s11] sm:$0xff]
    %v160 = vld [vmem:[%s11 + $0x8] sm:$0xff]
    %v161 = vld [vmem:[%s11 + $0x10] sm:$0xff]
    %v162 = vld [vmem:[%s11 + $0x18] sm:$0xff]
    %v163 = vld [vmem:[%s11 + $0x20] sm:$0xff]
    %v164 = vld [vmem:[%s11 + $0x28] sm:$0xff]
    %v165 = vld [vmem:[%s11 + $0x30] sm:$0xff]
    %v166 = vld [vmem:[%s11 + $0x38] sm:$0xff]
    %v167 = vld [vmem:[%s12] sm:$0x1]
    %v169 = vperm.slane %v146, 0
    %vm171 = vcmask 261120
    %v173 = vsel %vm171, %v140, 0
    %v176 = vsel %vm171, %v141, 0
    %178 = vmatpush.msra.mxu0 0.0
    %179 = vmatpush.msra.mxu0 0.0
    %180 = vmatpush.msra.mxu0 0.0
    %181 = vmatpush.msra.mxu0 0.0
    %182 = vmatpush.msra.mxu0 0.0
    %183 = vmatpush.msra.mxu0 0.0
    %184 = vmatpush.msra.mxu0 0.0
    %185 = vmatpush.msra.mxu0 0.0
    %186 = vmatpush.msra.mxu0 0.0
    %187 = vmatpush.msra.mxu0 0.0
    %188 = vmatpush.msra.mxu0 0.0
    %189 = vmatpush.msra.mxu0 0.0
    %190 = vmatpush.msra.mxu0 %v145
    %191 = vmatpush.msra.mxu0 %v144
    %192 = vmatpush.msra.mxu0 %v143
    %193 = vmatpush.msra.mxu0 %v142
    %194 = vmatmul.f32.gmra.mxu0 %v173
    %v195 = vpop.f32.mrf.mxu0
    %v196 = vadd.f32 %v169, %v195
    %197 = vmatmul.f32.gmra.mxu0 %v176
    %v198 = vpop.f32.mrf.mxu0
    %v199 = vadd.f32 %v169, %v198
    %200 = vdwg.mxu0
    %203 = vrot.lane.b32.xlu0 %v196, 120
    %v204 = vpop.permute.xlu0 %203
    %205 = vrot.lane.b32.xlu0 %v199, 120
    %v206 = vpop.permute.xlu0 %205
    %207 = vrot.lane.b32.xlu0 %v196, 112
    %v208 = vpop.permute.xlu0 %207
    %209 = vrot.lane.b32.xlu0 %v199, 112
    %v210 = vpop.permute.xlu0 %209
    %211 = vrot.lane.b32.xlu0 %v196, 104
    %v212 = vpop.permute.xlu0 %211
    %213 = vrot.lane.b32.xlu0 %v199, 104
    %v214 = vpop.permute.xlu0 %213
    %215 = vrot.lane.b32.xlu0 %v196, 96
    %v216 = vpop.permute.xlu0 %215
    %vm217 = vcmask 64512
    %v218 = vsel %vm217, %v196, 0
    %v220 = vsel %vm217, %v216, 0
    %222 = vmatpush.xpose.msra.mxu0 0.0
    %223 = vmatpush.xpose.msra.mxu0 0.0
    %224 = vmatpush.xpose.msra.mxu0 0.0
    %225 = vmatpush.xpose.msra.mxu0 0.0
    %226 = vmatpush.xpose.msra.mxu0 0.0
    %227 = vmatpush.xpose.msra.mxu0 0.0
    %228 = vmatpush.xpose.msra.mxu0 0.0
    %229 = vmatpush.xpose.msra.mxu0 0.0
    %230 = vmatpush.xpose.msra.mxu0 0.0
    %231 = vmatpush.xpose.msra.mxu0 0.0
    %232 = vmatpush.xpose.msra.mxu0 0.0
    %233 = vmatpush.xpose.msra.mxu0 0.0
    %234 = vmatpush.xpose.msra.mxu0 0.0
    %235 = vmatpush.xpose.msra.mxu0 0.0
    %236 = vmatpush.xpose.msra.mxu0 0.0
    %237 = vmatpush.xpose.msra.mxu0 %v220
    %238 = vmatmul.f32.gmra.mxu0 %v218
    %v239 = vpop.f32.mrf.mxu0
    %v240 = vadd.f32 0.0, %v239
    %241 = vdwg.mxu0
    %242 = vrot.lane.b32.xlu0 %v199, 96
    %v243 = vpop.permute.xlu0 %242
    %v244 = vsel %vm217, %v199, 0
    %v246 = vsel %vm217, %v243, 0
    %248 = vmatpush.xpose.msra.mxu0 0.0
    %249 = vmatpush.xpose.msra.mxu0 0.0
    %250 = vmatpush.xpose.msra.mxu0 0.0
    %251 = vmatpush.xpose.msra.mxu0 0.0
    %252 = vmatpush.xpose.msra.mxu0 0.0
    %253 = vmatpush.xpose.msra.mxu0 0.0
    %254 = vmatpush.xpose.msra.mxu0 0.0
    %255 = vmatpush.xpose.msra.mxu0 0.0
    %256 = vmatpush.xpose.msra.mxu0 0.0
    %257 = vmatpush.xpose.msra.mxu0 0.0
    %258 = vmatpush.xpose.msra.mxu0 0.0
    %259 = vmatpush.xpose.msra.mxu0 0.0
    %260 = vmatpush.xpose.msra.mxu0 0.0
    %261 = vmatpush.xpose.msra.mxu0 0.0
    %262 = vmatpush.xpose.msra.mxu0 0.0
    %263 = vmatpush.xpose.msra.mxu0 %v246
    %264 = vmatmul.f32.gmra.mxu0 %v244
    %v265 = vpop.f32.mrf.mxu0
    %v266 = vadd.f32 0.0, %v265
    %267 = vdwg.mxu0
    %268 = vrot.lane.b32.xlu0 %v204, 96
    %v269 = vpop.permute.xlu0 %268
    %v270 = vsel %vm217, %v204, 0
    %v272 = vsel %vm217, %v269, 0
    %274 = vmatpush.xpose.msra.mxu0 0.0
    %275 = vmatpush.xpose.msra.mxu0 0.0
    %276 = vmatpush.xpose.msra.mxu0 0.0
    %277 = vmatpush.xpose.msra.mxu0 0.0
    %278 = vmatpush.xpose.msra.mxu0 0.0
    %279 = vmatpush.xpose.msra.mxu0 0.0
    %280 = vmatpush.xpose.msra.mxu0 0.0
    %281 = vmatpush.xpose.msra.mxu0 0.0
    %282 = vmatpush.xpose.msra.mxu0 0.0
    %283 = vmatpush.xpose.msra.mxu0 0.0
    %284 = vmatpush.xpose.msra.mxu0 0.0
    %285 = vmatpush.xpose.msra.mxu0 0.0
    %286 = vmatpush.xpose.msra.mxu0 0.0
    %287 = vmatpush.xpose.msra.mxu0 0.0
    %288 = vmatpush.xpose.msra.mxu0 0.0
    %289 = vmatpush.xpose.msra.mxu0 %v272
    %290 = vmatmul.f32.gmra.mxu0 %v270
    %v291 = vpop.f32.mrf.mxu0
    %v292 = vadd.f32 0.0, %v291
    %293 = vdwg.mxu0
    %294 = vrot.lane.b32.xlu0 %v206, 96
    %v295 = vpop.permute.xlu0 %294
    %v296 = vsel %vm217, %v206, 0
    %v298 = vsel %vm217, %v295, 0
    %300 = vmatpush.xpose.msra.mxu0 0.0
    %301 = vmatpush.xpose.msra.mxu0 0.0
    %302 = vmatpush.xpose.msra.mxu0 0.0
    %303 = vmatpush.xpose.msra.mxu0 0.0
    %304 = vmatpush.xpose.msra.mxu0 0.0
    %305 = vmatpush.xpose.msra.mxu0 0.0
    %306 = vmatpush.xpose.msra.mxu0 0.0
    %307 = vmatpush.xpose.msra.mxu0 0.0
    %308 = vmatpush.xpose.msra.mxu0 0.0
    %309 = vmatpush.xpose.msra.mxu0 0.0
    %310 = vmatpush.xpose.msra.mxu0 0.0
    %311 = vmatpush.xpose.msra.mxu0 0.0
    %312 = vmatpush.xpose.msra.mxu0 0.0
    %313 = vmatpush.xpose.msra.mxu0 0.0
    %314 = vmatpush.xpose.msra.mxu0 0.0
    %315 = vmatpush.xpose.msra.mxu0 %v298
    %316 = vmatmul.f32.gmra.mxu0 %v296
    %v317 = vpop.f32.mrf.mxu0
    %v318 = vadd.f32 0.0, %v317
    %319 = vdwg.mxu0
    %320 = vrot.lane.b32.xlu0 %v208, 96
    %v321 = vpop.permute.xlu0 %320
    %v322 = vsel %vm217, %v208, 0
    %v324 = vsel %vm217, %v321, 0
    %326 = vmatpush.xpose.msra.mxu0 0.0
    %327 = vmatpush.xpose.msra.mxu0 0.0
    %328 = vmatpush.xpose.msra.mxu0 0.0
    %329 = vmatpush.xpose.msra.mxu0 0.0
    %330 = vmatpush.xpose.msra.mxu0 0.0
    %331 = vmatpush.xpose.msra.mxu0 0.0
    %332 = vmatpush.xpose.msra.mxu0 0.0
    %333 = vmatpush.xpose.msra.mxu0 0.0
    %334 = vmatpush.xpose.msra.mxu0 0.0
    %335 = vmatpush.xpose.msra.mxu0 0.0
    %336 = vmatpush.xpose.msra.mxu0 0.0
    %337 = vmatpush.xpose.msra.mxu0 0.0
    %338 = vmatpush.xpose.msra.mxu0 0.0
    %339 = vmatpush.xpose.msra.mxu0 0.0
    %340 = vmatpush.xpose.msra.mxu0 0.0
    %341 = vmatpush.xpose.msra.mxu0 %v324
    %342 = vmatmul.f32.gmra.mxu0 %v322
    %v343 = vpop.f32.mrf.mxu0
    %v344 = vadd.f32 0.0, %v343
    %345 = vdwg.mxu0
    %346 = vrot.lane.b32.xlu0 %v210, 96
    %v347 = vpop.permute.xlu0 %346
    %v348 = vsel %vm217, %v210, 0
    %v350 = vsel %vm217, %v347, 0
    %352 = vmatpush.xpose.msra.mxu0 0.0
    %353 = vmatpush.xpose.msra.mxu0 0.0
    %354 = vmatpush.xpose.msra.mxu0 0.0
    %355 = vmatpush.xpose.msra.mxu0 0.0
    %356 = vmatpush.xpose.msra.mxu0 0.0
    %357 = vmatpush.xpose.msra.mxu0 0.0
    %358 = vmatpush.xpose.msra.mxu0 0.0
    %359 = vmatpush.xpose.msra.mxu0 0.0
    %360 = vmatpush.xpose.msra.mxu0 0.0
    %361 = vmatpush.xpose.msra.mxu0 0.0
    %362 = vmatpush.xpose.msra.mxu0 0.0
    %363 = vmatpush.xpose.msra.mxu0 0.0
    %364 = vmatpush.xpose.msra.mxu0 0.0
    %365 = vmatpush.xpose.msra.mxu0 0.0
    %366 = vmatpush.xpose.msra.mxu0 0.0
    %367 = vmatpush.xpose.msra.mxu0 %v350
    %368 = vmatmul.f32.gmra.mxu0 %v348
    %v369 = vpop.f32.mrf.mxu0
    %v370 = vadd.f32 0.0, %v369
    %371 = vdwg.mxu0
    %372 = vrot.lane.b32.xlu0 %v212, 96
    %v373 = vpop.permute.xlu0 %372
    %v374 = vsel %vm217, %v212, 0
    %v376 = vsel %vm217, %v373, 0
    %378 = vmatpush.xpose.msra.mxu0 0.0
    %379 = vmatpush.xpose.msra.mxu0 0.0
    %380 = vmatpush.xpose.msra.mxu0 0.0
    %381 = vmatpush.xpose.msra.mxu0 0.0
    %382 = vmatpush.xpose.msra.mxu0 0.0
    %383 = vmatpush.xpose.msra.mxu0 0.0
    %384 = vmatpush.xpose.msra.mxu0 0.0
    %385 = vmatpush.xpose.msra.mxu0 0.0
    %386 = vmatpush.xpose.msra.mxu0 0.0
    %387 = vmatpush.xpose.msra.mxu0 0.0
    %388 = vmatpush.xpose.msra.mxu0 0.0
    %389 = vmatpush.xpose.msra.mxu0 0.0
    %390 = vmatpush.xpose.msra.mxu0 0.0
    %391 = vmatpush.xpose.msra.mxu0 0.0
    %392 = vmatpush.xpose.msra.mxu0 0.0
    %393 = vmatpush.xpose.msra.mxu0 %v376
    %394 = vmatmul.f32.gmra.mxu0 %v374
    %v395 = vpop.f32.mrf.mxu0
    %v396 = vadd.f32 0.0, %v395
    %397 = vdwg.mxu0
    %398 = vrot.lane.b32.xlu0 %v214, 96
    %v399 = vpop.permute.xlu0 %398
    %v400 = vsel %vm217, %v214, 0
    %v402 = vsel %vm217, %v399, 0
    %404 = vmatpush.xpose.msra.mxu0 0.0
    %405 = vmatpush.xpose.msra.mxu0 0.0
    %406 = vmatpush.xpose.msra.mxu0 0.0
    %407 = vmatpush.xpose.msra.mxu0 0.0
    %408 = vmatpush.xpose.msra.mxu0 0.0
    %409 = vmatpush.xpose.msra.mxu0 0.0
    %410 = vmatpush.xpose.msra.mxu0 0.0
    %411 = vmatpush.xpose.msra.mxu0 0.0
    %412 = vmatpush.xpose.msra.mxu0 0.0
    %413 = vmatpush.xpose.msra.mxu0 0.0
    %414 = vmatpush.xpose.msra.mxu0 0.0
    %415 = vmatpush.xpose.msra.mxu0 0.0
    %416 = vmatpush.xpose.msra.mxu0 0.0
    %417 = vmatpush.xpose.msra.mxu0 0.0
    %418 = vmatpush.xpose.msra.mxu0 0.0
    %419 = vmatpush.xpose.msra.mxu0 %v402
    %420 = vmatmul.f32.gmra.mxu0 %v400
    %v421 = vpop.f32.mrf.mxu0
    %v422 = vadd.f32 0.0, %v421
    %423 = vdwg.mxu0
    %v424 = vsel %vm217, %v240, -inf
    %425 = vmax.xlane.f32.xlu0 %v424
    %v426 = vpop.xlane.xlu0 %425
    %v427 = vsel %vm217, %v266, -inf
    %428 = vmax.xlane.f32.xlu0 %v427
    %v429 = vpop.xlane.xlu0 %428
    %v430 = vsel %vm217, %v292, -inf
    %431 = vmax.xlane.f32.xlu0 %v430
    %v432 = vpop.xlane.xlu0 %431
    %v433 = vsel %vm217, %v318, -inf
    %434 = vmax.xlane.f32.xlu0 %v433
    %v435 = vpop.xlane.xlu0 %434
    %v436 = vsel %vm217, %v344, -inf
    %437 = vmax.xlane.f32.xlu0 %v436
    %v438 = vpop.xlane.xlu0 %437
    %v439 = vsel %vm217, %v370, -inf
    %440 = vmax.xlane.f32.xlu0 %v439
    %v441 = vpop.xlane.xlu0 %440
    %v442 = vsel %vm217, %v396, -inf
    %443 = vmax.xlane.f32.xlu0 %v442
    %v444 = vpop.xlane.xlu0 %443
    %v445 = vsel %vm217, %v422, -inf
    %446 = vmax.xlane.f32.xlu0 %v445
    %v447 = vpop.xlane.xlu0 %446
    %v448 = vsub.f32 %v240, %v426
    %v449 = vsub.f32 %v266, %v429
    %v450 = vsub.f32 %v292, %v432
    %v451 = vsub.f32 %v318, %v435
    %v452 = vsub.f32 %v344, %v438
    %v453 = vsub.f32 %v370, %v441
    %v454 = vsub.f32 %v396, %v444
    %v455 = vsub.f32 %v422, %v447
    %v456 = vmul.f32 %v448, 1.442695
    %v457 = vpow.pop %v456
    %v458 = vmul.f32 %v449, 1.442695
    %v459 = vpow.pop %v458
    %v460 = vmul.f32 %v450, 1.442695
    %v461 = vpow.pop %v460
    %v462 = vmul.f32 %v451, 1.442695
    %v463 = vpow.pop %v462
    %v464 = vmul.f32 %v452, 1.442695
    %v465 = vpow.pop %v464
    %v466 = vmul.f32 %v453, 1.442695
    %v467 = vpow.pop %v466
    %v468 = vmul.f32 %v454, 1.442695
    %v469 = vpow.pop %v468
    %v470 = vmul.f32 %v455, 1.442695
    %v471 = vpow.pop %v470
    %v472 = vsel %vm217, %v457, 0.0
    %473 = vadd.xlane.f32.xlu0 %v472
    %v474 = vpop.xlane.xlu0 %473
    %v475 = vsel %vm217, %v459, 0.0
    %476 = vadd.xlane.f32.xlu0 %v475
    %v477 = vpop.xlane.xlu0 %476
    %v478 = vsel %vm217, %v461, 0.0
    %479 = vadd.xlane.f32.xlu0 %v478
    %v480 = vpop.xlane.xlu0 %479
    %v481 = vsel %vm217, %v463, 0.0
    %482 = vadd.xlane.f32.xlu0 %v481
    %v483 = vpop.xlane.xlu0 %482
    %v484 = vsel %vm217, %v465, 0.0
    %485 = vadd.xlane.f32.xlu0 %v484
    %v486 = vpop.xlane.xlu0 %485
    %v487 = vsel %vm217, %v467, 0.0
    %488 = vadd.xlane.f32.xlu0 %v487
    %v489 = vpop.xlane.xlu0 %488
    %v490 = vsel %vm217, %v469, 0.0
    %491 = vadd.xlane.f32.xlu0 %v490
    %v492 = vpop.xlane.xlu0 %491
    %v493 = vsel %vm217, %v471, 0.0
    %494 = vadd.xlane.f32.xlu0 %v493
    %v495 = vpop.xlane.xlu0 %494
    %v496 = vrcp.pop %v474
    %v497 = vmul.f32 %v474, %v496
    %v498 = vsub.f32 1.0, %v497
    %v499 = vmul.f32 %v496, %v498
    %v500 = vadd.f32 %v496, %v499
    %vm501 = vweird.f32 %v474
    %vm502 = vweird.f32 %v496
    %vm503 = vmor %vm501, %vm502
    %v504 = vsel %vm503, %v496, %v500
    %v505 = vand.u32 2147483647, %v474
    %vm506 = vcmp.eq.f32.partialorder %v505, 8.507059e+37
    %v507 = vand.u32 %v474, 2147483648
    %v508 = vor.u32 1.1754944e-38, %v507
    %v509 = vsel %vm506, %v508, %v504
    %v510 = vmul.f32 %v457, %v509
    %v511 = vrcp.pop %v477
    %v512 = vmul.f32 %v477, %v511
    %v513 = vsub.f32 1.0, %v512
    %v514 = vmul.f32 %v511, %v513
    %v515 = vadd.f32 %v511, %v514
    %vm516 = vweird.f32 %v477
    %vm517 = vweird.f32 %v511
    %vm518 = vmor %vm516, %vm517
    %v519 = vsel %vm518, %v511, %v515
    %v520 = vand.u32 2147483647, %v477
    %vm521 = vcmp.eq.f32.partialorder %v520, 8.507059e+37
    %v522 = vand.u32 %v477, 2147483648
    %v523 = vor.u32 1.1754944e-38, %v522
    %v524 = vsel %vm521, %v523, %v519
    %v525 = vmul.f32 %v459, %v524
    %v526 = vrcp.pop %v480
    %v527 = vmul.f32 %v480, %v526
    %v528 = vsub.f32 1.0, %v527
    %v529 = vmul.f32 %v526, %v528
    %v530 = vadd.f32 %v526, %v529
    %vm531 = vweird.f32 %v480
    %vm532 = vweird.f32 %v526
    %vm533 = vmor %vm531, %vm532
    %v534 = vsel %vm533, %v526, %v530
    %v535 = vand.u32 2147483647, %v480
    %vm536 = vcmp.eq.f32.partialorder %v535, 8.507059e+37
    %v537 = vand.u32 %v480, 2147483648
    %v538 = vor.u32 1.1754944e-38, %v537
    %v539 = vsel %vm536, %v538, %v534
    %v540 = vmul.f32 %v461, %v539
    %v541 = vrcp.pop %v483
    %v542 = vmul.f32 %v483, %v541
    %v543 = vsub.f32 1.0, %v542
    %v544 = vmul.f32 %v541, %v543
    %v545 = vadd.f32 %v541, %v544
    %vm546 = vweird.f32 %v483
    %vm547 = vweird.f32 %v541
    %vm548 = vmor %vm546, %vm547
    %v549 = vsel %vm548, %v541, %v545
    %v550 = vand.u32 2147483647, %v483
    %vm551 = vcmp.eq.f32.partialorder %v550, 8.507059e+37
    %v552 = vand.u32 %v483, 2147483648
    %v553 = vor.u32 1.1754944e-38, %v552
    %v554 = vsel %vm551, %v553, %v549
    %v555 = vmul.f32 %v463, %v554
    %v556 = vrcp.pop %v486
    %v557 = vmul.f32 %v486, %v556
    %v558 = vsub.f32 1.0, %v557
    %v559 = vmul.f32 %v556, %v558
    %v560 = vadd.f32 %v556, %v559
    %vm561 = vweird.f32 %v486
    %vm562 = vweird.f32 %v556
    %vm563 = vmor %vm561, %vm562
    %v564 = vsel %vm563, %v556, %v560
    %v565 = vand.u32 2147483647, %v486
    %vm566 = vcmp.eq.f32.partialorder %v565, 8.507059e+37
    %v567 = vand.u32 %v486, 2147483648
    %v568 = vor.u32 1.1754944e-38, %v567
    %v569 = vsel %vm566, %v568, %v564
    %v570 = vmul.f32 %v465, %v569
    %v571 = vrcp.pop %v489
    %v572 = vmul.f32 %v489, %v571
    %v573 = vsub.f32 1.0, %v572
    %v574 = vmul.f32 %v571, %v573
    %v575 = vadd.f32 %v571, %v574
    %vm576 = vweird.f32 %v489
    %vm577 = vweird.f32 %v571
    %vm578 = vmor %vm576, %vm577
    %v579 = vsel %vm578, %v571, %v575
    %v580 = vand.u32 2147483647, %v489
    %vm581 = vcmp.eq.f32.partialorder %v580, 8.507059e+37
    %v582 = vand.u32 %v489, 2147483648
    %v583 = vor.u32 1.1754944e-38, %v582
    %v584 = vsel %vm581, %v583, %v579
    %v585 = vmul.f32 %v467, %v584
    %v586 = vrcp.pop %v492
    %v587 = vmul.f32 %v492, %v586
    %v588 = vsub.f32 1.0, %v587
    %v589 = vmul.f32 %v586, %v588
    %v590 = vadd.f32 %v586, %v589
    %vm591 = vweird.f32 %v492
    %vm592 = vweird.f32 %v586
    %vm593 = vmor %vm591, %vm592
    %v594 = vsel %vm593, %v586, %v590
    %v595 = vand.u32 2147483647, %v492
    %vm596 = vcmp.eq.f32.partialorder %v595, 8.507059e+37
    %v597 = vand.u32 %v492, 2147483648
    %v598 = vor.u32 1.1754944e-38, %v597
    %v599 = vsel %vm596, %v598, %v594
    %v600 = vmul.f32 %v469, %v599
    %v601 = vrcp.pop %v495
    %v602 = vmul.f32 %v495, %v601
    %v603 = vsub.f32 1.0, %v602
    %v604 = vmul.f32 %v601, %v603
    %v605 = vadd.f32 %v601, %v604
    %vm606 = vweird.f32 %v495
    %vm607 = vweird.f32 %v601
    %vm608 = vmor %vm606, %vm607
    %v609 = vsel %vm608, %v601, %v605
    %v610 = vand.u32 2147483647, %v495
    %vm611 = vcmp.eq.f32.partialorder %v610, 8.507059e+37
    %v612 = vand.u32 %v495, 2147483648
    %v613 = vor.u32 1.1754944e-38, %v612
    %v614 = vsel %vm611, %v613, %v609
    %v615 = vmul.f32 %v471, %v614
    %616 = vrot.lane.b32.xlu0 %v196, 64
    %v617 = vpop.permute.xlu0 %616
    %v620 = vsel %vm217, %v510, 0
    %622 = vmatpush.msra.mxu0 0.0
    %623 = vmatpush.msra.mxu0 0.0
    %624 = vmatpush.msra.mxu0 0.0
    %625 = vmatpush.msra.mxu0 0.0
    %626 = vmatpush.msra.mxu0 0.0
    %627 = vmatpush.msra.mxu0 0.0
    %628 = vmatpush.msra.mxu0 0.0
    %629 = vmatpush.msra.mxu0 0.0
    %630 = vmatpush.msra.mxu0 0.0
    %631 = vmatpush.msra.mxu0 0.0
    %632 = vmatpush.msra.mxu0 0.0
    %633 = vmatpush.msra.mxu0 0.0
    %634 = vmatpush.msra.mxu0 0.0
    %635 = vmatpush.msra.mxu0 0.0
    %636 = vmatpush.msra.mxu0 0.0
    %637 = vmatpush.msra.mxu0 %v617
    %638 = vmatmul.f32.gmra.mxu0 %v620
    %v639 = vpop.f32.mrf.mxu0
    %v640 = vadd.f32 0.0, %v639
    %641 = vdwg.mxu0
    %642 = vrot.lane.b32.xlu0 %v199, 64
    %v643 = vpop.permute.xlu0 %642
    %v646 = vsel %vm217, %v525, 0
    %648 = vmatpush.msra.mxu0 0.0
    %649 = vmatpush.msra.mxu0 0.0
    %650 = vmatpush.msra.mxu0 0.0
    %651 = vmatpush.msra.mxu0 0.0
    %652 = vmatpush.msra.mxu0 0.0
    %653 = vmatpush.msra.mxu0 0.0
    %654 = vmatpush.msra.mxu0 0.0
    %655 = vmatpush.msra.mxu0 0.0
    %656 = vmatpush.msra.mxu0 0.0
    %657 = vmatpush.msra.mxu0 0.0
    %658 = vmatpush.msra.mxu0 0.0
    %659 = vmatpush.msra.mxu0 0.0
    %660 = vmatpush.msra.mxu0 0.0
    %661 = vmatpush.msra.mxu0 0.0
    %662 = vmatpush.msra.mxu0 0.0
    %663 = vmatpush.msra.mxu0 %v643
    %664 = vmatmul.f32.gmra.mxu0 %v646
    %v665 = vpop.f32.mrf.mxu0
    %v666 = vadd.f32 0.0, %v665
    %667 = vdwg.mxu0
    %668 = vrot.lane.b32.xlu0 %v204, 64
    %v669 = vpop.permute.xlu0 %668
    %v672 = vsel %vm217, %v540, 0
    %674 = vmatpush.msra.mxu0 0.0
    %675 = vmatpush.msra.mxu0 0.0
    %676 = vmatpush.msra.mxu0 0.0
    %677 = vmatpush.msra.mxu0 0.0
    %678 = vmatpush.msra.mxu0 0.0
    %679 = vmatpush.msra.mxu0 0.0
    %680 = vmatpush.msra.mxu0 0.0
    %681 = vmatpush.msra.mxu0 0.0
    %682 = vmatpush.msra.mxu0 0.0
    %683 = vmatpush.msra.mxu0 0.0
    %684 = vmatpush.msra.mxu0 0.0
    %685 = vmatpush.msra.mxu0 0.0
    %686 = vmatpush.msra.mxu0 0.0
    %687 = vmatpush.msra.mxu0 0.0
    %688 = vmatpush.msra.mxu0 0.0
    %689 = vmatpush.msra.mxu0 %v669
    %690 = vmatmul.f32.gmra.mxu0 %v672
    %v691 = vpop.f32.mrf.mxu0
    %v692 = vadd.f32 0.0, %v691
    %693 = vdwg.mxu0
    %694 = vrot.lane.b32.xlu0 %v206, 64
    %v695 = vpop.permute.xlu0 %694
    %v698 = vsel %vm217, %v555, 0
    %700 = vmatpush.msra.mxu0 0.0
    %701 = vmatpush.msra.mxu0 0.0
    %702 = vmatpush.msra.mxu0 0.0
    %703 = vmatpush.msra.mxu0 0.0
    %704 = vmatpush.msra.mxu0 0.0
    %705 = vmatpush.msra.mxu0 0.0
    %706 = vmatpush.msra.mxu0 0.0
    %707 = vmatpush.msra.mxu0 0.0
    %708 = vmatpush.msra.mxu0 0.0
    %709 = vmatpush.msra.mxu0 0.0
    %710 = vmatpush.msra.mxu0 0.0
    %711 = vmatpush.msra.mxu0 0.0
    %712 = vmatpush.msra.mxu0 0.0
    %713 = vmatpush.msra.mxu0 0.0
    %714 = vmatpush.msra.mxu0 0.0
    %715 = vmatpush.msra.mxu0 %v695
    %716 = vmatmul.f32.gmra.mxu0 %v698
    %v717 = vpop.f32.mrf.mxu0
    %v718 = vadd.f32 0.0, %v717
    %719 = vdwg.mxu0
    %720 = vrot.lane.b32.xlu0 %v208, 64
    %v721 = vpop.permute.xlu0 %720
    %v724 = vsel %vm217, %v570, 0
    %726 = vmatpush.msra.mxu0 0.0
    %727 = vmatpush.msra.mxu0 0.0
    %728 = vmatpush.msra.mxu0 0.0
    %729 = vmatpush.msra.mxu0 0.0
    %730 = vmatpush.msra.mxu0 0.0
    %731 = vmatpush.msra.mxu0 0.0
    %732 = vmatpush.msra.mxu0 0.0
    %733 = vmatpush.msra.mxu0 0.0
    %734 = vmatpush.msra.mxu0 0.0
    %735 = vmatpush.msra.mxu0 0.0
    %736 = vmatpush.msra.mxu0 0.0
    %737 = vmatpush.msra.mxu0 0.0
    %738 = vmatpush.msra.mxu0 0.0
    %739 = vmatpush.msra.mxu0 0.0
    %740 = vmatpush.msra.mxu0 0.0
    %741 = vmatpush.msra.mxu0 %v721
    %742 = vmatmul.f32.gmra.mxu0 %v724
    %v743 = vpop.f32.mrf.mxu0
    %v744 = vadd.f32 0.0, %v743
    %745 = vdwg.mxu0
    %746 = vrot.lane.b32.xlu0 %v210, 64
    %v747 = vpop.permute.xlu0 %746
    %v750 = vsel %vm217, %v585, 0
    %752 = vmatpush.msra.mxu0 0.0
    %753 = vmatpush.msra.mxu0 0.0
    %754 = vmatpush.msra.mxu0 0.0
    %755 = vmatpush.msra.mxu0 0.0
    %756 = vmatpush.msra.mxu0 0.0
    %757 = vmatpush.msra.mxu0 0.0
    %758 = vmatpush.msra.mxu0 0.0
    %759 = vmatpush.msra.mxu0 0.0
    %760 = vmatpush.msra.mxu0 0.0
    %761 = vmatpush.msra.mxu0 0.0
    %762 = vmatpush.msra.mxu0 0.0
    %763 = vmatpush.msra.mxu0 0.0
    %764 = vmatpush.msra.mxu0 0.0
    %765 = vmatpush.msra.mxu0 0.0
    %766 = vmatpush.msra.mxu0 0.0
    %767 = vmatpush.msra.mxu0 %v747
    %768 = vmatmul.f32.gmra.mxu0 %v750
    %v769 = vpop.f32.mrf.mxu0
    %v770 = vadd.f32 0.0, %v769
    %771 = vdwg.mxu0
    %772 = vrot.lane.b32.xlu0 %v212, 64
    %v773 = vpop.permute.xlu0 %772
    %v776 = vsel %vm217, %v600, 0
    %778 = vmatpush.msra.mxu0 0.0
    %779 = vmatpush.msra.mxu0 0.0
    %780 = vmatpush.msra.mxu0 0.0
    %781 = vmatpush.msra.mxu0 0.0
    %782 = vmatpush.msra.mxu0 0.0
    %783 = vmatpush.msra.mxu0 0.0
    %784 = vmatpush.msra.mxu0 0.0
    %785 = vmatpush.msra.mxu0 0.0
    %786 = vmatpush.msra.mxu0 0.0
    %787 = vmatpush.msra.mxu0 0.0
    %788 = vmatpush.msra.mxu0 0.0
    %789 = vmatpush.msra.mxu0 0.0
    %790 = vmatpush.msra.mxu0 0.0
    %791 = vmatpush.msra.mxu0 0.0
    %792 = vmatpush.msra.mxu0 0.0
    %793 = vmatpush.msra.mxu0 %v773
    %794 = vmatmul.f32.gmra.mxu0 %v776
    %v795 = vpop.f32.mrf.mxu0
    %v796 = vadd.f32 0.0, %v795
    %797 = vdwg.mxu0
    %798 = vrot.lane.b32.xlu0 %v214, 64
    %v799 = vpop.permute.xlu0 %798
    %v802 = vsel %vm217, %v615, 0
    %804 = vmatpush.msra.mxu0 0.0
    %805 = vmatpush.msra.mxu0 0.0
    %806 = vmatpush.msra.mxu0 0.0
    %807 = vmatpush.msra.mxu0 0.0
    %808 = vmatpush.msra.mxu0 0.0
    %809 = vmatpush.msra.mxu0 0.0
    %810 = vmatpush.msra.mxu0 0.0
    %811 = vmatpush.msra.mxu0 0.0
    %812 = vmatpush.msra.mxu0 0.0
    %813 = vmatpush.msra.mxu0 0.0
    %814 = vmatpush.msra.mxu0 0.0
    %815 = vmatpush.msra.mxu0 0.0
    %816 = vmatpush.msra.mxu0 0.0
    %817 = vmatpush.msra.mxu0 0.0
    %818 = vmatpush.msra.mxu0 0.0
    %819 = vmatpush.msra.mxu0 %v799
    %820 = vmatmul.f32.gmra.mxu0 %v802
    %v821 = vpop.f32.mrf.mxu0
    %v822 = vadd.f32 0.0, %v821
    %823 = vdwg.mxu0
    %826 = vrot.lane.b32.xlu0 %v692, 8
    %v827 = vpop.permute.xlu0 %826
    %828 = vrot.lane.b32.xlu0 %v718, 8
    %v829 = vpop.permute.xlu0 %828
    %834 = vrot.lane.b32.xlu0 %v744, 16
    %v835 = vpop.permute.xlu0 %834
    %836 = vrot.lane.b32.xlu0 %v770, 16
    %v837 = vpop.permute.xlu0 %836
    %842 = vrot.lane.b32.xlu0 %v796, 24
    %v843 = vpop.permute.xlu0 %842
    %844 = vrot.lane.b32.xlu0 %v822, 24
    %v845 = vpop.permute.xlu0 %844
    %v848 = vsel %vm217, %v640, %v827
    %v849 = vsel %vm217, %v666, %v829
    %vm850 = vcmask 130048
    %v851 = vsel %vm850, %v848, %v835
    %v852 = vsel %vm850, %v849, %v837
    %vm853 = vcmask 195584
    %v854 = vsel %vm853, %v851, %v843
    %v855 = vsel %vm853, %v852, %v845
    %v857 = vperm.slane %v151, 0
    %v860 = vsel %vm171, %v854, 0
    %v863 = vsel %vm171, %v855, 0
    %865 = vmatpush.msra.mxu0 0.0
    %866 = vmatpush.msra.mxu0 0.0
    %867 = vmatpush.msra.mxu0 0.0
    %868 = vmatpush.msra.mxu0 0.0
    %869 = vmatpush.msra.mxu0 0.0
    %870 = vmatpush.msra.mxu0 0.0
    %871 = vmatpush.msra.mxu0 0.0
    %872 = vmatpush.msra.mxu0 0.0
    %873 = vmatpush.msra.mxu0 0.0
    %874 = vmatpush.msra.mxu0 0.0
    %875 = vmatpush.msra.mxu0 0.0
    %876 = vmatpush.msra.mxu0 0.0
    %877 = vmatpush.msra.mxu0 %v150
    %878 = vmatpush.msra.mxu0 %v149
    %879 = vmatpush.msra.mxu0 %v148
    %880 = vmatpush.msra.mxu0 %v147
    %881 = vmatmul.f32.gmra.mxu0 %v860
    %v882 = vpop.f32.mrf.mxu0
    %v883 = vadd.f32 %v857, %v882
    %884 = vmatmul.f32.gmra.mxu0 %v863
    %v885 = vpop.f32.mrf.mxu0
    %v886 = vadd.f32 %v857, %v885
    %887 = vdwg.mxu0
    %v888 = vadd.f32 %v140, %v883
    %v889 = vadd.f32 %v141, %v886
    %v890 = vsel %vm171, %v888, 0.0
    %891 = vadd.xlane.f32.xlu0 %v890
    %v892 = vpop.xlane.xlu0 %891
    %v893 = vsel %vm171, %v889, 0.0
    %894 = vadd.xlane.f32.xlu0 %v893
    %v895 = vpop.xlane.xlu0 %894
    %v896 = vrcp.pop 32.0
    %v897 = vmul.f32 32.0, %v896
    %v898 = vsub.f32 1.0, %v897
    %v899 = vmul.f32 %v896, %v898
    %v900 = vadd.f32 %v896, %v899
    %vm901 = vweird.f32 %v896
    %v902 = vsel %vm901, %v896, %v900
    %v903 = vmul.f32 %v892, %v902
    %v904 = vmul.f32 %v895, %v902
    %v905 = vsub.f32 %v888, %v903
    %v906 = vsub.f32 %v889, %v904
    %v907 = vmul.f32 %v905, %v905
    %v908 = vmul.f32 %v906, %v906
    %v909 = vsel %vm171, %v907, 0.0
    %910 = vadd.xlane.f32.xlu0 %v909
    %v911 = vpop.xlane.xlu0 %910
    %v912 = vsel %vm171, %v908, 0.0
    %913 = vadd.xlane.f32.xlu0 %v912
    %v914 = vpop.xlane.xlu0 %913
    %v915 = vmul.f32 %v911, %v902
    %v916 = vmul.f32 %v914, %v902
    %v917 = vadd.f32 %v915, 1e-05
    %v918 = vadd.f32 %v916, 1e-05
    %v919 = vrsqrt.pop %v917
    %v920 = vmul.f32 %v919, %v917
    %v921 = vmul.f32 %v920, %v919
    %v922 = vmul.f32 0.5, %v921
    %v923 = vsub.f32 1.5, %v922
    %v924 = vmul.f32 %v919, %v923
    %vm925 = vweird.f32 %v917
    %vm926 = vweird.f32 %v919
    %vm927 = vmor %vm925, %vm926
    %v928 = vsel %vm927, %v919, %v924
    %v929 = vrsqrt.pop %v918
    %v930 = vmul.f32 %v929, %v918
    %v931 = vmul.f32 %v930, %v929
    %v932 = vmul.f32 0.5, %v931
    %v933 = vsub.f32 1.5, %v932
    %v934 = vmul.f32 %v929, %v933
    %vm935 = vweird.f32 %v918
    %vm936 = vweird.f32 %v929
    %vm937 = vmor %vm935, %vm936
    %v938 = vsel %vm937, %v929, %v934
    %v939 = vmul.f32 %v905, %v928
    %v940 = vmul.f32 %v906, %v938
    %v942 = vperm.slane %v152, 0
    %v944 = vmul.f32 %v939, %v942
    %v945 = vmul.f32 %v940, %v942
    %v947 = vperm.slane %v153, 0
    %v949 = vadd.f32 %v944, %v947
    %v950 = vadd.f32 %v945, %v947
    %v952 = vperm.slane %v158, 0
    %v955 = vsel %vm171, %v949, 0
    %v958 = vsel %vm171, %v950, 0
    %960 = vmatpush.msra.mxu0 0.0
    %961 = vmatpush.msra.mxu0 0.0
    %962 = vmatpush.msra.mxu0 0.0
    %963 = vmatpush.msra.mxu0 0.0
    %964 = vmatpush.msra.mxu0 0.0
    %965 = vmatpush.msra.mxu0 0.0
    %966 = vmatpush.msra.mxu0 0.0
    %967 = vmatpush.msra.mxu0 0.0
    %968 = vmatpush.msra.mxu0 0.0
    %969 = vmatpush.msra.mxu0 0.0
    %970 = vmatpush.msra.mxu0 0.0
    %971 = vmatpush.msra.mxu0 0.0
    %972 = vmatpush.msra.mxu0 %v157
    %973 = vmatpush.msra.mxu0 %v156
    %974 = vmatpush.msra.mxu0 %v155
    %975 = vmatpush.msra.mxu0 %v154
    %976 = vmatmul.f32.gmra.mxu0 %v955
    %v977 = vpop.f32.mrf.mxu0
    %v978 = vadd.f32 %v952, %v977
    %979 = vmatmul.f32.gmra.mxu0 %v958
    %v980 = vpop.f32.mrf.mxu0
    %v981 = vadd.f32 %v952, %v980
    %982 = vdwg.mxu0
    %v983 = vmax.f32 %v978, 0.0
    %v984 = vmax.f32 %v981, 0.0
    %v986 = vperm.slane %v167, 0
    %vm988 = vcmask 523264
    %v990 = vsel %vm988, %v983, 0
    %v993 = vsel %vm988, %v984, 0
    %995 = vmatpush.msra.mxu0 0.0
    %996 = vmatpush.msra.mxu0 0.0
    %997 = vmatpush.msra.mxu0 0.0
    %998 = vmatpush.msra.mxu0 0.0
    %999 = vmatpush.msra.mxu0 0.0
    %1000 = vmatpush.msra.mxu0 0.0
    %1001 = vmatpush.msra.mxu0 0.0
    %1002 = vmatpush.msra.mxu0 0.0
    %1003 = vmatpush.msra.mxu0 %v166
    %1004 = vmatpush.msra.mxu0 %v165
    %1005 = vmatpush.msra.mxu0 %v164
    %1006 = vmatpush.msra.mxu0 %v163
    %1007 = vmatpush.msra.mxu0 %v162
    %1008 = vmatpush.msra.mxu0 %v161
    %1009 = vmatpush.msra.mxu0 %v160
    %1010 = vmatpush.msra.mxu0 %v159
    %1011 = vmatmul.f32.gmra.mxu0 %v990
    %v1012 = vpop.f32.mrf.mxu0
    %v1013 = vadd.f32 %v986, %v1012
    %1014 = vmatmul.f32.gmra.mxu0 %v993
    %v1015 = vpop.f32.mrf.mxu0
    %v1016 = vadd.f32 %v986, %v1015
    %1017 = vdwg.mxu0
    %v1018 = vadd.f32 %v888, %v1013
    %v1019 = vadd.f32 %v889, %v1016
    %v1020 = vld [vmem:[%s13] sm:$0x1]
    %v1021 = vld [vmem:[%s14] sm:$0x1]
    %v1022 = vld [vmem:[%s15] sm:$0xff]
    %v1023 = vld [vmem:[%s15 + $0x8] sm:$0xff]
    %v1024 = vld [vmem:[%s15 + $0x10] sm:$0xff]
    %v1025 = vld [vmem:[%s15 + $0x18] sm:$0xff]
    %v1026 = vld [vmem:[%s16] sm:$0x1]
    %v1027 = vld [vmem:[%s17] sm:$0xff]
    %v1028 = vld [vmem:[%s17 + $0x8] sm:$0xff]
    %v1029 = vld [vmem:[%s17 + $0x10] sm:$0xff]
    %v1030 = vld [vmem:[%s17 + $0x18] sm:$0xff]
    %v1031 = vld [vmem:[%s18] sm:$0x1]
    %v1032 = vld [vmem:[%s19] sm:$0x1]
    %v1033 = vld [vmem:[%s20] sm:$0x1]
    %v1034 = vld [vmem:[#allocation8] sm:$0xff]
    %v1035 = vld [vmem:[#allocation8 + $0x8] sm:$0xff]
    %v1036 = vld [vmem:[#allocation8 + $0x10] sm:$0xff]
    %v1037 = vld [vmem:[#allocation8 + $0x18] sm:$0xff]
    %v1038 = vld [vmem:[%s22] sm:$0x1]
    %v1039 = vld [vmem:[%s23] sm:$0xff]
    %v1040 = vld [vmem:[%s23 + $0x8] sm:$0xff]
    %v1041 = vld [vmem:[%s23 + $0x10] sm:$0xff]
    %v1042 = vld [vmem:[%s23 + $0x18] sm:$0xff]
    %v1043 = vld [vmem:[%s23 + $0x20] sm:$0xff]
    %v1044 = vld [vmem:[%s23 + $0x28] sm:$0xff]
    %v1045 = vld [vmem:[%s23 + $0x30] sm:$0xff]
    %v1046 = vld [vmem:[%s23 + $0x38] sm:$0xff]
    %v1047 = vld [vmem:[%s24] sm:$0x1]
    %v1048 = vsel %vm171, %v1018, 0.0
    %1049 = vadd.xlane.f32.xlu0 %v1048
    %v1050 = vpop.xlane.xlu0 %1049
    %v1051 = vsel %vm171, %v1019, 0.0
    %1052 = vadd.xlane.f32.xlu0 %v1051
    %v1053 = vpop.xlane.xlu0 %1052
    %v1054 = vmul.f32 %v1050, %v902
    %v1055 = vmul.f32 %v1053, %v902
    %v1056 = vsub.f32 %v1018, %v1054
    %v1057 = vsub.f32 %v1019, %v1055
    %v1058 = vmul.f32 %v1056, %v1056
    %v1059 = vmul.f32 %v1057, %v1057
    %v1060 = vsel %vm171, %v1058, 0.0
    %1061 = vadd.xlane.f32.xlu0 %v1060
    %v1062 = vpop.xlane.xlu0 %1061
    %v1063 = vsel %vm171, %v1059, 0.0
    %1064 = vadd.xlane.f32.xlu0 %v1063
    %v1065 = vpop.xlane.xlu0 %1064
    %v1066 = vmul.f32 %v1062, %v902
    %v1067 = vmul.f32 %v1065, %v902
    %v1068 = vadd.f32 %v1066, 1e-05
    %v1069 = vadd.f32 %v1067, 1e-05
    %v1070 = vrsqrt.pop %v1068
    %v1071 = vmul.f32 %v1070, %v1068
    %v1072 = vmul.f32 %v1071, %v1070
    %v1073 = vmul.f32 0.5, %v1072
    %v1074 = vsub.f32 1.5, %v1073
    %v1075 = vmul.f32 %v1070, %v1074
    %vm1076 = vweird.f32 %v1068
    %vm1077 = vweird.f32 %v1070
    %vm1078 = vmor %vm1076, %vm1077
    %v1079 = vsel %vm1078, %v1070, %v1075
    %v1080 = vrsqrt.pop %v1069
    %v1081 = vmul.f32 %v1080, %v1069
    %v1082 = vmul.f32 %v1081, %v1080
    %v1083 = vmul.f32 0.5, %v1082
    %v1084 = vsub.f32 1.5, %v1083
    %v1085 = vmul.f32 %v1080, %v1084
    %vm1086 = vweird.f32 %v1069
    %vm1087 = vweird.f32 %v1080
    %vm1088 = vmor %vm1086, %vm1087
    %v1089 = vsel %vm1088, %v1080, %v1085
    %v1090 = vmul.f32 %v1056, %v1079
    %v1091 = vmul.f32 %v1057, %v1089
    %v1093 = vperm.slane %v1020, 0
    %v1095 = vmul.f32 %v1090, %v1093
    %v1096 = vmul.f32 %v1091, %v1093
    %v1098 = vperm.slane %v1021, 0
    %v1100 = vadd.f32 %v1095, %v1098
    %v1101 = vadd.f32 %v1096, %v1098
    %v1103 = vperm.slane %v1026, 0
    %v1106 = vsel %vm171, %v1100, 0
    %v1109 = vsel %vm171, %v1101, 0
    %1111 = vmatpush.msra.mxu0 0.0
    %1112 = vmatpush.msra.mxu0 0.0
    %1113 = vmatpush.msra.mxu0 0.0
    %1114 = vmatpush.msra.mxu0 0.0
    %1115 = vmatpush.msra.mxu0 0.0
    %1116 = vmatpush.msra.mxu0 0.0
    %1117 = vmatpush.msra.mxu0 0.0
    %1118 = vmatpush.msra.mxu0 0.0
    %1119 = vmatpush.msra.mxu0 0.0
    %1120 = vmatpush.msra.mxu0 0.0
    %1121 = vmatpush.msra.mxu0 0.0
    %1122 = vmatpush.msra.mxu0 0.0
    %1123 = vmatpush.msra.mxu0 %v1025
    %1124 = vmatpush.msra.mxu0 %v1024
    %1125 = vmatpush.msra.mxu0 %v1023
    %1126 = vmatpush.msra.mxu0 %v1022
    %1127 = vmatmul.f32.gmra.mxu0 %v1106
    %v1128 = vpop.f32.mrf.mxu0
    %v1129 = vadd.f32 %v1103, %v1128
    %1130 = vmatmul.f32.gmra.mxu0 %v1109
    %v1131 = vpop.f32.mrf.mxu0
    %v1132 = vadd.f32 %v1103, %v1131
    %1133 = vdwg.mxu0
    %1136 = vrot.lane.b32.xlu0 %v1129, 120
    %v1137 = vpop.permute.xlu0 %1136
    %1138 = vrot.lane.b32.xlu0 %v1132, 120
    %v1139 = vpop.permute.xlu0 %1138
    %1140 = vrot.lane.b32.xlu0 %v1129, 112
    %v1141 = vpop.permute.xlu0 %1140
    %1142 = vrot.lane.b32.xlu0 %v1132, 112
    %v1143 = vpop.permute.xlu0 %1142
    %1144 = vrot.lane.b32.xlu0 %v1129, 104
    %v1145 = vpop.permute.xlu0 %1144
    %1146 = vrot.lane.b32.xlu0 %v1132, 104
    %v1147 = vpop.permute.xlu0 %1146
    %1148 = vrot.lane.b32.xlu0 %v1129, 96
    %v1149 = vpop.permute.xlu0 %1148
    %v1150 = vsel %vm217, %v1129, 0
    %v1152 = vsel %vm217, %v1149, 0
    %1154 = vmatpush.xpose.msra.mxu0 0.0
    %1155 = vmatpush.xpose.msra.mxu0 0.0
    %1156 = vmatpush.xpose.msra.mxu0 0.0
    %1157 = vmatpush.xpose.msra.mxu0 0.0
    %1158 = vmatpush.xpose.msra.mxu0 0.0
    %1159 = vmatpush.xpose.msra.mxu0 0.0
    %1160 = vmatpush.xpose.msra.mxu0 0.0
    %1161 = vmatpush.xpose.msra.mxu0 0.0
    %1162 = vmatpush.xpose.msra.mxu0 0.0
    %1163 = vmatpush.xpose.msra.mxu0 0.0
    %1164 = vmatpush.xpose.msra.mxu0 0.0
    %1165 = vmatpush.xpose.msra.mxu0 0.0
    %1166 = vmatpush.xpose.msra.mxu0 0.0
    %1167 = vmatpush.xpose.msra.mxu0 0.0
    %1168 = vmatpush.xpose.msra.mxu0 0.0
    %1169 = vmatpush.xpose.msra.mxu0 %v1152
    %1170 = vmatmul.f32.gmra.mxu0 %v1150
    %v1171 = vpop.f32.mrf.mxu0
    %v1172 = vadd.f32 0.0, %v1171
    %1173 = vdwg.mxu0
    %1174 = vrot.lane.b32.xlu0 %v1132, 96
    %v1175 = vpop.permute.xlu0 %1174
    %v1176 = vsel %vm217, %v1132, 0
    %v1178 = vsel %vm217, %v1175, 0
    %1180 = vmatpush.xpose.msra.mxu0 0.0
    %1181 = vmatpush.xpose.msra.mxu0 0.0
    %1182 = vmatpush.xpose.msra.mxu0 0.0
    %1183 = vmatpush.xpose.msra.mxu0 0.0
    %1184 = vmatpush.xpose.msra.mxu0 0.0
    %1185 = vmatpush.xpose.msra.mxu0 0.0
    %1186 = vmatpush.xpose.msra.mxu0 0.0
    %1187 = vmatpush.xpose.msra.mxu0 0.0
    %1188 = vmatpush.xpose.msra.mxu0 0.0
    %1189 = vmatpush.xpose.msra.mxu0 0.0
    %1190 = vmatpush.xpose.msra.mxu0 0.0
    %1191 = vmatpush.xpose.msra.mxu0 0.0
    %1192 = vmatpush.xpose.msra.mxu0 0.0
    %1193 = vmatpush.xpose.msra.mxu0 0.0
    %1194 = vmatpush.xpose.msra.mxu0 0.0
    %1195 = vmatpush.xpose.msra.mxu0 %v1178
    %1196 = vmatmul.f32.gmra.mxu0 %v1176
    %v1197 = vpop.f32.mrf.mxu0
    %v1198 = vadd.f32 0.0, %v1197
    %1199 = vdwg.mxu0
    %1200 = vrot.lane.b32.xlu0 %v1137, 96
    %v1201 = vpop.permute.xlu0 %1200
    %v1202 = vsel %vm217, %v1137, 0
    %v1204 = vsel %vm217, %v1201, 0
    %1206 = vmatpush.xpose.msra.mxu0 0.0
    %1207 = vmatpush.xpose.msra.mxu0 0.0
    %1208 = vmatpush.xpose.msra.mxu0 0.0
    %1209 = vmatpush.xpose.msra.mxu0 0.0
    %1210 = vmatpush.xpose.msra.mxu0 0.0
    %1211 = vmatpush.xpose.msra.mxu0 0.0
    %1212 = vmatpush.xpose.msra.mxu0 0.0
    %1213 = vmatpush.xpose.msra.mxu0 0.0
    %1214 = vmatpush.xpose.msra.mxu0 0.0
    %1215 = vmatpush.xpose.msra.mxu0 0.0
    %1216 = vmatpush.xpose.msra.mxu0 0.0
    %1217 = vmatpush.xpose.msra.mxu0 0.0
    %1218 = vmatpush.xpose.msra.mxu0 0.0
    %1219 = vmatpush.xpose.msra.mxu0 0.0
    %1220 = vmatpush.xpose.msra.mxu0 0.0
    %1221 = vmatpush.xpose.msra.mxu0 %v1204
    %1222 = vmatmul.f32.gmra.mxu0 %v1202
    %v1223 = vpop.f32.mrf.mxu0
    %v1224 = vadd.f32 0.0, %v1223
    %1225 = vdwg.mxu0
    %1226 = vrot.lane.b32.xlu0 %v1139, 96
    %v1227 = vpop.permute.xlu0 %1226
    %v1228 = vsel %vm217, %v1139, 0
    %v1230 = vsel %vm217, %v1227, 0
    %1232 = vmatpush.xpose.msra.mxu0 0.0
    %1233 = vmatpush.xpose.msra.mxu0 0.0
    %1234 = vmatpush.xpose.msra.mxu0 0.0
    %1235 = vmatpush.xpose.msra.mxu0 0.0
    %1236 = vmatpush.xpose.msra.mxu0 0.0
    %1237 = vmatpush.xpose.msra.mxu0 0.0
    %1238 = vmatpush.xpose.msra.mxu0 0.0
    %1239 = vmatpush.xpose.msra.mxu0 0.0
    %1240 = vmatpush.xpose.msra.mxu0 0.0
    %1241 = vmatpush.xpose.msra.mxu0 0.0
    %1242 = vmatpush.xpose.msra.mxu0 0.0
    %1243 = vmatpush.xpose.msra.mxu0 0.0
    %1244 = vmatpush.xpose.msra.mxu0 0.0
    %1245 = vmatpush.xpose.msra.mxu0 0.0
    %1246 = vmatpush.xpose.msra.mxu0 0.0
    %1247 = vmatpush.xpose.msra.mxu0 %v1230
    %1248 = vmatmul.f32.gmra.mxu0 %v1228
    %v1249 = vpop.f32.mrf.mxu0
    %v1250 = vadd.f32 0.0, %v1249
    %1251 = vdwg.mxu0
    %1252 = vrot.lane.b32.xlu0 %v1141, 96
    %v1253 = vpop.permute.xlu0 %1252
    %v1254 = vsel %vm217, %v1141, 0
    %v1256 = vsel %vm217, %v1253, 0
    %1258 = vmatpush.xpose.msra.mxu0 0.0
    %1259 = vmatpush.xpose.msra.mxu0 0.0
    %1260 = vmatpush.xpose.msra.mxu0 0.0
    %1261 = vmatpush.xpose.msra.mxu0 0.0
    %1262 = vmatpush.xpose.msra.mxu0 0.0
    %1263 = vmatpush.xpose.msra.mxu0 0.0
    %1264 = vmatpush.xpose.msra.mxu0 0.0
    %1265 = vmatpush.xpose.msra.mxu0 0.0
    %1266 = vmatpush.xpose.msra.mxu0 0.0
    %1267 = vmatpush.xpose.msra.mxu0 0.0
    %1268 = vmatpush.xpose.msra.mxu0 0.0
    %1269 = vmatpush.xpose.msra.mxu0 0.0
    %1270 = vmatpush.xpose.msra.mxu0 0.0
    %1271 = vmatpush.xpose.msra.mxu0 0.0
    %1272 = vmatpush.xpose.msra.mxu0 0.0
    %1273 = vmatpush.xpose.msra.mxu0 %v1256
    %1274 = vmatmul.f32.gmra.mxu0 %v1254
    %v1275 = vpop.f32.mrf.mxu0
    %v1276 = vadd.f32 0.0, %v1275
    %1277 = vdwg.mxu0
    %1278 = vrot.lane.b32.xlu0 %v1143, 96
    %v1279 = vpop.permute.xlu0 %1278
    %v1280 = vsel %vm217, %v1143, 0
    %v1282 = vsel %vm217, %v1279, 0
    %1284 = vmatpush.xpose.msra.mxu0 0.0
    %1285 = vmatpush.xpose.msra.mxu0 0.0
    %1286 = vmatpush.xpose.msra.mxu0 0.0
    %1287 = vmatpush.xpose.msra.mxu0 0.0
    %1288 = vmatpush.xpose.msra.mxu0 0.0
    %1289 = vmatpush.xpose.msra.mxu0 0.0
    %1290 = vmatpush.xpose.msra.mxu0 0.0
    %1291 = vmatpush.xpose.msra.mxu0 0.0
    %1292 = vmatpush.xpose.msra.mxu0 0.0
    %1293 = vmatpush.xpose.msra.mxu0 0.0
    %1294 = vmatpush.xpose.msra.mxu0 0.0
    %1295 = vmatpush.xpose.msra.mxu0 0.0
    %1296 = vmatpush.xpose.msra.mxu0 0.0
    %1297 = vmatpush.xpose.msra.mxu0 0.0
    %1298 = vmatpush.xpose.msra.mxu0 0.0
    %1299 = vmatpush.xpose.msra.mxu0 %v1282
    %1300 = vmatmul.f32.gmra.mxu0 %v1280
    %v1301 = vpop.f32.mrf.mxu0
    %v1302 = vadd.f32 0.0, %v1301
    %1303 = vdwg.mxu0
    %1304 = vrot.lane.b32.xlu0 %v1145, 96
    %v1305 = vpop.permute.xlu0 %1304
    %v1306 = vsel %vm217, %v1145, 0
    %v1308 = vsel %vm217, %v1305, 0
    %1310 = vmatpush.xpose.msra.mxu0 0.0
    %1311 = vmatpush.xpose.msra.mxu0 0.0
    %1312 = vmatpush.xpose.msra.mxu0 0.0
    %1313 = vmatpush.xpose.msra.mxu0 0.0
    %1314 = vmatpush.xpose.msra.mxu0 0.0
    %1315 = vmatpush.xpose.msra.mxu0 0.0
    %1316 = vmatpush.xpose.msra.mxu0 0.0
    %1317 = vmatpush.xpose.msra.mxu0 0.0
    %1318 = vmatpush.xpose.msra.mxu0 0.0
    %1319 = vmatpush.xpose.msra.mxu0 0.0
    %1320 = vmatpush.xpose.msra.mxu0 0.0
    %1321 = vmatpush.xpose.msra.mxu0 0.0
    %1322 = vmatpush.xpose.msra.mxu0 0.0
    %1323 = vmatpush.xpose.msra.mxu0 0.0
    %1324 = vmatpush.xpose.msra.mxu0 0.0
    %1325 = vmatpush.xpose.msra.mxu0 %v1308
    %1326 = vmatmul.f32.gmra.mxu0 %v1306
    %v1327 = vpop.f32.mrf.mxu0
    %v1328 = vadd.f32 0.0, %v1327
    %1329 = vdwg.mxu0
    %1330 = vrot.lane.b32.xlu0 %v1147, 96
    %v1331 = vpop.permute.xlu0 %1330
    %v1332 = vsel %vm217, %v1147, 0
    %v1334 = vsel %vm217, %v1331, 0
    %1336 = vmatpush.xpose.msra.mxu0 0.0
    %1337 = vmatpush.xpose.msra.mxu0 0.0
    %1338 = vmatpush.xpose.msra.mxu0 0.0
    %1339 = vmatpush.xpose.msra.mxu0 0.0
    %1340 = vmatpush.xpose.msra.mxu0 0.0
    %1341 = vmatpush.xpose.msra.mxu0 0.0
    %1342 = vmatpush.xpose.msra.mxu0 0.0
    %1343 = vmatpush.xpose.msra.mxu0 0.0
    %1344 = vmatpush.xpose.msra.mxu0 0.0
    %1345 = vmatpush.xpose.msra.mxu0 0.0
    %1346 = vmatpush.xpose.msra.mxu0 0.0
    %1347 = vmatpush.xpose.msra.mxu0 0.0
    %1348 = vmatpush.xpose.msra.mxu0 0.0
    %1349 = vmatpush.xpose.msra.mxu0 0.0
    %1350 = vmatpush.xpose.msra.mxu0 0.0
    %1351 = vmatpush.xpose.msra.mxu0 %v1334
    %1352 = vmatmul.f32.gmra.mxu0 %v1332
    %v1353 = vpop.f32.mrf.mxu0
    %v1354 = vadd.f32 0.0, %v1353
    %1355 = vdwg.mxu0
    %v1356 = vsel %vm217, %v1172, -inf
    %1357 = vmax.xlane.f32.xlu0 %v1356
    %v1358 = vpop.xlane.xlu0 %1357
    %v1359 = vsel %vm217, %v1198, -inf
    %1360 = vmax.xlane.f32.xlu0 %v1359
    %v1361 = vpop.xlane.xlu0 %1360
    %v1362 = vsel %vm217, %v1224, -inf
    %1363 = vmax.xlane.f32.xlu0 %v1362
    %v1364 = vpop.xlane.xlu0 %1363
    %v1365 = vsel %vm217, %v1250, -inf
    %1366 = vmax.xlane.f32.xlu0 %v1365
    %v1367 = vpop.xlane.xlu0 %1366
    %v1368 = vsel %vm217, %v1276, -inf
    %1369 = vmax.xlane.f32.xlu0 %v1368
    %v1370 = vpop.xlane.xlu0 %1369
    %v1371 = vsel %vm217, %v1302, -inf
    %1372 = vmax.xlane.f32.xlu0 %v1371
    %v1373 = vpop.xlane.xlu0 %1372
    %v1374 = vsel %vm217, %v1328, -inf
    %1375 = vmax.xlane.f32.xlu0 %v1374
    %v1376 = vpop.xlane.xlu0 %1375
    %v1377 = vsel %vm217, %v1354, -inf
    %1378 = vmax.xlane.f32.xlu0 %v1377
    %v1379 = vpop.xlane.xlu0 %1378
    %v1380 = vsub.f32 %v1172, %v1358
    %v1381 = vsub.f32 %v1198, %v1361
    %v1382 = vsub.f32 %v1224, %v1364
    %v1383 = vsub.f32 %v1250, %v1367
    %v1384 = vsub.f32 %v1276, %v1370
    %v1385 = vsub.f32 %v1302, %v1373
    %v1386 = vsub.f32 %v1328, %v1376
    %v1387 = vsub.f32 %v1354, %v1379
    %v1388 = vmul.f32 %v1380, 1.442695
    %v1389 = vpow.pop %v1388
    %v1390 = vmul.f32 %v1381, 1.442695
    %v1391 = vpow.pop %v1390
    %v1392 = vmul.f32 %v1382, 1.442695
    %v1393 = vpow.pop %v1392
    %v1394 = vmul.f32 %v1383, 1.442695
    %v1395 = vpow.pop %v1394
    %v1396 = vmul.f32 %v1384, 1.442695
    %v1397 = vpow.pop %v1396
    %v1398 = vmul.f32 %v1385, 1.442695
    %v1399 = vpow.pop %v1398
    %v1400 = vmul.f32 %v1386, 1.442695
    %v1401 = vpow.pop %v1400
    %v1402 = vmul.f32 %v1387, 1.442695
    %v1403 = vpow.pop %v1402
    %v1404 = vsel %vm217, %v1389, 0.0
    %1405 = vadd.xlane.f32.xlu0 %v1404
    %v1406 = vpop.xlane.xlu0 %1405
    %v1407 = vsel %vm217, %v1391, 0.0
    %1408 = vadd.xlane.f32.xlu0 %v1407
    %v1409 = vpop.xlane.xlu0 %1408
    %v1410 = vsel %vm217, %v1393, 0.0
    %1411 = vadd.xlane.f32.xlu0 %v1410
    %v1412 = vpop.xlane.xlu0 %1411
    %v1413 = vsel %vm217, %v1395, 0.0
    %1414 = vadd.xlane.f32.xlu0 %v1413
    %v1415 = vpop.xlane.xlu0 %1414
    %v1416 = vsel %vm217, %v1397, 0.0
    %1417 = vadd.xlane.f32.xlu0 %v1416
    %v1418 = vpop.xlane.xlu0 %1417
    %v1419 = vsel %vm217, %v1399, 0.0
    %1420 = vadd.xlane.f32.xlu0 %v1419
    %v1421 = vpop.xlane.xlu0 %1420
    %v1422 = vsel %vm217, %v1401, 0.0
    %1423 = vadd.xlane.f32.xlu0 %v1422
    %v1424 = vpop.xlane.xlu0 %1423
    %v1425 = vsel %vm217, %v1403, 0.0
    %1426 = vadd.xlane.f32.xlu0 %v1425
    %v1427 = vpop.xlane.xlu0 %1426
    %v1428 = vrcp.pop %v1406
    %v1429 = vmul.f32 %v1406, %v1428
    %v1430 = vsub.f32 1.0, %v1429
    %v1431 = vmul.f32 %v1428, %v1430
    %v1432 = vadd.f32 %v1428, %v1431
    %vm1433 = vweird.f32 %v1406
    %vm1434 = vweird.f32 %v1428
    %vm1435 = vmor %vm1433, %vm1434
    %v1436 = vsel %vm1435, %v1428, %v1432
    %v1437 = vand.u32 2147483647, %v1406
    %vm1438 = vcmp.eq.f32.partialorder %v1437, 8.507059e+37
    %v1439 = vand.u32 %v1406, 2147483648
    %v1440 = vor.u32 1.1754944e-38, %v1439
    %v1441 = vsel %vm1438, %v1440, %v1436
    %v1442 = vmul.f32 %v1389, %v1441
    %v1443 = vrcp.pop %v1409
    %v1444 = vmul.f32 %v1409, %v1443
    %v1445 = vsub.f32 1.0, %v1444
    %v1446 = vmul.f32 %v1443, %v1445
    %v1447 = vadd.f32 %v1443, %v1446
    %vm1448 = vweird.f32 %v1409
    %vm1449 = vweird.f32 %v1443
    %vm1450 = vmor %vm1448, %vm1449
    %v1451 = vsel %vm1450, %v1443, %v1447
    %v1452 = vand.u32 2147483647, %v1409
    %vm1453 = vcmp.eq.f32.partialorder %v1452, 8.507059e+37
    %v1454 = vand.u32 %v1409, 2147483648
    %v1455 = vor.u32 1.1754944e-38, %v1454
    %v1456 = vsel %vm1453, %v1455, %v1451
    %v1457 = vmul.f32 %v1391, %v1456
    %v1458 = vrcp.pop %v1412
    %v1459 = vmul.f32 %v1412, %v1458
    %v1460 = vsub.f32 1.0, %v1459
    %v1461 = vmul.f32 %v1458, %v1460
    %v1462 = vadd.f32 %v1458, %v1461
    %vm1463 = vweird.f32 %v1412
    %vm1464 = vweird.f32 %v1458
    %vm1465 = vmor %vm1463, %vm1464
    %v1466 = vsel %vm1465, %v1458, %v1462
    %v1467 = vand.u32 2147483647, %v1412
    %vm1468 = vcmp.eq.f32.partialorder %v1467, 8.507059e+37
    %v1469 = vand.u32 %v1412, 2147483648
    %v1470 = vor.u32 1.1754944e-38, %v1469
    %v1471 = vsel %vm1468, %v1470, %v1466
    %v1472 = vmul.f32 %v1393, %v1471
    %v1473 = vrcp.pop %v1415
    %v1474 = vmul.f32 %v1415, %v1473
    %v1475 = vsub.f32 1.0, %v1474
    %v1476 = vmul.f32 %v1473, %v1475
    %v1477 = vadd.f32 %v1473, %v1476
    %vm1478 = vweird.f32 %v1415
    %vm1479 = vweird.f32 %v1473
    %vm1480 = vmor %vm1478, %vm1479
    %v1481 = vsel %vm1480, %v1473, %v1477
    %v1482 = vand.u32 2147483647, %v1415
    %vm1483 = vcmp.eq.f32.partialorder %v1482, 8.507059e+37
    %v1484 = vand.u32 %v1415, 2147483648
    %v1485 = vor.u32 1.1754944e-38, %v1484
    %v1486 = vsel %vm1483, %v1485, %v1481
    %v1487 = vmul.f32 %v1395, %v1486
    %v1488 = vrcp.pop %v1418
    %v1489 = vmul.f32 %v1418, %v1488
    %v1490 = vsub.f32 1.0, %v1489
    %v1491 = vmul.f32 %v1488, %v1490
    %v1492 = vadd.f32 %v1488, %v1491
    %vm1493 = vweird.f32 %v1418
    %vm1494 = vweird.f32 %v1488
    %vm1495 = vmor %vm1493, %vm1494
    %v1496 = vsel %vm1495, %v1488, %v1492
    %v1497 = vand.u32 2147483647, %v1418
    %vm1498 = vcmp.eq.f32.partialorder %v1497, 8.507059e+37
    %v1499 = vand.u32 %v1418, 2147483648
    %v1500 = vor.u32 1.1754944e-38, %v1499
    %v1501 = vsel %vm1498, %v1500, %v1496
    %v1502 = vmul.f32 %v1397, %v1501
    %v1503 = vrcp.pop %v1421
    %v1504 = vmul.f32 %v1421, %v1503
    %v1505 = vsub.f32 1.0, %v1504
    %v1506 = vmul.f32 %v1503, %v1505
    %v1507 = vadd.f32 %v1503, %v1506
    %vm1508 = vweird.f32 %v1421
    %vm1509 = vweird.f32 %v1503
    %vm1510 = vmor %vm1508, %vm1509
    %v1511 = vsel %vm1510, %v1503, %v1507
    %v1512 = vand.u32 2147483647, %v1421
    %vm1513 = vcmp.eq.f32.partialorder %v1512, 8.507059e+37
    %v1514 = vand.u32 %v1421, 2147483648
    %v1515 = vor.u32 1.1754944e-38, %v1514
    %v1516 = vsel %vm1513, %v1515, %v1511
    %v1517 = vmul.f32 %v1399, %v1516
    %v1518 = vrcp.pop %v1424
    %v1519 = vmul.f32 %v1424, %v1518
    %v1520 = vsub.f32 1.0, %v1519
    %v1521 = vmul.f32 %v1518, %v1520
    %v1522 = vadd.f32 %v1518, %v1521
    %vm1523 = vweird.f32 %v1424
    %vm1524 = vweird.f32 %v1518
    %vm1525 = vmor %vm1523, %vm1524
    %v1526 = vsel %vm1525, %v1518, %v1522
    %v1527 = vand.u32 2147483647, %v1424
    %vm1528 = vcmp.eq.f32.partialorder %v1527, 8.507059e+37
    %v1529 = vand.u32 %v1424, 2147483648
    %v1530 = vor.u32 1.1754944e-38, %v1529
    %v1531 = vsel %vm1528, %v1530, %v1526
    %v1532 = vmul.f32 %v1401, %v1531
    %v1533 = vrcp.pop %v1427
    %v1534 = vmul.f32 %v1427, %v1533
    %v1535 = vsub.f32 1.0, %v1534
    %v1536 = vmul.f32 %v1533, %v1535
    %v1537 = vadd.f32 %v1533, %v1536
    %vm1538 = vweird.f32 %v1427
    %vm1539 = vweird.f32 %v1533
    %vm1540 = vmor %vm1538, %vm1539
    %v1541 = vsel %vm1540, %v1533, %v1537
    %v1542 = vand.u32 2147483647, %v1427
    %vm1543 = vcmp.eq.f32.partialorder %v1542, 8.507059e+37
    %v1544 = vand.u32 %v1427, 2147483648
    %v1545 = vor.u32 1.1754944e-38, %v1544
    %v1546 = vsel %vm1543, %v1545, %v1541
    %v1547 = vmul.f32 %v1403, %v1546
    %1548 = vrot.lane.b32.xlu0 %v1129, 64
    %v1549 = vpop.permute.xlu0 %1548
    %v1552 = vsel %vm217, %v1442, 0
    %1554 = vmatpush.msra.mxu0 0.0
    %1555 = vmatpush.msra.mxu0 0.0
    %1556 = vmatpush.msra.mxu0 0.0
    %1557 = vmatpush.msra.mxu0 0.0
    %1558 = vmatpush.msra.mxu0 0.0
    %1559 = vmatpush.msra.mxu0 0.0
    %1560 = vmatpush.msra.mxu0 0.0
    %1561 = vmatpush.msra.mxu0 0.0
    %1562 = vmatpush.msra.mxu0 0.0
    %1563 = vmatpush.msra.mxu0 0.0
    %1564 = vmatpush.msra.mxu0 0.0
    %1565 = vmatpush.msra.mxu0 0.0
    %1566 = vmatpush.msra.mxu0 0.0
    %1567 = vmatpush.msra.mxu0 0.0
    %1568 = vmatpush.msra.mxu0 0.0
    %1569 = vmatpush.msra.mxu0 %v1549
    %1570 = vmatmul.f32.gmra.mxu0 %v1552
    %v1571 = vpop.f32.mrf.mxu0
    %v1572 = vadd.f32 0.0, %v1571
    %1573 = vdwg.mxu0
    %1574 = vrot.lane.b32.xlu0 %v1132, 64
    %v1575 = vpop.permute.xlu0 %1574
    %v1578 = vsel %vm217, %v1457, 0
    %1580 = vmatpush.msra.mxu0 0.0
    %1581 = vmatpush.msra.mxu0 0.0
    %1582 = vmatpush.msra.mxu0 0.0
    %1583 = vmatpush.msra.mxu0 0.0
    %1584 = vmatpush.msra.mxu0 0.0
    %1585 = vmatpush.msra.mxu0 0.0
    %1586 = vmatpush.msra.mxu0 0.0
    %1587 = vmatpush.msra.mxu0 0.0
    %1588 = vmatpush.msra.mxu0 0.0
    %1589 = vmatpush.msra.mxu0 0.0
    %1590 = vmatpush.msra.mxu0 0.0
    %1591 = vmatpush.msra.mxu0 0.0
    %1592 = vmatpush.msra.mxu0 0.0
    %1593 = vmatpush.msra.mxu0 0.0
    %1594 = vmatpush.msra.mxu0 0.0
    %1595 = vmatpush.msra.mxu0 %v1575
    %1596 = vmatmul.f32.gmra.mxu0 %v1578
    %v1597 = vpop.f32.mrf.mxu0
    %v1598 = vadd.f32 0.0, %v1597
    %1599 = vdwg.mxu0
    %1600 = vrot.lane.b32.xlu0 %v1137, 64
    %v1601 = vpop.permute.xlu0 %1600
    %v1604 = vsel %vm217, %v1472, 0
    %1606 = vmatpush.msra.mxu0 0.0
    %1607 = vmatpush.msra.mxu0 0.0
    %1608 = vmatpush.msra.mxu0 0.0
    %1609 = vmatpush.msra.mxu0 0.0
    %1610 = vmatpush.msra.mxu0 0.0
    %1611 = vmatpush.msra.mxu0 0.0
    %1612 = vmatpush.msra.mxu0 0.0
    %1613 = vmatpush.msra.mxu0 0.0
    %1614 = vmatpush.msra.mxu0 0.0
    %1615 = vmatpush.msra.mxu0 0.0
    %1616 = vmatpush.msra.mxu0 0.0
    %1617 = vmatpush.msra.mxu0 0.0
    %1618 = vmatpush.msra.mxu0 0.0
    %1619 = vmatpush.msra.mxu0 0.0
    %1620 = vmatpush.msra.mxu0 0.0
    %1621 = vmatpush.msra.mxu0 %v1601
    %1622 = vmatmul.f32.gmra.mxu0 %v1604
    %v1623 = vpop.f32.mrf.mxu0
    %v1624 = vadd.f32 0.0, %v1623
    %1625 = vdwg.mxu0
    %1626 = vrot.lane.b32.xlu0 %v1139, 64
    %v1627 = vpop.permute.xlu0 %1626
    %v1630 = vsel %vm217, %v1487, 0
    %1632 = vmatpush.msra.mxu0 0.0
    %1633 = vmatpush.msra.mxu0 0.0
    %1634 = vmatpush.msra.mxu0 0.0
    %1635 = vmatpush.msra.mxu0 0.0
    %1636 = vmatpush.msra.mxu0 0.0
    %1637 = vmatpush.msra.mxu0 0.0
    %1638 = vmatpush.msra.mxu0 0.0
    %1639 = vmatpush.msra.mxu0 0.0
    %1640 = vmatpush.msra.mxu0 0.0
    %1641 = vmatpush.msra.mxu0 0.0
    %1642 = vmatpush.msra.mxu0 0.0
    %1643 = vmatpush.msra.mxu0 0.0
    %1644 = vmatpush.msra.mxu0 0.0
    %1645 = vmatpush.msra.mxu0 0.0
    %1646 = vmatpush.msra.mxu0 0.0
    %1647 = vmatpush.msra.mxu0 %v1627
    %1648 = vmatmul.f32.gmra.mxu0 %v1630
    %v1649 = vpop.f32.mrf.mxu0
    %v1650 = vadd.f32 0.0, %v1649
    %1651 = vdwg.mxu0
    %1652 = vrot.lane.b32.xlu0 %v1141, 64
    %v1653 = vpop.permute.xlu0 %1652
    %v1656 = vsel %vm217, %v1502, 0
    %1658 = vmatpush.msra.mxu0 0.0
    %1659 = vmatpush.msra.mxu0 0.0
    %1660 = vmatpush.msra.mxu0 0.0
    %1661 = vmatpush.msra.mxu0 0.0
    %1662 = vmatpush.msra.mxu0 0.0
    %1663 = vmatpush.msra.mxu0 0.0
    %1664 = vmatpush.msra.mxu0 0.0
    %1665 = vmatpush.msra.mxu0 0.0
    %1666 = vmatpush.msra.mxu0 0.0
    %1667 = vmatpush.msra.mxu0 0.0
    %1668 = vmatpush.msra.mxu0 0.0
    %1669 = vmatpush.msra.mxu0 0.0
    %1670 = vmatpush.msra.mxu0 0.0
    %1671 = vmatpush.msra.mxu0 0.0
    %1672 = vmatpush.msra.mxu0 0.0
    %1673 = vmatpush.msra.mxu0 %v1653
    %1674 = vmatmul.f32.gmra.mxu0 %v1656
    %v1675 = vpop.f32.mrf.mxu0
    %v1676 = vadd.f32 0.0, %v1675
    %1677 = vdwg.mxu0
    %1678 = vrot.lane.b32.xlu0 %v1143, 64
    %v1679 = vpop.permute.xlu0 %1678
    %v1682 = vsel %vm217, %v1517, 0
    %1684 = vmatpush.msra.mxu0 0.0
    %1685 = vmatpush.msra.mxu0 0.0
    %1686 = vmatpush.msra.mxu0 0.0
    %1687 = vmatpush.msra.mxu0 0.0
    %1688 = vmatpush.msra.mxu0 0.0
    %1689 = vmatpush.msra.mxu0 0.0
    %1690 = vmatpush.msra.mxu0 0.0
    %1691 = vmatpush.msra.mxu0 0.0
    %1692 = vmatpush.msra.mxu0 0.0
    %1693 = vmatpush.msra.mxu0 0.0
    %1694 = vmatpush.msra.mxu0 0.0
    %1695 = vmatpush.msra.mxu0 0.0
    %1696 = vmatpush.msra.mxu0 0.0
    %1697 = vmatpush.msra.mxu0 0.0
    %1698 = vmatpush.msra.mxu0 0.0
    %1699 = vmatpush.msra.mxu0 %v1679
    %1700 = vmatmul.f32.gmra.mxu0 %v1682
    %v1701 = vpop.f32.mrf.mxu0
    %v1702 = vadd.f32 0.0, %v1701
    %1703 = vdwg.mxu0
    %1704 = vrot.lane.b32.xlu0 %v1145, 64
    %v1705 = vpop.permute.xlu0 %1704
    %v1708 = vsel %vm217, %v1532, 0
    %1710 = vmatpush.msra.mxu0 0.0
    %1711 = vmatpush.msra.mxu0 0.0
    %1712 = vmatpush.msra.mxu0 0.0
    %1713 = vmatpush.msra.mxu0 0.0
    %1714 = vmatpush.msra.mxu0 0.0
    %1715 = vmatpush.msra.mxu0 0.0
    %1716 = vmatpush.msra.mxu0 0.0
    %1717 = vmatpush.msra.mxu0 0.0
    %1718 = vmatpush.msra.mxu0 0.0
    %1719 = vmatpush.msra.mxu0 0.0
    %1720 = vmatpush.msra.mxu0 0.0
    %1721 = vmatpush.msra.mxu0 0.0
    %1722 = vmatpush.msra.mxu0 0.0
    %1723 = vmatpush.msra.mxu0 0.0
    %1724 = vmatpush.msra.mxu0 0.0
    %1725 = vmatpush.msra.mxu0 %v1705
    %1726 = vmatmul.f32.gmra.mxu0 %v1708
    %v1727 = vpop.f32.mrf.mxu0
    %v1728 = vadd.f32 0.0, %v1727
    %1729 = vdwg.mxu0
    %1730 = vrot.lane.b32.xlu0 %v1147, 64
    %v1731 = vpop.permute.xlu0 %1730
    %v1734 = vsel %vm217, %v1547, 0
    %1736 = vmatpush.msra.mxu0 0.0
    %1737 = vmatpush.msra.mxu0 0.0
    %1738 = vmatpush.msra.mxu0 0.0
    %1739 = vmatpush.msra.mxu0 0.0
    %1740 = vmatpush.msra.mxu0 0.0
    %1741 = vmatpush.msra.mxu0 0.0
    %1742 = vmatpush.msra.mxu0 0.0
    %1743 = vmatpush.msra.mxu0 0.0
    %1744 = vmatpush.msra.mxu0 0.0
    %1745 = vmatpush.msra.mxu0 0.0
    %1746 = vmatpush.msra.mxu0 0.0
    %1747 = vmatpush.msra.mxu0 0.0
    %1748 = vmatpush.msra.mxu0 0.0
    %1749 = vmatpush.msra.mxu0 0.0
    %1750 = vmatpush.msra.mxu0 0.0
    %1751 = vmatpush.msra.mxu0 %v1731
    %1752 = vmatmul.f32.gmra.mxu0 %v1734
    %v1753 = vpop.f32.mrf.mxu0
    %v1754 = vadd.f32 0.0, %v1753
    %1755 = vdwg.mxu0
    %1758 = vrot.lane.b32.xlu0 %v1624, 8
    %v1759 = vpop.permute.xlu0 %1758
    %1760 = vrot.lane.b32.xlu0 %v1650, 8
    %v1761 = vpop.permute.xlu0 %1760
    %1766 = vrot.lane.b32.xlu0 %v1676, 16
    %v1767 = vpop.permute.xlu0 %1766
    %1768 = vrot.lane.b32.xlu0 %v1702, 16
    %v1769 = vpop.permute.xlu0 %1768
    %1774 = vrot.lane.b32.xlu0 %v1728, 24
    %v1775 = vpop.permute.xlu0 %1774
    %1776 = vrot.lane.b32.xlu0 %v1754, 24
    %v1777 = vpop.permute.xlu0 %1776
    %v1780 = vsel %vm217, %v1572, %v1759
    %v1781 = vsel %vm217, %v1598, %v1761
    %v1782 = vsel %vm850, %v1780, %v1767
    %v1783 = vsel %vm850, %v1781, %v1769
    %v1784 = vsel %vm853, %v1782, %v1775
    %v1785 = vsel %vm853, %v1783, %v1777
    %v1787 = vperm.slane %v1031, 0
    %v1790 = vsel %vm171, %v1784, 0
    %v1793 = vsel %vm171, %v1785, 0
    %1795 = vmatpush.msra.mxu0 0.0
    %1796 = vmatpush.msra.mxu0 0.0
    %1797 = vmatpush.msra.mxu0 0.0
    %1798 = vmatpush.msra.mxu0 0.0
    %1799 = vmatpush.msra.mxu0 0.0
    %1800 = vmatpush.msra.mxu0 0.0
    %1801 = vmatpush.msra.mxu0 0.0
    %1802 = vmatpush.msra.mxu0 0.0
    %1803 = vmatpush.msra.mxu0 0.0
    %1804 = vmatpush.msra.mxu0 0.0
    %1805 = vmatpush.msra.mxu0 0.0
    %1806 = vmatpush.msra.mxu0 0.0
    %1807 = vmatpush.msra.mxu0 %v1030
    %1808 = vmatpush.msra.mxu0 %v1029
    %1809 = vmatpush.msra.mxu0 %v1028
    %1810 = vmatpush.msra.mxu0 %v1027
    %1811 = vmatmul.f32.gmra.mxu0 %v1790
    %v1812 = vpop.f32.mrf.mxu0
    %v1813 = vadd.f32 %v1787, %v1812
    %1814 = vmatmul.f32.gmra.mxu0 %v1793
    %v1815 = vpop.f32.mrf.mxu0
    %v1816 = vadd.f32 %v1787, %v1815
    %1817 = vdwg.mxu0
    %v1818 = vadd.f32 %v1018, %v1813
    %v1819 = vadd.f32 %v1019, %v1816
    %v1820 = vsel %vm171, %v1818, 0.0
    %1821 = vadd.xlane.f32.xlu0 %v1820
    %v1822 = vpop.xlane.xlu0 %1821
    %v1823 = vsel %vm171, %v1819, 0.0
    %1824 = vadd.xlane.f32.xlu0 %v1823
    %v1825 = vpop.xlane.xlu0 %1824
    %v1826 = vmul.f32 %v1822, %v902
    %v1827 = vmul.f32 %v1825, %v902
    %v1828 = vsub.f32 %v1818, %v1826
    %v1829 = vsub.f32 %v1819, %v1827
    %v1830 = vmul.f32 %v1828, %v1828
    %v1831 = vmul.f32 %v1829, %v1829
    %v1832 = vsel %vm171, %v1830, 0.0
    %1833 = vadd.xlane.f32.xlu0 %v1832
    %v1834 = vpop.xlane.xlu0 %1833
    %v1835 = vsel %vm171, %v1831, 0.0
    %1836 = vadd.xlane.f32.xlu0 %v1835
    %v1837 = vpop.xlane.xlu0 %1836
    %v1838 = vmul.f32 %v1834, %v902
    %v1839 = vmul.f32 %v1837, %v902
    %v1840 = vadd.f32 %v1838, 1e-05
    %v1841 = vadd.f32 %v1839, 1e-05
    %v1842 = vrsqrt.pop %v1840
    %v1843 = vmul.f32 %v1842, %v1840
    %v1844 = vmul.f32 %v1843, %v1842
    %v1845 = vmul.f32 0.5, %v1844
    %v1846 = vsub.f32 1.5, %v1845
    %v1847 = vmul.f32 %v1842, %v1846
    %vm1848 = vweird.f32 %v1840
    %vm1849 = vweird.f32 %v1842
    %vm1850 = vmor %vm1848, %vm1849
    %v1851 = vsel %vm1850, %v1842, %v1847
    %v1852 = vrsqrt.pop %v1841
    %v1853 = vmul.f32 %v1852, %v1841
    %v1854 = vmul.f32 %v1853, %v1852
    %v1855 = vmul.f32 0.5, %v1854
    %v1856 = vsub.f32 1.5, %v1855
    %v1857 = vmul.f32 %v1852, %v1856
    %vm1858 = vweird.f32 %v1841
    %vm1859 = vweird.f32 %v1852
    %vm1860 = vmor %vm1858, %vm1859
    %v1861 = vsel %vm1860, %v1852, %v1857
    %v1862 = vmul.f32 %v1828, %v1851
    %v1863 = vmul.f32 %v1829, %v1861
    %v1865 = vperm.slane %v1032, 0
    %v1867 = vmul.f32 %v1862, %v1865
    %v1868 = vmul.f32 %v1863, %v1865
    %v1870 = vperm.slane %v1033, 0
    %v1872 = vadd.f32 %v1867, %v1870
    %v1873 = vadd.f32 %v1868, %v1870
    %v1875 = vperm.slane %v1038, 0
    %v1878 = vsel %vm171, %v1872, 0
    %v1881 = vsel %vm171, %v1873, 0
    %1883 = vmatpush.msra.mxu0 0.0
    %1884 = vmatpush.msra.mxu0 0.0
    %1885 = vmatpush.msra.mxu0 0.0
    %1886 = vmatpush.msra.mxu0 0.0
    %1887 = vmatpush.msra.mxu0 0.0
    %1888 = vmatpush.msra.mxu0 0.0
    %1889 = vmatpush.msra.mxu0 0.0
    %1890 = vmatpush.msra.mxu0 0.0
    %1891 = vmatpush.msra.mxu0 0.0
    %1892 = vmatpush.msra.mxu0 0.0
    %1893 = vmatpush.msra.mxu0 0.0
    %1894 = vmatpush.msra.mxu0 0.0
    %1895 = vmatpush.msra.mxu0 %v1037
    %1896 = vmatpush.msra.mxu0 %v1036
    %1897 = vmatpush.msra.mxu0 %v1035
    %1898 = vmatpush.msra.mxu0 %v1034
    %1899 = vmatmul.f32.gmra.mxu0 %v1878
    %v1900 = vpop.f32.mrf.mxu0
    %v1901 = vadd.f32 %v1875, %v1900
    %1902 = vmatmul.f32.gmra.mxu0 %v1881
    %v1903 = vpop.f32.mrf.mxu0
    %v1904 = vadd.f32 %v1875, %v1903
    %1905 = vdwg.mxu0
    %v1906 = vmax.f32 %v1901, 0.0
    %v1907 = vmax.f32 %v1904, 0.0
    %v1909 = vperm.slane %v1047, 0
    %v1912 = vsel %vm988, %v1906, 0
    %v1915 = vsel %vm988, %v1907, 0
    %1917 = vmatpush.msra.mxu0 0.0
    %1918 = vmatpush.msra.mxu0 0.0
    %1919 = vmatpush.msra.mxu0 0.0
    %1920 = vmatpush.msra.mxu0 0.0
    %1921 = vmatpush.msra.mxu0 0.0
    %1922 = vmatpush.msra.mxu0 0.0
    %1923 = vmatpush.msra.mxu0 0.0
    %1924 = vmatpush.msra.mxu0 0.0
    %1925 = vmatpush.msra.mxu0 %v1046
    %1926 = vmatpush.msra.mxu0 %v1045
    %1927 = vmatpush.msra.mxu0 %v1044
    %1928 = vmatpush.msra.mxu0 %v1043
    %1929 = vmatpush.msra.mxu0 %v1042
    %1930 = vmatpush.msra.mxu0 %v1041
    %1931 = vmatpush.msra.mxu0 %v1040
    %1932 = vmatpush.msra.mxu0 %v1039
    %1933 = vmatmul.f32.gmra.mxu0 %v1912
    %v1934 = vpop.f32.mrf.mxu0
    %v1935 = vadd.f32 %v1909, %v1934
    %1936 = vmatmul.f32.gmra.mxu0 %v1915
    %v1937 = vpop.f32.mrf.mxu0
    %v1938 = vadd.f32 %v1909, %v1937
    %1939 = vdwg.mxu0
    %v1940 = vadd.f32 %v1818, %v1935
    %v1941 = vadd.f32 %v1819, %v1938
    %1942 = vst.msk [vmem:[#allocation10] sm:$0xff] %vm171, %v1940
    %1943 = vst.msk [vmem:[#allocation10 + $0x8] sm:$0xff] %vm171, %v1941
    // Predicated region
    $region118: #{tpu_custom_call.1} parent=1 // pred_check
      _
    $region119: #{tpu_custom_call.1} parent=1 // pred_check_branch
      %1945 = sbr.rel (0) target = $region121
    $region120: #{tpu_custom_call.1} parent=1 // pred_region
      %1947 = vsyncadd [#allocation4], 0
      %s1948 = sshll.u32 [#allocation10], 4
      %s1949 = int_to_ptr.vmem [resolvable:$true] %s1948
      %s1950 = sshll.u32 %s25, 4
      %s1951 = int_to_ptr.hbm [resolvable:$true] %s1950
      %1956 = dma.vmem_to_hbm [thread:$0]  %s1949, 256, %s1951, [#allocation4], 128, 128, 8
    $region121: #{tpu_custom_call.1} parent=1 // pred_fallthru
      _
    // Predicated region
    $region122: #{tpu_custom_call.1} parent=1 // pred_check
      _
    $region123: #{tpu_custom_call.1} parent=1 // pred_check_branch
      %1958 = sbr.rel (0) target = $region125
    $region124: #{tpu_custom_call.1} parent=1 // pred_region
      %1960 = dma.done [#allocation4], 256
    $region125: #{tpu_custom_call.1} parent=1 // pred_fallthru
      _
    %1961 = vsyncpa [#allocation3], 1
    %1962 = vsyncpa [#allocation6], 1
    %1963 = vsyncpa [#allocation9], 1
    %1964 = vsyncpa [#allocation4], 1

</llo_original>
